<compile_context>
chip_gen: v5e
topology: v5e:2x2
jax: 0.10.0
libtpu: 0.0.40
codegen_flags: <defaults>
</compile_context>

<pallas_src>
import functools

import jax
import jax.numpy as jnp
import numpy as np
from jax.experimental import pallas as pl
from jax.experimental.pallas import tpu as pltpu

EPS = 1e-5
_BIG = 1e30  # sentinel pad value; relu(pad*s + t) == 0 for s != 0


# ---------------------------------------------------------------------------
# Pallas kernel: fused [pre-BN+ReLU] -> dilated 3x3 conv (one matmul) -> bias/BN affine
#                [-> ReLU] [-> fused channel concat with the raw input]
# ---------------------------------------------------------------------------
def _dasp_conv_kernel(xt_ref, w_ref, prs_ref, prt_ref, pos_ref, pot_ref, o_ref,
                      *, pre_act, post_act, cout, carry_lo, carry_hi):
    """
    xt_ref : (TM, 9*Cin)  raw im2col taps (tap-major, channel-minor)
    w_ref  : (9*Cin, cout) conv weights (resident across the grid)
    prs/prt: (1, 9*Cin)   pre-conv folded BN scale/shift, tiled per tap
    pos/pot: (1, cout)    post-conv scale / (bias folded) shift
    o_ref  : (TM, cout [+ Cin])  conv result, optionally followed by the raw center tap
    """
    x = xt_ref[...]
    if pre_act:
        a = jnp.maximum(x * prs_ref[...] + prt_ref[...], 0.0)
    else:
        a = x
    # Single MXU matmul, default precision (f32 accumulate).
    y = jnp.dot(a, w_ref[...], preferred_element_type=jnp.float32)
    y = y * pos_ref[...] + pot_ref[...]
    if post_act:
        y = jnp.maximum(y, 0.0)
    if carry_hi > carry_lo:
        # Fused torch.cat: [conv_out | raw layer input] written as one wide output tile.
        o_ref[:, :cout] = y
        o_ref[:, cout:cout + (carry_hi - carry_lo)] = x[:, carry_lo:carry_hi]
    else:
        o_ref[...] = y


# ---------------------------------------------------------------------------
# Wrapper: padding / lane-dense im2col / parameter folding / tiling
# ---------------------------------------------------------------------------
def conv_layer(feat, w, b, dil, *, pre_s=None, pre_t=None, post_s=None, post_t=None,
               post_relu=False, carry=False, tile_m=1024):
    """feat: (N,H,W,Cin) f32.  w: (3,3,Cin,Cout) HWIO.  Returns (N,H,W,Cout[+Cin])."""
    N, H, W, Cin = feat.shape
    Cout = w.shape[-1]
    pre_act = pre_s is not None

    x = feat.astype(jnp.float32)
    wf = w.astype(jnp.float32)

    # Pad a tiny contraction dim (Cin=1 for the first conv) up to 8 for MXU friendliness.
    if Cin < 8:
        pc = 8 - Cin
        x = jnp.pad(x, ((0, 0), (0, 0), (0, 0), (0, pc)))
        wf = jnp.pad(wf, ((0, 0), (0, 0), (0, pc), (0, 0)))
        if pre_act:
            pre_s = jnp.pad(pre_s.astype(jnp.float32), (0, pc))
            pre_t = jnp.pad(pre_t.astype(jnp.float32), (0, pc))
        Cin = 8

    # Spatial 'same' padding with dilation.  For pre-activation layers we pad the RAW input
    # with a per-channel sentinel so that relu(pad*s + t) == 0 inside the kernel, which
    # exactly reproduces conv(zero-padded relu(bn(x))).  (Degenerate s==0 is not handled.)
    d = dil
    if pre_act:
        pad_val = jnp.where(pre_s.astype(jnp.float32) > 0, -_BIG, _BIG)         # (Cin,)
        xp = jnp.broadcast_to(pad_val, (N, H + 2 * d, W + 2 * d, Cin)).astype(jnp.float32)
        xp = xp.at[:, d:d + H, d:d + W, :].set(x)
    else:
        xp = jnp.pad(x, ((0, 0), (d, d), (d, d), (0, 0)))

    # Lane-dense im2col: one (M, 9*Cin) buffer, taps concatenated along channels.
    M = N * H * W
    K9 = 9 * Cin
    taps = [xp[:, ky * d:ky * d + H, kx * d:kx * d + W, :]
            for ky in range(3) for kx in range(3)]
    xt = jnp.concatenate(taps, axis=-1).reshape(M, K9)
    w9 = wf.reshape(K9, Cout)

    # Pre-BN scale/shift replicated per tap (or unused placeholders).
    if pre_act:
        prs = jnp.tile(pre_s.astype(jnp.float32), 9).reshape(1, K9)
        prt = jnp.tile(pre_t.astype(jnp.float32), 9).reshape(1, K9)
    else:
        prs = jnp.ones((1, K9), jnp.float32)
        prt = jnp.zeros((1, K9), jnp.float32)

    # Fold the conv bias into the post-affine:  (acc + b)*s + t == acc*s + (b*s + t).
    if post_s is None:
        pos = jnp.ones((Cout,), jnp.float32)
        pot = b.astype(jnp.float32)
    else:
        pos = post_s.astype(jnp.float32)
        pot = post_t.astype(jnp.float32) + b.astype(jnp.float32) * pos
    pos = pos.reshape(1, Cout)
    pot = pot.reshape(1, Cout)

    # Tile over M (rows); pad M so the grid divides evenly (extra rows are sliced off).
    TM = max(8, min(tile_m, M))
    TM = (TM // 8) * 8
    Mp = pl.cdiv(M, TM) * TM
    if Mp != M:
        xt = jnp.pad(xt, ((0, Mp - M), (0, 0)))

    c_total = Cout + (Cin if carry else 0)
    carry_lo, carry_hi = (4 * Cin, 5 * Cin) if carry else (0, 0)   # center tap == raw input

    kern = functools.partial(_dasp_conv_kernel, pre_act=pre_act, post_act=post_relu,
                             cout=Cout, carry_lo=carry_lo, carry_hi=carry_hi)
    out = pl.pallas_call(
        kern,
        out_shape=jax.ShapeDtypeStruct((Mp, c_total), jnp.float32),
        grid=(Mp // TM,),
        in_specs=[
            pl.BlockSpec((TM, K9), lambda i: (i, 0)),        # im2col tile (pipelined)
            pl.BlockSpec((K9, Cout), lambda i: (0, 0)),      # weights (resident)
            pl.BlockSpec((1, K9), lambda i: (0, 0)),         # pre scale (resident)
            pl.BlockSpec((1, K9), lambda i: (0, 0)),         # pre shift (resident)
            pl.BlockSpec((1, Cout), lambda i: (0, 0)),       # post scale (resident)
            pl.BlockSpec((1, Cout), lambda i: (0, 0)),       # post shift (resident)
        ],
        out_specs=pl.BlockSpec((TM, c_total), lambda i: (i, 0)),
        compiler_params=pltpu.CompilerParams(dimension_semantics=("parallel",)),
    )(xt, w9, prs, prt, pos, pot)
    return out[:M].reshape(N, H, W, c_total)


def feature_extraction_denseasp(x_nchw, p, tile_m=1024):
    """Mirrors Feature_extraction_denseasp.forward. Input/outputs NCHW (PyTorch convention)."""
    x = jnp.transpose(x_nchw, (0, 2, 3, 1)).astype(jnp.float32)       # -> NHWC

    # C1: conv(1->16, d=1) -> BN -> ReLU  (BN+ReLU fused as post-op)
    shallow = conv_layer(x, p["c1_w"], p["c1_b"], dil=1,
                         post_s=p["c1_bn_s"], post_t=p["c1_bn_t"], post_relu=True,
                         carry=False, tile_m=tile_m)                  # (N,H,W,16)

    # Dasp1: BN -> ReLU -> conv(16->16, d=1); output fuses cat(dasp1, shallow) -> 32 ch
    dasp1_ = conv_layer(shallow, p["d1_w"], p["d1_b"], dil=1,
                        pre_s=p["d1_bn_s"], pre_t=p["d1_bn_t"], carry=True, tile_m=tile_m)

    # Dasp2: BN -> ReLU -> conv(32->16, d=2); output fuses cat(dasp2, dasp1_) -> 48 ch
    dasp2_ = conv_layer(dasp1_, p["d2_w"], p["d2_b"], dil=2,
                        pre_s=p["d2_bn_s"], pre_t=p["d2_bn_t"], carry=True, tile_m=tile_m)

    # Dasp3: BN -> ReLU -> conv(48->16, d=3); output fuses cat(dasp3, dasp2_) -> 64 ch
    dasp3_out = conv_layer(dasp2_, p["d3_w"], p["d3_b"], dil=3,
                           pre_s=p["d3_bn_s"], pre_t=p["d3_bn_t"], carry=True, tile_m=tile_m)

    to_nchw = lambda t: jnp.transpose(t, (0, 3, 1, 2))
    return (to_nchw(shallow), to_nchw(dasp3_out), to_nchw(dasp1_), to_nchw(dasp2_))


# ---------------------------------------------------------------------------
# Deterministic parameter init (synthetic; matches the module's shapes)
# ---------------------------------------------------------------------------
def _bn_fold(gamma, beta, mean, var):
    s = gamma / jnp.sqrt(var + EPS)
    return s, beta - mean * s


def init_params(key):
    keys = iter(jax.random.split(key, 32))

    def conv_init(cin, cout):
        w = 0.1 * jax.random.normal(next(keys), (3, 3, cin, cout), jnp.float32)  # HWIO
        b = 0.1 * jax.random.normal(next(keys), (cout,), jnp.float32)
        return w, b

    def bn_init(c):
        gamma = 1.0 + 0.1 * jax.random.normal(next(keys), (c,), jnp.float32)
        beta = 0.1 * jax.random.normal(next(keys), (c,), jnp.float32)
        mean = 0.1 * jax.random.normal(next(keys), (c,), jnp.float32)
        var = 0.5 + jnp.abs(jax.random.normal(next(keys), (c,), jnp.float32))
        return _bn_fold(gamma, beta, mean, var)

    p = {}
    p["c1_w"], p["c1_b"] = conv_init(1, 16)
    p["c1_bn_s"], p["c1_bn_t"] = bn_init(16)
    p["d1_bn_s"], p["d1_bn_t"] = bn_init(16)
    p["d1_w"], p["d1_b"] = conv_init(16, 16)
    p["d2_bn_s"], p["d2_bn_t"] = bn_init(32)
    p["d2_w"], p["d2_b"] = conv_init(32, 16)
    p["d3_bn_s"], p["d3_bn_t"] = bn_init(48)
    p["d3_w"], p["d3_b"] = conv_init(48, 16)
    return p


# ---------------------------------------------------------------------------
# Pure-JAX reference (full f32) for validation
# ---------------------------------------------------------------------------
def _ref_conv(x, w, b, dil):
    y = jax.lax.conv_general_dilated(
        x, w, window_strides=(1, 1), padding=[(dil, dil), (dil, dil)],
        rhs_dilation=(dil, dil), dimension_numbers=("NHWC", "HWIO", "NHWC"),
        precision=jax.lax.Precision.HIGHEST)
    return y + b


def ref_forward(x_nchw, p):
    x = jnp.transpose(x_nchw, (0, 2, 3, 1)).astype(jnp.float32)
    relu = lambda t: jnp.maximum(t, 0.0)
    shallow = relu(_ref_conv(x, p["c1_w"], p["c1_b"], 1) * p["c1_bn_s"] + p["c1_bn_t"])
    dasp1 = _ref_conv(relu(shallow * p["d1_bn_s"] + p["d1_bn_t"]), p["d1_w"], p["d1_b"], 1)
    dasp1_ = jnp.concatenate([dasp1, shallow], -1)
    dasp2 = _ref_conv(relu(dasp1_ * p["d2_bn_s"] + p["d2_bn_t"]), p["d2_w"], p["d2_b"], 2)
    dasp2_ = jnp.concatenate([dasp2, dasp1_], -1)
    dasp3 = _ref_conv(relu(dasp2_ * p["d3_bn_s"] + p["d3_bn_t"]), p["d3_w"], p["d3_b"], 3)
    dasp3_out = jnp.concatenate([dasp3, dasp2_], -1)
    to_nchw = lambda t: jnp.transpose(t, (0, 3, 1, 2))
    return (to_nchw(shallow), to_nchw(dasp3_out), to_nchw(dasp1_), to_nchw(dasp2_))


if __name__ == "__main__":
    key = jax.random.PRNGKey(0)
    kx, kp = jax.random.split(key)
    x = jax.random.normal(kx, (2, 1, 16, 16), jnp.float32)   # NCHW, like the PyTorch module
    params = init_params(kp)

    # tile_m=128 so the small test exercises a multi-step grid (M = 2*16*16 = 512 -> 4 tiles).
    fwd = jax.jit(functools.partial(feature_extraction_denseasp, tile_m=128))
    outs = jax.block_until_ready(fwd(x, params))

    refs = ref_forward(x, params)
    # Tolerance accounts for default (bf16-pass) MXU precision vs the f32 HIGHEST reference.
    for name, o, r in zip(("shallow", "dasp3_out", "dasp1_", "dasp2_"), outs, refs):
        np.testing.assert_allclose(np.asarray(o), np.asarray(r), rtol=1e-2, atol=1e-2,
                                   err_msg=name)

    print("KERNEL_OK")
</pallas_src>

<mosaic_0001>
module attributes {stable_mosaic.version = 11 : i64} {
  func.func @_dasp_conv_kernel(%arg0: i32, %arg1: memref<128x72xf32, #tpu.memory_space<vmem>>, %arg2: memref<72x16xf32, #tpu.memory_space<vmem>>, %arg3: memref<1x72xf32, #tpu.memory_space<vmem>>, %arg4: memref<1x72xf32, #tpu.memory_space<vmem>>, %arg5: memref<1x16xf32, #tpu.memory_space<vmem>>, %arg6: memref<1x16xf32, #tpu.memory_space<vmem>>, %arg7: memref<128x16xf32, #tpu.memory_space<vmem>>) attributes {dimension_semantics = [#tpu.dimension_semantics<parallel>], iteration_bounds = array<i64: 4>, scalar_prefetch = 0 : i64, scratch_operands = 0 : i64, tpu.core_type = #tpu.core_type<tc>, window_params = [{transform_indices = @transform_0, window_bounds = array<i64: 128, 72>}, {pipeline_mode = #tpu.pipeline_mode<synchronous>, transform_indices = @transform_1, window_bounds = array<i64: 72, 16>}, {pipeline_mode = #tpu.pipeline_mode<synchronous>, transform_indices = @transform_2, window_bounds = array<i64: 1, 72>}, {pipeline_mode = #tpu.pipeline_mode<synchronous>, transform_indices = @transform_3, window_bounds = array<i64: 1, 72>}, {pipeline_mode = #tpu.pipeline_mode<synchronous>, transform_indices = @transform_4, window_bounds = array<i64: 1, 16>}, {pipeline_mode = #tpu.pipeline_mode<synchronous>, transform_indices = @transform_5, window_bounds = array<i64: 1, 16>}, {transform_indices = @transform_6, window_bounds = array<i64: 128, 16>}]} {
    %c0 = arith.constant 0 : index
    %c0_0 = arith.constant 0 : index
    %0 = vector.load %arg1[%c0, %c0_0] : memref<128x72xf32, #tpu.memory_space<vmem>>, vector<128x72xf32>
    %c0_1 = arith.constant 0 : index
    %c0_2 = arith.constant 0 : index
    %1 = vector.load %arg2[%c0_1, %c0_2] : memref<72x16xf32, #tpu.memory_space<vmem>>, vector<72x16xf32>
    %cst = arith.constant dense<0.000000e+00> : vector<128x16xf32>
    %2 = tpu.matmul %0, %1, %cst {dimension_numbers = #tpu.dot_dimension_numbers<[1], [0], [0], [1], [0, 0, 1, 1], [], []>} : vector<128x72xf32>, vector<72x16xf32>, vector<128x16xf32> -> vector<128x16xf32>
    %c0_3 = arith.constant 0 : index
    %c0_4 = arith.constant 0 : index
    %3 = vector.load %arg5[%c0_3, %c0_4] : memref<1x16xf32, #tpu.memory_space<vmem>>, vector<1x16xf32>
    %4 = vector.broadcast %3 : vector<1x16xf32> to vector<128x16xf32>
    %5 = arith.mulf %2, %4 : vector<128x16xf32>
    %c0_5 = arith.constant 0 : index
    %c0_6 = arith.constant 0 : index
    %6 = vector.load %arg6[%c0_5, %c0_6] : memref<1x16xf32, #tpu.memory_space<vmem>>, vector<1x16xf32>
    %7 = vector.broadcast %6 : vector<1x16xf32> to vector<128x16xf32>
    %8 = arith.addf %5, %7 : vector<128x16xf32>
    %cst_7 = arith.constant 0.000000e+00 : f32
    %9 = vector.broadcast %cst_7 : f32 to vector<128x16xf32>
    %10 = arith.maximumf %8, %9 : vector<128x16xf32>
    %c0_8 = arith.constant 0 : index
    %c0_9 = arith.constant 0 : index
    %11 = vector.load %arg7[%c0_8, %c0_9] : memref<128x16xf32, #tpu.memory_space<vmem>>, vector<128x16xf32>
    tpu.vector_store %arg7[%c0_8, %c0_9], %10 {strides = array<i32>} : memref<128x16xf32, #tpu.memory_space<vmem>>, vector<128x16xf32>,
    return
  }
  func.func @transform_0(%arg0: i32) -> (i32, i32) {
    %c0_i32 = arith.constant 0 : i32
    %c0_i32_0 = arith.constant 0 : i32
    return %arg0, %c0_i32 : i32, i32
  }
  func.func @transform_1(%arg0: i32) -> (i32, i32) {
    %c0_i32 = arith.constant 0 : i32
    %c0_i32_0 = arith.constant 0 : i32
    %c0_i32_1 = arith.constant 0 : i32
    return %c0_i32, %c0_i32_0 : i32, i32
  }
  func.func @transform_2(%arg0: i32) -> (i32, i32) {
    %c0_i32 = arith.constant 0 : i32
    %c0_i32_0 = arith.constant 0 : i32
    %c0_i32_1 = arith.constant 0 : i32
    return %c0_i32, %c0_i32_0 : i32, i32
  }
  func.func @transform_3(%arg0: i32) -> (i32, i32) {
    %c0_i32 = arith.constant 0 : i32
    %c0_i32_0 = arith.constant 0 : i32
    %c0_i32_1 = arith.constant 0 : i32
    return %c0_i32, %c0_i32_0 : i32, i32
  }
  func.func @transform_4(%arg0: i32) -> (i32, i32) {
    %c0_i32 = arith.constant 0 : i32
    %c0_i32_0 = arith.constant 0 : i32
    %c0_i32_1 = arith.constant 0 : i32
    return %c0_i32, %c0_i32_0 : i32, i32
  }
  func.func @transform_5(%arg0: i32) -> (i32, i32) {
    %c0_i32 = arith.constant 0 : i32
    %c0_i32_0 = arith.constant 0 : i32
    %c0_i32_1 = arith.constant 0 : i32
    return %c0_i32, %c0_i32_0 : i32, i32
  }
  func.func @transform_6(%arg0: i32) -> (i32, i32) {
    %c0_i32 = arith.constant 0 : i32
    %c0_i32_0 = arith.constant 0 : i32
    return %arg0, %c0_i32 : i32, i32
  }
}

module attributes {stable_mosaic.version = 11 : i64} {
  func.func @_dasp_conv_kernel(%arg0: i32, %arg1: memref<128x144xf32, #tpu.memory_space<vmem>>, %arg2: memref<144x16xf32, #tpu.memory_space<vmem>>, %arg3: memref<1x144xf32, #tpu.memory_space<vmem>>, %arg4: memref<1x144xf32, #tpu.memory_space<vmem>>, %arg5: memref<1x16xf32, #tpu.memory_space<vmem>>, %arg6: memref<1x16xf32, #tpu.memory_space<vmem>>, %arg7: memref<128x32xf32, #tpu.memory_space<vmem>>) attributes {dimension_semantics = [#tpu.dimension_semantics<parallel>], iteration_bounds = array<i64: 4>, scalar_prefetch = 0 : i64, scratch_operands = 0 : i64, tpu.core_type = #tpu.core_type<tc>, window_params = [{transform_indices = @transform_0, window_bounds = array<i64: 128, 144>}, {pipeline_mode = #tpu.pipeline_mode<synchronous>, transform_indices = @transform_1, window_bounds = array<i64: 144, 16>}, {pipeline_mode = #tpu.pipeline_mode<synchronous>, transform_indices = @transform_2, window_bounds = array<i64: 1, 144>}, {pipeline_mode = #tpu.pipeline_mode<synchronous>, transform_indices = @transform_3, window_bounds = array<i64: 1, 144>}, {pipeline_mode = #tpu.pipeline_mode<synchronous>, transform_indices = @transform_4, window_bounds = array<i64: 1, 16>}, {pipeline_mode = #tpu.pipeline_mode<synchronous>, transform_indices = @transform_5, window_bounds = array<i64: 1, 16>}, {transform_indices = @transform_6, window_bounds = array<i64: 128, 32>}]} {
    %c0 = arith.constant 0 : index
    %c0_0 = arith.constant 0 : index
    %0 = vector.load %arg1[%c0, %c0_0] : memref<128x144xf32, #tpu.memory_space<vmem>>, vector<128x144xf32>
    %c0_1 = arith.constant 0 : index
    %c0_2 = arith.constant 0 : index
    %1 = vector.load %arg3[%c0_1, %c0_2] : memref<1x144xf32, #tpu.memory_space<vmem>>, vector<1x144xf32>
    %2 = vector.broadcast %1 : vector<1x144xf32> to vector<128x144xf32>
    %3 = arith.mulf %0, %2 : vector<128x144xf32>
    %c0_3 = arith.constant 0 : index
    %c0_4 = arith.constant 0 : index
    %4 = vector.load %arg4[%c0_3, %c0_4] : memref<1x144xf32, #tpu.memory_space<vmem>>, vector<1x144xf32>
    %5 = vector.broadcast %4 : vector<1x144xf32> to vector<128x144xf32>
    %6 = arith.addf %3, %5 : vector<128x144xf32>
    %cst = arith.constant 0.000000e+00 : f32
    %7 = vector.broadcast %cst : f32 to vector<128x144xf32>
    %8 = arith.maximumf %6, %7 : vector<128x144xf32>
    %c0_5 = arith.constant 0 : index
    %c0_6 = arith.constant 0 : index
    %9 = vector.load %arg2[%c0_5, %c0_6] : memref<144x16xf32, #tpu.memory_space<vmem>>, vector<144x16xf32>
    %cst_7 = arith.constant dense<0.000000e+00> : vector<128x16xf32>
    %10 = tpu.matmul %8, %9, %cst_7 {dimension_numbers = #tpu.dot_dimension_numbers<[1], [0], [0], [1], [0, 0, 1, 1], [], []>} : vector<128x144xf32>, vector<144x16xf32>, vector<128x16xf32> -> vector<128x16xf32>
    %c0_8 = arith.constant 0 : index
    %c0_9 = arith.constant 0 : index
    %11 = vector.load %arg5[%c0_8, %c0_9] : memref<1x16xf32, #tpu.memory_space<vmem>>, vector<1x16xf32>
    %12 = vector.broadcast %11 : vector<1x16xf32> to vector<128x16xf32>
    %13 = arith.mulf %10, %12 : vector<128x16xf32>
    %c0_10 = arith.constant 0 : index
    %c0_11 = arith.constant 0 : index
    %14 = vector.load %arg6[%c0_10, %c0_11] : memref<1x16xf32, #tpu.memory_space<vmem>>, vector<1x16xf32>
    %15 = vector.broadcast %14 : vector<1x16xf32> to vector<128x16xf32>
    %16 = arith.addf %13, %15 : vector<128x16xf32>
    %c0_12 = arith.constant 0 : index
    %c0_13 = arith.constant 0 : index
    %17 = vector.load %arg7[%c0_12, %c0_13] : memref<128x32xf32, #tpu.memory_space<vmem>>, vector<128x16xf32>
    tpu.vector_store %arg7[%c0_12, %c0_13], %16 {strides = array<i32>} : memref<128x32xf32, #tpu.memory_space<vmem>>, vector<128x16xf32>,
    %18 = vector.extract_strided_slice %0 {offsets = [0, 64], sizes = [128, 16], strides = [1, 1]} : vector<128x144xf32> to vector<128x16xf32>
    %c0_14 = arith.constant 0 : index
    %c16 = arith.constant 16 : index
    %19 = vector.load %arg7[%c0_14, %c16] : memref<128x32xf32, #tpu.memory_space<vmem>>, vector<128x16xf32>
    tpu.vector_store %arg7[%c0_14, %c16], %18 {strides = array<i32>} : memref<128x32xf32, #tpu.memory_space<vmem>>, vector<128x16xf32>,
    return
  }
  func.func @transform_0(%arg0: i32) -> (i32, i32) {
    %c0_i32 = arith.constant 0 : i32
    %c0_i32_0 = arith.constant 0 : i32
    return %arg0, %c0_i32 : i32, i32
  }
  func.func @transform_1(%arg0: i32) -> (i32, i32) {
    %c0_i32 = arith.constant 0 : i32
    %c0_i32_0 = arith.constant 0 : i32
    %c0_i32_1 = arith.constant 0 : i32
    return %c0_i32, %c0_i32_0 : i32, i32
  }
  func.func @transform_2(%arg0: i32) -> (i32, i32) {
    %c0_i32 = arith.constant 0 : i32
    %c0_i32_0 = arith.constant 0 : i32
    %c0_i32_1 = arith.constant 0 : i32
    return %c0_i32, %c0_i32_0 : i32, i32
  }
  func.func @transform_3(%arg0: i32) -> (i32, i32) {
    %c0_i32 = arith.constant 0 : i32
    %c0_i32_0 = arith.constant 0 : i32
    %c0_i32_1 = arith.constant 0 : i32
    return %c0_i32, %c0_i32_0 : i32, i32
  }
  func.func @transform_4(%arg0: i32) -> (i32, i32) {
    %c0_i32 = arith.constant 0 : i32
    %c0_i32_0 = arith.constant 0 : i32
    %c0_i32_1 = arith.constant 0 : i32
    return %c0_i32, %c0_i32_0 : i32, i32
  }
  func.func @transform_5(%arg0: i32) -> (i32, i32) {
    %c0_i32 = arith.constant 0 : i32
    %c0_i32_0 = arith.constant 0 : i32
    %c0_i32_1 = arith.constant 0 : i32
    return %c0_i32, %c0_i32_0 : i32, i32
  }
  func.func @transform_6(%arg0: i32) -> (i32, i32) {
    %c0_i32 = arith.constant 0 : i32
    %c0_i32_0 = arith.constant 0 : i32
    return %arg0, %c0_i32 : i32, i32
  }
}

module attributes {stable_mosaic.version = 11 : i64} {
  func.func @_dasp_conv_kernel(%arg0: i32, %arg1: memref<128x288xf32, #tpu.memory_space<vmem>>, %arg2: memref<288x16xf32, #tpu.memory_space<vmem>>, %arg3: memref<1x288xf32, #tpu.memory_space<vmem>>, %arg4: memref<1x288xf32, #tpu.memory_space<vmem>>, %arg5: memref<1x16xf32, #tpu.memory_space<vmem>>, %arg6: memref<1x16xf32, #tpu.memory_space<vmem>>, %arg7: memref<128x48xf32, #tpu.memory_space<vmem>>) attributes {dimension_semantics = [#tpu.dimension_semantics<parallel>], iteration_bounds = array<i64: 4>, scalar_prefetch = 0 : i64, scratch_operands = 0 : i64, tpu.core_type = #tpu.core_type<tc>, window_params = [{transform_indices = @transform_0, window_bounds = array<i64: 128, 288>}, {pipeline_mode = #tpu.pipeline_mode<synchronous>, transform_indices = @transform_1, window_bounds = array<i64: 288, 16>}, {pipeline_mode = #tpu.pipeline_mode<synchronous>, transform_indices = @transform_2, window_bounds = array<i64: 1, 288>}, {pipeline_mode = #tpu.pipeline_mode<synchronous>, transform_indices = @transform_3, window_bounds = array<i64: 1, 288>}, {pipeline_mode = #tpu.pipeline_mode<synchronous>, transform_indices = @transform_4, window_bounds = array<i64: 1, 16>}, {pipeline_mode = #tpu.pipeline_mode<synchronous>, transform_indices = @transform_5, window_bounds = array<i64: 1, 16>}, {transform_indices = @transform_6, window_bounds = array<i64: 128, 48>}]} {
    %c0 = arith.constant 0 : index
    %c0_0 = arith.constant 0 : index
    %0 = vector.load %arg1[%c0, %c0_0] : memref<128x288xf32, #tpu.memory_space<vmem>>, vector<128x288xf32>
    %c0_1 = arith.constant 0 : index
    %c0_2 = arith.constant 0 : index
    %1 = vector.load %arg3[%c0_1, %c0_2] : memref<1x288xf32, #tpu.memory_space<vmem>>, vector<1x288xf32>
    %2 = vector.broadcast %1 : vector<1x288xf32> to vector<128x288xf32>
    %3 = arith.mulf %0, %2 : vector<128x288xf32>
    %c0_3 = arith.constant 0 : index
    %c0_4 = arith.constant 0 : index
    %4 = vector.load %arg4[%c0_3, %c0_4] : memref<1x288xf32, #tpu.memory_space<vmem>>, vector<1x288xf32>
    %5 = vector.broadcast %4 : vector<1x288xf32> to vector<128x288xf32>
    %6 = arith.addf %3, %5 : vector<128x288xf32>
    %cst = arith.constant 0.000000e+00 : f32
    %7 = vector.broadcast %cst : f32 to vector<128x288xf32>
    %8 = arith.maximumf %6, %7 : vector<128x288xf32>
    %c0_5 = arith.constant 0 : index
    %c0_6 = arith.constant 0 : index
    %9 = vector.load %arg2[%c0_5, %c0_6] : memref<288x16xf32, #tpu.memory_space<vmem>>, vector<288x16xf32>
    %cst_7 = arith.constant dense<0.000000e+00> : vector<128x16xf32>
    %10 = tpu.matmul %8, %9, %cst_7 {dimension_numbers = #tpu.dot_dimension_numbers<[1], [0], [0], [1], [0, 0, 1, 1], [], []>} : vector<128x288xf32>, vector<288x16xf32>, vector<128x16xf32> -> vector<128x16xf32>
    %c0_8 = arith.constant 0 : index
    %c0_9 = arith.constant 0 : index
    %11 = vector.load %arg5[%c0_8, %c0_9] : memref<1x16xf32, #tpu.memory_space<vmem>>, vector<1x16xf32>
    %12 = vector.broadcast %11 : vector<1x16xf32> to vector<128x16xf32>
    %13 = arith.mulf %10, %12 : vector<128x16xf32>
    %c0_10 = arith.constant 0 : index
    %c0_11 = arith.constant 0 : index
    %14 = vector.load %arg6[%c0_10, %c0_11] : memref<1x16xf32, #tpu.memory_space<vmem>>, vector<1x16xf32>
    %15 = vector.broadcast %14 : vector<1x16xf32> to vector<128x16xf32>
    %16 = arith.addf %13, %15 : vector<128x16xf32>
    %c0_12 = arith.constant 0 : index
    %c0_13 = arith.constant 0 : index
    %17 = vector.load %arg7[%c0_12, %c0_13] : memref<128x48xf32, #tpu.memory_space<vmem>>, vector<128x16xf32>
    tpu.vector_store %arg7[%c0_12, %c0_13], %16 {strides = array<i32>} : memref<128x48xf32, #tpu.memory_space<vmem>>, vector<128x16xf32>,
    %18 = vector.extract_strided_slice %0 {offsets = [0, 128], sizes = [128, 32], strides = [1, 1]} : vector<128x288xf32> to vector<128x32xf32>
    %c0_14 = arith.constant 0 : index
    %c16 = arith.constant 16 : index
    %19 = vector.load %arg7[%c0_14, %c16] : memref<128x48xf32, #tpu.memory_space<vmem>>, vector<128x32xf32>
    tpu.vector_store %arg7[%c0_14, %c16], %18 {strides = array<i32>} : memref<128x48xf32, #tpu.memory_space<vmem>>, vector<128x32xf32>,
    return
  }
  func.func @transform_0(%arg0: i32) -> (i32, i32) {
    %c0_i32 = arith.constant 0 : i32
    %c0_i32_0 = arith.constant 0 : i32
    return %arg0, %c0_i32 : i32, i32
  }
  func.func @transform_1(%arg0: i32) -> (i32, i32) {
    %c0_i32 = arith.constant 0 : i32
    %c0_i32_0 = arith.constant 0 : i32
    %c0_i32_1 = arith.constant 0 : i32
    return %c0_i32, %c0_i32_0 : i32, i32
  }
  func.func @transform_2(%arg0: i32) -> (i32, i32) {
    %c0_i32 = arith.constant 0 : i32
    %c0_i32_0 = arith.constant 0 : i32
    %c0_i32_1 = arith.constant 0 : i32
    return %c0_i32, %c0_i32_0 : i32, i32
  }
  func.func @transform_3(%arg0: i32) -> (i32, i32) {
    %c0_i32 = arith.constant 0 : i32
    %c0_i32_0 = arith.constant 0 : i32
    %c0_i32_1 = arith.constant 0 : i32
    return %c0_i32, %c0_i32_0 : i32, i32
  }
  func.func @transform_4(%arg0: i32) -> (i32, i32) {
    %c0_i32 = arith.constant 0 : i32
    %c0_i32_0 = arith.constant 0 : i32
    %c0_i32_1 = arith.constant 0 : i32
    return %c0_i32, %c0_i32_0 : i32, i32
  }
  func.func @transform_5(%arg0: i32) -> (i32, i32) {
    %c0_i32 = arith.constant 0 : i32
    %c0_i32_0 = arith.constant 0 : i32
    %c0_i32_1 = arith.constant 0 : i32
    return %c0_i32, %c0_i32_0 : i32, i32
  }
  func.func @transform_6(%arg0: i32) -> (i32, i32) {
    %c0_i32 = arith.constant 0 : i32
    %c0_i32_0 = arith.constant 0 : i32
    return %arg0, %c0_i32 : i32, i32
  }
}

module attributes {stable_mosaic.version = 11 : i64} {
  func.func @_dasp_conv_kernel(%arg0: i32, %arg1: memref<128x432xf32, #tpu.memory_space<vmem>>, %arg2: memref<432x16xf32, #tpu.memory_space<vmem>>, %arg3: memref<1x432xf32, #tpu.memory_space<vmem>>, %arg4: memref<1x432xf32, #tpu.memory_space<vmem>>, %arg5: memref<1x16xf32, #tpu.memory_space<vmem>>, %arg6: memref<1x16xf32, #tpu.memory_space<vmem>>, %arg7: memref<128x64xf32, #tpu.memory_space<vmem>>) attributes {dimension_semantics = [#tpu.dimension_semantics<parallel>], iteration_bounds = array<i64: 4>, scalar_prefetch = 0 : i64, scratch_operands = 0 : i64, tpu.core_type = #tpu.core_type<tc>, window_params = [{transform_indices = @transform_0, window_bounds = array<i64: 128, 432>}, {pipeline_mode = #tpu.pipeline_mode<synchronous>, transform_indices = @transform_1, window_bounds = array<i64: 432, 16>}, {pipeline_mode = #tpu.pipeline_mode<synchronous>, transform_indices = @transform_2, window_bounds = array<i64: 1, 432>}, {pipeline_mode = #tpu.pipeline_mode<synchronous>, transform_indices = @transform_3, window_bounds = array<i64: 1, 432>}, {pipeline_mode = #tpu.pipeline_mode<synchronous>, transform_indices = @transform_4, window_bounds = array<i64: 1, 16>}, {pipeline_mode = #tpu.pipeline_mode<synchronous>, transform_indices = @transform_5, window_bounds = array<i64: 1, 16>}, {transform_indices = @transform_6, window_bounds = array<i64: 128, 64>}]} {
    %c0 = arith.constant 0 : index
    %c0_0 = arith.constant 0 : index
    %0 = vector.load %arg1[%c0, %c0_0] : memref<128x432xf32, #tpu.memory_space<vmem>>, vector<128x432xf32>
    %c0_1 = arith.constant 0 : index
    %c0_2 = arith.constant 0 : index
    %1 = vector.load %arg3[%c0_1, %c0_2] : memref<1x432xf32, #tpu.memory_space<vmem>>, vector<1x432xf32>
    %2 = vector.broadcast %1 : vector<1x432xf32> to vector<128x432xf32>
    %3 = arith.mulf %0, %2 : vector<128x432xf32>
    %c0_3 = arith.constant 0 : index
    %c0_4 = arith.constant 0 : index
    %4 = vector.load %arg4[%c0_3, %c0_4] : memref<1x432xf32, #tpu.memory_space<vmem>>, vector<1x432xf32>
    %5 = vector.broadcast %4 : vector<1x432xf32> to vector<128x432xf32>
    %6 = arith.addf %3, %5 : vector<128x432xf32>
    %cst = arith.constant 0.000000e+00 : f32
    %7 = vector.broadcast %cst : f32 to vector<128x432xf32>
    %8 = arith.maximumf %6, %7 : vector<128x432xf32>
    %c0_5 = arith.constant 0 : index
    %c0_6 = arith.constant 0 : index
    %9 = vector.load %arg2[%c0_5, %c0_6] : memref<432x16xf32, #tpu.memory_space<vmem>>, vector<432x16xf32>
    %cst_7 = arith.constant dense<0.000000e+00> : vector<128x16xf32>
    %10 = tpu.matmul %8, %9, %cst_7 {dimension_numbers = #tpu.dot_dimension_numbers<[1], [0], [0], [1], [0, 0, 1, 1], [], []>} : vector<128x432xf32>, vector<432x16xf32>, vector<128x16xf32> -> vector<128x16xf32>
    %c0_8 = arith.constant 0 : index
    %c0_9 = arith.constant 0 : index
    %11 = vector.load %arg5[%c0_8, %c0_9] : memref<1x16xf32, #tpu.memory_space<vmem>>, vector<1x16xf32>
    %12 = vector.broadcast %11 : vector<1x16xf32> to vector<128x16xf32>
    %13 = arith.mulf %10, %12 : vector<128x16xf32>
    %c0_10 = arith.constant 0 : index
    %c0_11 = arith.constant 0 : index
    %14 = vector.load %arg6[%c0_10, %c0_11] : memref<1x16xf32, #tpu.memory_space<vmem>>, vector<1x16xf32>
    %15 = vector.broadcast %14 : vector<1x16xf32> to vector<128x16xf32>
    %16 = arith.addf %13, %15 : vector<128x16xf32>
    %c0_12 = arith.constant 0 : index
    %c0_13 = arith.constant 0 : index
    %17 = vector.load %arg7[%c0_12, %c0_13] : memref<128x64xf32, #tpu.memory_space<vmem>>, vector<128x16xf32>
    tpu.vector_store %arg7[%c0_12, %c0_13], %16 {strides = array<i32>} : memref<128x64xf32, #tpu.memory_space<vmem>>, vector<128x16xf32>,
    %18 = vector.extract_strided_slice %0 {offsets = [0, 192], sizes = [128, 48], strides = [1, 1]} : vector<128x432xf32> to vector<128x48xf32>
    %c0_14 = arith.constant 0 : index
    %c16 = arith.constant 16 : index
    %19 = vector.load %arg7[%c0_14, %c16] : memref<128x64xf32, #tpu.memory_space<vmem>>, vector<128x48xf32>
    tpu.vector_store %arg7[%c0_14, %c16], %18 {strides = array<i32>} : memref<128x64xf32, #tpu.memory_space<vmem>>, vector<128x48xf32>,
    return
  }
  func.func @transform_0(%arg0: i32) -> (i32, i32) {
    %c0_i32 = arith.constant 0 : i32
    %c0_i32_0 = arith.constant 0 : i32
    return %arg0, %c0_i32 : i32, i32
  }
  func.func @transform_1(%arg0: i32) -> (i32, i32) {
    %c0_i32 = arith.constant 0 : i32
    %c0_i32_0 = arith.constant 0 : i32
    %c0_i32_1 = arith.constant 0 : i32
    return %c0_i32, %c0_i32_0 : i32, i32
  }
  func.func @transform_2(%arg0: i32) -> (i32, i32) {
    %c0_i32 = arith.constant 0 : i32
    %c0_i32_0 = arith.constant 0 : i32
    %c0_i32_1 = arith.constant 0 : i32
    return %c0_i32, %c0_i32_0 : i32, i32
  }
  func.func @transform_3(%arg0: i32) -> (i32, i32) {
    %c0_i32 = arith.constant 0 : i32
    %c0_i32_0 = arith.constant 0 : i32
    %c0_i32_1 = arith.constant 0 : i32
    return %c0_i32, %c0_i32_0 : i32, i32
  }
  func.func @transform_4(%arg0: i32) -> (i32, i32) {
    %c0_i32 = arith.constant 0 : i32
    %c0_i32_0 = arith.constant 0 : i32
    %c0_i32_1 = arith.constant 0 : i32
    return %c0_i32, %c0_i32_0 : i32, i32
  }
  func.func @transform_5(%arg0: i32) -> (i32, i32) {
    %c0_i32 = arith.constant 0 : i32
    %c0_i32_0 = arith.constant 0 : i32
    %c0_i32_1 = arith.constant 0 : i32
    return %c0_i32, %c0_i32_0 : i32, i32
  }
  func.func @transform_6(%arg0: i32) -> (i32, i32) {
    %c0_i32 = arith.constant 0 : i32
    %c0_i32_0 = arith.constant 0 : i32
    return %arg0, %c0_i32 : i32, i32
  }
}

</mosaic_0001>

<llo_original>
// kernel: feature_extraction_denseasp.4
$region0: #{feature_extraction_denseasp.4}
  #allocation0 [shape = 'u32[]', space=smem, size = 0x4, offset = 0x4, fixed_abs, tag = 'smem constant byte address 0x4 - core index']
  #allocation1 [shape = 'u32[72,128]{1,0:T(1,128)}', space=vmem, size = 0x9000, scoped, tag = 'internal scratch']
  %s0 = inlined_call_operand.vmem [shape: f32[512,72], index: 0, kind: input, shape index: {}]
  %s1 = inlined_call_operand.vmem [shape: f32[72,16], index: 1, kind: input, shape index: {}]
  %s2 = inlined_call_operand.vmem [shape: f32[1,72], index: 2, kind: input, shape index: {}]
  %s3 = inlined_call_operand.vmem [shape: f32[1,72], index: 3, kind: input, shape index: {}]
  %s4 = inlined_call_operand.vmem [shape: f32[1,16], index: 4, kind: input, shape index: {}]
  %s5 = inlined_call_operand.vmem [shape: f32[1,16], index: 5, kind: input, shape index: {}]
  %s6 = inlined_call_operand.vmem [shape: f32[512,16], index: 6, kind: output, shape index: {}]
  %s7 = sld [smem:[#allocation0]]
  $region57: #{feature_extraction_denseasp.4} parent=0
    _
  %s9 = ssub.s32 1, %s7
  %s10 = scalar_select 0, %s9, %s7
  loop: start=0, step=1, limit=6
  $region2: #{feature_extraction_denseasp.4} parent=0 // loop_pre_header
    _
  $region3: #{feature_extraction_denseasp.4} parent=0 // loop_header
    %s12 = sphi 0, %s16
    %p13 = scmp.ge.s32.totalorder %s12, 6
    %s22 = sphi 0, %s24
    %s25 = sphi 0, %s22
    %s26 = sphi 0, %s25
    %s42 = sphi 0, %s26
    %s46 = sphi 0, %s46
    %s48 = sphi 0, %s46
    %s49 = sphi 0, %s48
    %s63 = sphi 0, %s49
    %s67 = sphi 0, %s67
    %s69 = sphi 0, %s67
    %s70 = sphi 0, %s69
    %s84 = sphi 0, %s70
    %s88 = sphi 0, %s88
    %s90 = sphi 0, %s88
    %s91 = sphi 0, %s90
    %s105 = sphi 0, %s91
    %s109 = sphi 0, %s109
    %s111 = sphi 0, %s109
    %s112 = sphi 0, %s111
    %s126 = sphi 0, %s112
    %s130 = sphi 0, %s130
    %s132 = sphi 0, %s130
    %s133 = sphi 0, %s132
    %s147 = sphi 0, %s133
    %s153 = sphi 0, %s155
    %s156 = sphi 0, %s153
    %s157 = sphi 0, %s156
    %s173 = sphi 0, %s157
  $region4: #{feature_extraction_denseasp.4} parent=0 // loop_header_branch
    %15 = sbr.rel (%p13) target = $region8
  $region5: #{feature_extraction_denseasp.4} parent=0 // loop_body
    %s17 = ssub.s32 %s12, 1
    %s18 = ssub.s32 %s12, 2
    %s19 = sadd.s32 %s12, 1
    %s20 = ssub.s32 %s12, %s19
    %p21 = scmp.eq.s32.totalorder %s20, 0
    %s23 = sadd.s32 %s22, 1
    %s24 = scalar_select %p21, %s22, %s23
    %p27 = pneg %p21
    %p28 = scmp.eq.s32.totalorder %s12, 3
    %p29 = por %p27, %p28
    %p30 = scmp.ne.s32.totalorder %s22, %s25
    %p31 = scmp.eq.s32.totalorder %s12, 0
    %p32 = por %p30, %p31
    %p33 = scmp.ne.s32.totalorder %s22, %s25
    %p34 = scmp.eq.s32.totalorder %s17, 3
    %p35 = por %p33, %p34
    %p36 = scmp.ne.s32.totalorder %s25, %s26
    %p37 = scmp.eq.s32.totalorder %s17, 0
    %p38 = por %p36, %p37
    %p39 = scmp.ne.s32.totalorder %s25, %s26
    %p40 = scmp.eq.s32.totalorder %s18, 3
    %p41 = por %p39, %p40
    %p43 = scmp.ne.s32.totalorder %s26, %s42
    %p44 = scmp.eq.s32.totalorder %s18, 0
    %p45 = por %p43, %p44
    %s47 = sadd.s32 %s46, 1
    %p50 = scmp.eq.s32.totalorder %s12, 3
    %p51 = scmp.ne.s32.totalorder %s46, %s48
    %p52 = scmp.eq.s32.totalorder %s12, 0
    %p53 = por %p51, %p52
    %p54 = scmp.ne.s32.totalorder %s46, %s48
    %p55 = scmp.eq.s32.totalorder %s17, 3
    %p56 = por %p54, %p55
    %p57 = scmp.ne.s32.totalorder %s48, %s49
    %p58 = scmp.eq.s32.totalorder %s17, 0
    %p59 = por %p57, %p58
    %p60 = scmp.ne.s32.totalorder %s48, %s49
    %p61 = scmp.eq.s32.totalorder %s18, 3
    %p62 = por %p60, %p61
    %p64 = scmp.ne.s32.totalorder %s49, %s63
    %p65 = scmp.eq.s32.totalorder %s18, 0
    %p66 = por %p64, %p65
    %s68 = sadd.s32 %s67, 1
    %p71 = scmp.eq.s32.totalorder %s12, 3
    %p72 = scmp.ne.s32.totalorder %s67, %s69
    %p73 = scmp.eq.s32.totalorder %s12, 0
    %p74 = por %p72, %p73
    %p75 = scmp.ne.s32.totalorder %s67, %s69
    %p76 = scmp.eq.s32.totalorder %s17, 3
    %p77 = por %p75, %p76
    %p78 = scmp.ne.s32.totalorder %s69, %s70
    %p79 = scmp.eq.s32.totalorder %s17, 0
    %p80 = por %p78, %p79
    %p81 = scmp.ne.s32.totalorder %s69, %s70
    %p82 = scmp.eq.s32.totalorder %s18, 3
    %p83 = por %p81, %p82
    %p85 = scmp.ne.s32.totalorder %s70, %s84
    %p86 = scmp.eq.s32.totalorder %s18, 0
    %p87 = por %p85, %p86
    %s89 = sadd.s32 %s88, 1
    %p92 = scmp.eq.s32.totalorder %s12, 3
    %p93 = scmp.ne.s32.totalorder %s88, %s90
    %p94 = scmp.eq.s32.totalorder %s12, 0
    %p95 = por %p93, %p94
    %p96 = scmp.ne.s32.totalorder %s88, %s90
    %p97 = scmp.eq.s32.totalorder %s17, 3
    %p98 = por %p96, %p97
    %p99 = scmp.ne.s32.totalorder %s90, %s91
    %p100 = scmp.eq.s32.totalorder %s17, 0
    %p101 = por %p99, %p100
    %p102 = scmp.ne.s32.totalorder %s90, %s91
    %p103 = scmp.eq.s32.totalorder %s18, 3
    %p104 = por %p102, %p103
    %p106 = scmp.ne.s32.totalorder %s91, %s105
    %p107 = scmp.eq.s32.totalorder %s18, 0
    %p108 = por %p106, %p107
    %s110 = sadd.s32 %s109, 1
    %p113 = scmp.eq.s32.totalorder %s12, 3
    %p114 = scmp.ne.s32.totalorder %s109, %s111
    %p115 = scmp.eq.s32.totalorder %s12, 0
    %p116 = por %p114, %p115
    %p117 = scmp.ne.s32.totalorder %s109, %s111
    %p118 = scmp.eq.s32.totalorder %s17, 3
    %p119 = por %p117, %p118
    %p120 = scmp.ne.s32.totalorder %s111, %s112
    %p121 = scmp.eq.s32.totalorder %s17, 0
    %p122 = por %p120, %p121
    %p123 = scmp.ne.s32.totalorder %s111, %s112
    %p124 = scmp.eq.s32.totalorder %s18, 3
    %p125 = por %p123, %p124
    %p127 = scmp.ne.s32.totalorder %s112, %s126
    %p128 = scmp.eq.s32.totalorder %s18, 0
    %p129 = por %p127, %p128
    %s131 = sadd.s32 %s130, 1
    %p134 = scmp.eq.s32.totalorder %s12, 3
    %p135 = scmp.ne.s32.totalorder %s130, %s132
    %p136 = scmp.eq.s32.totalorder %s12, 0
    %p137 = por %p135, %p136
    %p138 = scmp.ne.s32.totalorder %s130, %s132
    %p139 = scmp.eq.s32.totalorder %s17, 3
    %p140 = por %p138, %p139
    %p141 = scmp.ne.s32.totalorder %s132, %s133
    %p142 = scmp.eq.s32.totalorder %s17, 0
    %p143 = por %p141, %p142
    %p144 = scmp.ne.s32.totalorder %s132, %s133
    %p145 = scmp.eq.s32.totalorder %s18, 3
    %p146 = por %p144, %p145
    %p148 = scmp.ne.s32.totalorder %s133, %s147
    %p149 = scmp.eq.s32.totalorder %s18, 0
    %p150 = por %p148, %p149
    %s151 = ssub.s32 %s12, %s19
    %p152 = scmp.eq.s32.totalorder %s151, 0
    %s154 = sadd.s32 %s153, 1
    %s155 = scalar_select %p152, %s153, %s154
    %p158 = pneg %p152
    %p159 = scmp.eq.s32.totalorder %s12, 3
    %p160 = por %p158, %p159
    %p161 = scmp.ne.s32.totalorder %s153, %s156
    %p162 = scmp.eq.s32.totalorder %s12, 0
    %p163 = por %p161, %p162
    %p164 = scmp.ne.s32.totalorder %s153, %s156
    %p165 = scmp.eq.s32.totalorder %s17, 3
    %p166 = por %p164, %p165
    %p167 = scmp.ne.s32.totalorder %s156, %s157
    %p168 = scmp.eq.s32.totalorder %s17, 0
    %p169 = por %p167, %p168
    %p170 = scmp.ne.s32.totalorder %s156, %s157
    %p171 = scmp.eq.s32.totalorder %s18, 3
    %p172 = por %p170, %p171
    %p174 = scmp.ne.s32.totalorder %s157, %s173
    %p175 = scmp.eq.s32.totalorder %s18, 0
    %p176 = por %p174, %p175
    %p177 = scmp.le.s32.totalorder 1, %s12
    %p178 = scmp.lt.s32.totalorder %s12, 5
    %p179 = pnand %p177, %p178
    %p180 = pneg %p179
    // Predicated region
    $region9: #{feature_extraction_denseasp.4} parent=5 // pred_check
      _
    $region10: #{feature_extraction_denseasp.4} parent=5 // pred_check_branch
      %182 = sbr.rel (%p179) target = $region12
    $region11: #{feature_extraction_denseasp.4} parent=5 // pred_region
      %s183 = ssub.s32 %s12, 1
      // Predicated region
      $region13: #{feature_extraction_denseasp.4} parent=11 // pred_check
        %p184 = pneg %p59
      $region14: #{feature_extraction_denseasp.4} parent=11 // pred_check_branch
        %186 = sbr.rel (%p184) target = $region16
      $region15: #{feature_extraction_denseasp.4} parent=11 // pred_region
        _
      $region16: #{feature_extraction_denseasp.4} parent=11 // pred_fallthru
        _
      // Predicated region
      $region17: #{feature_extraction_denseasp.4} parent=11 // pred_check
        %p187 = pneg %p80
      $region18: #{feature_extraction_denseasp.4} parent=11 // pred_check_branch
        %189 = sbr.rel (%p187) target = $region20
      $region19: #{feature_extraction_denseasp.4} parent=11 // pred_region
        _
      $region20: #{feature_extraction_denseasp.4} parent=11 // pred_fallthru
        _
      // Predicated region
      $region21: #{feature_extraction_denseasp.4} parent=11 // pred_check
        %p190 = pneg %p101
      $region22: #{feature_extraction_denseasp.4} parent=11 // pred_check_branch
        %192 = sbr.rel (%p190) target = $region24
      $region23: #{feature_extraction_denseasp.4} parent=11 // pred_region
        _
      $region24: #{feature_extraction_denseasp.4} parent=11 // pred_fallthru
        _
      // Predicated region
      $region25: #{feature_extraction_denseasp.4} parent=11 // pred_check
        %p193 = pneg %p122
      $region26: #{feature_extraction_denseasp.4} parent=11 // pred_check_branch
        %195 = sbr.rel (%p193) target = $region28
      $region27: #{feature_extraction_denseasp.4} parent=11 // pred_region
        _
      $region28: #{feature_extraction_denseasp.4} parent=11 // pred_fallthru
        _
      // Predicated region
      $region29: #{feature_extraction_denseasp.4} parent=11 // pred_check
        %p196 = pneg %p143
      $region30: #{feature_extraction_denseasp.4} parent=11 // pred_check_branch
        %198 = sbr.rel (%p196) target = $region32
      $region31: #{feature_extraction_denseasp.4} parent=11 // pred_region
        _
      $region32: #{feature_extraction_denseasp.4} parent=11 // pred_fallthru
        _
    $region12: #{feature_extraction_denseasp.4} parent=5 // pred_fallthru
      _
    %p199 = scmp.lt.s32.totalorder %s12, 4
    // Predicated region
    $region33: #{feature_extraction_denseasp.4} parent=5 // pred_check
      %p200 = pneg %p199
    $region34: #{feature_extraction_denseasp.4} parent=5 // pred_check_branch
      %202 = sbr.rel (%p200) target = $region36
    $region35: #{feature_extraction_denseasp.4} parent=5 // pred_region
      // Predicated region
      $region37: #{feature_extraction_denseasp.4} parent=35 // pred_check
        %p203 = pneg %p32
      $region38: #{feature_extraction_denseasp.4} parent=35 // pred_check_branch
        %205 = sbr.rel (%p203) target = $region40
      $region39: #{feature_extraction_denseasp.4} parent=35 // pred_region
        %s206 = smul.u32 16, %s12
        %p207 = scmp.lt.s32.totalorder %s206, 63
        %s208 = scalar_select %p207, %s206, 63
        %s209 = smul.addr %s208, 8
        %s210 = scalar_lea.vmem %s0, %s209
        %s211 = smul.u32 16, %s12
      $region40: #{feature_extraction_denseasp.4} parent=35 // pred_fallthru
        _
    $region36: #{feature_extraction_denseasp.4} parent=5 // pred_fallthru
      _
    %p212 = scmp.le.s32.totalorder 1, %s12
    %p213 = scmp.lt.s32.totalorder %s12, 5
    %p214 = pnand %p212, %p213
    %p215 = pneg %p214
    // Predicated region
    $region41: #{feature_extraction_denseasp.4} parent=5 // pred_check
      _
    $region42: #{feature_extraction_denseasp.4} parent=5 // pred_check_branch
      %217 = sbr.rel (%p214) target = $region44
    $region43: #{feature_extraction_denseasp.4} parent=5 // pred_region
      %s218 = ssub.s32 %s12, 1
      %s219 = smul.u32 16, %s17
      %p220 = scmp.lt.s32.totalorder %s219, 63
      %s221 = scalar_select %p220, %s219, 63
      %s222 = smul.addr %s221, 8
      %s223 = scalar_lea.vmem %s0, %s222
      %p224 = pneg %p38
      %p225 = pneg %p35
      %p226 = pneg %p59
      %p227 = pneg %p56
      %p228 = pneg %p80
      %p229 = pneg %p77
      %p230 = pneg %p101
      %p231 = pneg %p98
      %p232 = pneg %p122
      %p233 = pneg %p119
      %p234 = pneg %p143
      %p235 = pneg %p140
      %p236 = pneg %p169
      %p237 = pneg %p166
      %s238 = smul.u32 16, %s17
      %p239 = scmp.lt.s32.totalorder %s238, 63
      %s240 = scalar_select %p239, %s238, 63
      %s241 = smul.addr %s240, 8
      %s242 = scalar_lea.vmem %s6, %s241
      %s243 = smul.u32 16, %s17
      %p244 = scmp.lt.s32.totalorder %s243, 63
      %s245 = scalar_select %p244, %s243, 63
      %s246 = smul.addr %s245, 8
      %s247 = scalar_lea.vmem %s0, %s246
      %s248 = smul.u32 16, %s17
      %s249 = smul.u32 16, %s17
      %p250 = scmp.lt.s32.totalorder %s249, 63
      %s251 = scalar_select %p250, %s249, 63
      %s252 = smul.addr %s251, 8
      %s253 = scalar_lea.vmem %s6, %s252
      %s254 = smul.u32 16, %s17
      %v255 = vld [vmem:[%s247] sm:$0xff]
      %v256 = vld [vmem:[%s247 + $0x8] sm:$0xff]
      %v257 = vld [vmem:[%s247 + $0x10] sm:$0xff]
      %v258 = vld [vmem:[%s247 + $0x18] sm:$0xff]
      %v259 = vld [vmem:[%s247 + $0x20] sm:$0xff]
      %v260 = vld [vmem:[%s247 + $0x28] sm:$0xff]
      %v261 = vld [vmem:[%s247 + $0x30] sm:$0xff]
      %v262 = vld [vmem:[%s247 + $0x38] sm:$0xff]
      %v263 = vld [vmem:[%s247 + $0x40] sm:$0xff]
      %v264 = vld [vmem:[%s247 + $0x48] sm:$0xff]
      %v265 = vld [vmem:[%s247 + $0x50] sm:$0xff]
      %v266 = vld [vmem:[%s247 + $0x58] sm:$0xff]
      %v267 = vld [vmem:[%s247 + $0x60] sm:$0xff]
      %v268 = vld [vmem:[%s247 + $0x68] sm:$0xff]
      %v269 = vld [vmem:[%s247 + $0x70] sm:$0xff]
      %v270 = vld [vmem:[%s247 + $0x78] sm:$0xff]
      %v271 = vld [vmem:[%s1] sm:$0xff]
      %v272 = vld [vmem:[%s1 + $0x8] sm:$0xff]
      %v273 = vld [vmem:[%s1 + $0x10] sm:$0xff]
      %v274 = vld [vmem:[%s1 + $0x18] sm:$0xff]
      %v275 = vld [vmem:[%s1 + $0x20] sm:$0xff]
      %v276 = vld [vmem:[%s1 + $0x28] sm:$0xff]
      %v277 = vld [vmem:[%s1 + $0x30] sm:$0xff]
      %v278 = vld [vmem:[%s1 + $0x38] sm:$0xff]
      %v279 = vld [vmem:[%s1 + $0x40] sm:$0xff]
      %vm280 = vcmask 588800
      %v282 = vsel %vm280, %v255, 0
      %v285 = vsel %vm280, %v256, 0
      %v288 = vsel %vm280, %v257, 0
      %v291 = vsel %vm280, %v258, 0
      %v294 = vsel %vm280, %v259, 0
      %v297 = vsel %vm280, %v260, 0
      %v300 = vsel %vm280, %v261, 0
      %v303 = vsel %vm280, %v262, 0
      %v306 = vsel %vm280, %v263, 0
      %v309 = vsel %vm280, %v264, 0
      %v312 = vsel %vm280, %v265, 0
      %v315 = vsel %vm280, %v266, 0
      %v318 = vsel %vm280, %v267, 0
      %v321 = vsel %vm280, %v268, 0
      %v324 = vsel %vm280, %v269, 0
      %v327 = vsel %vm280, %v270, 0
      %329 = vmatpush.msra.mxu0 0.0
      %330 = vmatpush.msra.mxu0 0.0
      %331 = vmatpush.msra.mxu0 0.0
      %332 = vmatpush.msra.mxu0 0.0
      %333 = vmatpush.msra.mxu0 0.0
      %334 = vmatpush.msra.mxu0 0.0
      %335 = vmatpush.msra.mxu0 0.0
      %336 = vmatpush.msra.mxu0 %v279
      %337 = vmatpush.msra.mxu0 %v278
      %338 = vmatpush.msra.mxu0 %v277
      %339 = vmatpush.msra.mxu0 %v276
      %340 = vmatpush.msra.mxu0 %v275
      %341 = vmatpush.msra.mxu0 %v274
      %342 = vmatpush.msra.mxu0 %v273
      %343 = vmatpush.msra.mxu0 %v272
      %344 = vmatpush.msra.mxu0 %v271
      %345 = vmatmul.f32.gmra.mxu0 %v282
      %v346 = vpop.f32.mrf.mxu0
      %v347 = vadd.f32 0.0, %v346
      %348 = vmatmul.f32.gmra.mxu0 %v285
      %v349 = vpop.f32.mrf.mxu0
      %v350 = vadd.f32 0.0, %v349
      %351 = vmatmul.f32.gmra.mxu0 %v288
      %v352 = vpop.f32.mrf.mxu0
      %v353 = vadd.f32 0.0, %v352
      %354 = vmatmul.f32.gmra.mxu0 %v291
      %v355 = vpop.f32.mrf.mxu0
      %v356 = vadd.f32 0.0, %v355
      %357 = vmatmul.f32.gmra.mxu0 %v294
      %v358 = vpop.f32.mrf.mxu0
      %v359 = vadd.f32 0.0, %v358
      %360 = vmatmul.f32.gmra.mxu0 %v297
      %v361 = vpop.f32.mrf.mxu0
      %v362 = vadd.f32 0.0, %v361
      %363 = vmatmul.f32.gmra.mxu0 %v300
      %v364 = vpop.f32.mrf.mxu0
      %v365 = vadd.f32 0.0, %v364
      %366 = vmatmul.f32.gmra.mxu0 %v303
      %v367 = vpop.f32.mrf.mxu0
      %v368 = vadd.f32 0.0, %v367
      %369 = vmatmul.f32.gmra.mxu0 %v306
      %v370 = vpop.f32.mrf.mxu0
      %v371 = vadd.f32 0.0, %v370
      %372 = vmatmul.f32.gmra.mxu0 %v309
      %v373 = vpop.f32.mrf.mxu0
      %v374 = vadd.f32 0.0, %v373
      %375 = vmatmul.f32.gmra.mxu0 %v312
      %v376 = vpop.f32.mrf.mxu0
      %v377 = vadd.f32 0.0, %v376
      %378 = vmatmul.f32.gmra.mxu0 %v315
      %v379 = vpop.f32.mrf.mxu0
      %v380 = vadd.f32 0.0, %v379
      %381 = vmatmul.f32.gmra.mxu0 %v318
      %v382 = vpop.f32.mrf.mxu0
      %v383 = vadd.f32 0.0, %v382
      %384 = vmatmul.f32.gmra.mxu0 %v321
      %v385 = vpop.f32.mrf.mxu0
      %v386 = vadd.f32 0.0, %v385
      %387 = vmatmul.f32.gmra.mxu0 %v324
      %v388 = vpop.f32.mrf.mxu0
      %v389 = vadd.f32 0.0, %v388
      %390 = vmatmul.f32.gmra.mxu0 %v327
      %v391 = vpop.f32.mrf.mxu0
      %v392 = vadd.f32 0.0, %v391
      %393 = vdwg.mxu0
      %v394 = vld [vmem:[%s4] sm:$0x1]
      %v396 = vperm.slane %v394, 0
      %v398 = vmul.f32 %v347, %v396
      %v399 = vmul.f32 %v350, %v396
      %v400 = vmul.f32 %v353, %v396
      %v401 = vmul.f32 %v356, %v396
      %v402 = vmul.f32 %v359, %v396
      %v403 = vmul.f32 %v362, %v396
      %v404 = vmul.f32 %v365, %v396
      %v405 = vmul.f32 %v368, %v396
      %v406 = vmul.f32 %v371, %v396
      %v407 = vmul.f32 %v374, %v396
      %v408 = vmul.f32 %v377, %v396
      %v409 = vmul.f32 %v380, %v396
      %v410 = vmul.f32 %v383, %v396
      %v411 = vmul.f32 %v386, %v396
      %v412 = vmul.f32 %v389, %v396
      %v413 = vmul.f32 %v392, %v396
      %v414 = vld [vmem:[%s5] sm:$0x1]
      %v416 = vperm.slane %v414, 0
      %v418 = vadd.f32 %v398, %v416
      %v419 = vadd.f32 %v399, %v416
      %v420 = vadd.f32 %v400, %v416
      %v421 = vadd.f32 %v401, %v416
      %v422 = vadd.f32 %v402, %v416
      %v423 = vadd.f32 %v403, %v416
      %v424 = vadd.f32 %v404, %v416
      %v425 = vadd.f32 %v405, %v416
      %v426 = vadd.f32 %v406, %v416
      %v427 = vadd.f32 %v407, %v416
      %v428 = vadd.f32 %v408, %v416
      %v429 = vadd.f32 %v409, %v416
      %v430 = vadd.f32 %v410, %v416
      %v431 = vadd.f32 %v411, %v416
      %v432 = vadd.f32 %v412, %v416
      %v433 = vadd.f32 %v413, %v416
      %v434 = vmax.f32 %v418, 0.0
      %v435 = vmax.f32 %v419, 0.0
      %v436 = vmax.f32 %v420, 0.0
      %v437 = vmax.f32 %v421, 0.0
      %v438 = vmax.f32 %v422, 0.0
      %v439 = vmax.f32 %v423, 0.0
      %v440 = vmax.f32 %v424, 0.0
      %v441 = vmax.f32 %v425, 0.0
      %v442 = vmax.f32 %v426, 0.0
      %v443 = vmax.f32 %v427, 0.0
      %v444 = vmax.f32 %v428, 0.0
      %v445 = vmax.f32 %v429, 0.0
      %v446 = vmax.f32 %v430, 0.0
      %v447 = vmax.f32 %v431, 0.0
      %v448 = vmax.f32 %v432, 0.0
      %v449 = vmax.f32 %v433, 0.0
      %vm450 = vcmask 130048
      %451 = vst.msk [vmem:[%s253] sm:$0xff] %vm450, %v434
      %452 = vst.msk [vmem:[%s253 + $0x8] sm:$0xff] %vm450, %v435
      %453 = vst.msk [vmem:[%s253 + $0x10] sm:$0xff] %vm450, %v436
      %454 = vst.msk [vmem:[%s253 + $0x18] sm:$0xff] %vm450, %v437
      %455 = vst.msk [vmem:[%s253 + $0x20] sm:$0xff] %vm450, %v438
      %456 = vst.msk [vmem:[%s253 + $0x28] sm:$0xff] %vm450, %v439
      %457 = vst.msk [vmem:[%s253 + $0x30] sm:$0xff] %vm450, %v440
      %458 = vst.msk [vmem:[%s253 + $0x38] sm:$0xff] %vm450, %v441
      %459 = vst.msk [vmem:[%s253 + $0x40] sm:$0xff] %vm450, %v442
      %460 = vst.msk [vmem:[%s253 + $0x48] sm:$0xff] %vm450, %v443
      %461 = vst.msk [vmem:[%s253 + $0x50] sm:$0xff] %vm450, %v444
      %462 = vst.msk [vmem:[%s253 + $0x58] sm:$0xff] %vm450, %v445
      %463 = vst.msk [vmem:[%s253 + $0x60] sm:$0xff] %vm450, %v446
      %464 = vst.msk [vmem:[%s253 + $0x68] sm:$0xff] %vm450, %v447
      %465 = vst.msk [vmem:[%s253 + $0x70] sm:$0xff] %vm450, %v448
      %466 = vst.msk [vmem:[%s253 + $0x78] sm:$0xff] %vm450, %v449
      %s467 = smul.u32 16, %s17
      %p468 = scmp.lt.s32.totalorder %s467, 63
      %s469 = scalar_select %p468, %s467, 63
      %s470 = smul.addr %s469, 8
      %s471 = scalar_lea.vmem %s6, %s470
      // Predicated region
      $region45: #{feature_extraction_denseasp.4} parent=43 // pred_check
        %p472 = pneg %p166
      $region46: #{feature_extraction_denseasp.4} parent=43 // pred_check_branch
        %474 = sbr.rel (%p472) target = $region48
      $region47: #{feature_extraction_denseasp.4} parent=43 // pred_region
        %s475 = smul.u32 16, %s17
      $region48: #{feature_extraction_denseasp.4} parent=43 // pred_fallthru
        _
    $region44: #{feature_extraction_denseasp.4} parent=5 // pred_fallthru
      _
    %p476 = scmp.le.s32.totalorder 2, %s12
    // Predicated region
    $region49: #{feature_extraction_denseasp.4} parent=5 // pred_check
      %p477 = pneg %p476
    $region50: #{feature_extraction_denseasp.4} parent=5 // pred_check_branch
      %479 = sbr.rel (%p477) target = $region52
    $region51: #{feature_extraction_denseasp.4} parent=5 // pred_region
      %s480 = ssub.s32 %s12, 2
      // Predicated region
      $region53: #{feature_extraction_denseasp.4} parent=51 // pred_check
        %p481 = pneg %p172
      $region54: #{feature_extraction_denseasp.4} parent=51 // pred_check_branch
        %483 = sbr.rel (%p481) target = $region56
      $region55: #{feature_extraction_denseasp.4} parent=51 // pred_region
        %s484 = smul.u32 16, %s18
        %p485 = scmp.lt.s32.totalorder %s484, 63
        %s486 = scalar_select %p485, %s484, 63
        %s487 = smul.addr %s486, 8
        %s488 = scalar_lea.vmem %s6, %s487
      $region56: #{feature_extraction_denseasp.4} parent=51 // pred_fallthru
        _
    $region52: #{feature_extraction_denseasp.4} parent=5 // pred_fallthru
      _
  $region6: #{feature_extraction_denseasp.4} parent=0 // loop_footer
    %s16 = sadd.s32 1, %s12
  $region7: #{feature_extraction_denseasp.4} parent=0 // loop_footer_branch
    %11 = sbr.rel target = $region3
  $region8: #{feature_extraction_denseasp.4} parent=0 // loop_exit
    _

// kernel: tile.33
$region0: #{tile.33}
  #allocation0 [shape = 's32[1]{0}', space=sflag, size = 0x4, scoped, tag = 'scoped memory for tile.33']
  %s0 = inlined_call_operand.vmem [shape: f32[16], index: 0, kind: input, shape index: {}]
  %s1 = inlined_call_operand.vmem [shape: f32[9,16], index: 1, kind: output, shape index: {}]
  // Predicated region
  $region2: #{tile.33} parent=0 // pred_check
    _
  $region3: #{tile.33} parent=0 // pred_check_branch
    %3 = sbr.rel (0) target = $region5
  $region4: #{tile.33} parent=0 // pred_region
    _
  $region5: #{tile.33} parent=0 // pred_fallthru
    _
  %v4 = vld [vmem:[%s0] ss:$0 sm:$0xff]
  %5 = vst [vmem:[%s1] sm:$0xff] %v4
  %s6 = scalar_lea.vmem %s1, 8
  %7 = vst [vmem:[%s6] sm:$0xff] %v4

// kernel: tile.34
$region0: #{tile.34}
  %s0 = inlined_call_operand.vmem [shape: f32[9,16], index: 0, kind: input, shape index: {}]
  %s1 = inlined_call_operand.vmem [shape: f32[1,144], index: 1, kind: output, shape index: {}]
  $region1: #{tile.34} parent=0
    #allocation0 [shape = 'u8[8192]{0}', space=vmem, size = 0x2000, scoped, tag = 'scoped mem for output reshape']
    %s2 = smov 3
    %v3 = vld [vmem:[%s0] ss:$8 sm:%s2]
    %vm4 = vcmask 130048
    %5 = vst.msk [vmem:[#allocation0] ss:$8 sm:$0x3] %vm4, %v3
    %s6 = scalar_lea.vmem %s0, 7
    %v7 = vld [vmem:[%s6] sm:$0x1]
    %8 = vrot.lane.b32.xlu0 %v7, 112
    %v9 = vpop.permute.xlu0 %8
    %vm10 = vcmask 1048448
    %11 = vst.msk [vmem:[#allocation0] sm:$0x1] %vm10, %v9
    %s12 = scalar_lea.vmem %s0, 6
    %v13 = vld [vmem:[%s12] sm:$0x1]
    %14 = vrot.lane.b32.xlu0 %v13, 96
    %v15 = vpop.permute.xlu0 %14
    %vm16 = vcmask 917248
    %17 = vst.msk [vmem:[#allocation0] sm:$0x1] %vm16, %v15
    %s18 = scalar_lea.vmem %s0, 5
    %v19 = vld [vmem:[%s18] sm:$0x1]
    %20 = vrot.lane.b32.xlu0 %v19, 80
    %v21 = vpop.permute.xlu0 %20
    %vm22 = vcmask 786048
    %23 = vst.msk [vmem:[#allocation0] sm:$0x1] %vm22, %v21
    %s24 = scalar_lea.vmem %s0, 4
    %v25 = vld [vmem:[%s24] sm:$0x1]
    %26 = vrot.lane.b32.xlu0 %v25, 64
    %v27 = vpop.permute.xlu0 %26
    %vm28 = vcmask 654848
    %29 = vst.msk [vmem:[#allocation0] sm:$0x1] %vm28, %v27
    %s30 = scalar_lea.vmem %s0, 3
    %v31 = vld [vmem:[%s30] sm:$0x1]
    %32 = vrot.lane.b32.xlu0 %v31, 48
    %v33 = vpop.permute.xlu0 %32
    %vm34 = vcmask 523648
    %35 = vst.msk [vmem:[#allocation0] sm:$0x1] %vm34, %v33
    %s36 = scalar_lea.vmem %s0, 2
    %v37 = vld [vmem:[%s36] sm:$0x1]
    %38 = vrot.lane.b32.xlu0 %v37, 32
    %v39 = vpop.permute.xlu0 %38
    %vm40 = vcmask 392448
    %41 = vst.msk [vmem:[#allocation0] sm:$0x1] %vm40, %v39
    %s42 = scalar_lea.vmem %s0, 1
    %v43 = vld [vmem:[%s42] sm:$0x1]
    %44 = vrot.lane.b32.xlu0 %v43, 16
    %v45 = vpop.permute.xlu0 %44
    %vm46 = vcmask 261248
    %47 = vst.msk [vmem:[#allocation0] sm:$0x1] %vm46, %v45
    %s49 = ssub.s32 2, 1
    %v50 = vld [vmem:[#allocation0] sm:%s49]
    %s52 = ssub.s32 2, 1
    %53 = vst [vmem:[%s1] sm:%s52] %v50
    %s54 = scalar_lea.vmem [#allocation0], 8
    %v55 = vld [vmem:[%s54] sm:%s49]
    %s57 = ssub.s32 2, 1
    %s58 = scalar_lea.vmem %s1, 1
    %59 = vst [vmem:[%s58] sm:%s57] %v55

// kernel: feature_extraction_denseasp.5
$region0: #{feature_extraction_denseasp.5}
  #allocation0 [shape = 'u32[]', space=smem, size = 0x4, offset = 0x4, fixed_abs, tag = 'smem constant byte address 0x4 - core index']
  #allocation1 [shape = 'u32[72,128]{1,0:T(1,128)}', space=vmem, size = 0x9000, scoped, tag = 'internal scratch']
  %s0 = inlined_call_operand.vmem [shape: f32[512,144], index: 0, kind: input, shape index: {}]
  %s1 = inlined_call_operand.vmem [shape: f32[144,16], index: 1, kind: input, shape index: {}]
  %s2 = inlined_call_operand.vmem [shape: f32[1,144], index: 2, kind: input, shape index: {}]
  %s3 = inlined_call_operand.vmem [shape: f32[1,144], index: 3, kind: input, shape index: {}]
  %s4 = inlined_call_operand.vmem [shape: f32[1,16], index: 4, kind: input, shape index: {}]
  %s5 = inlined_call_operand.vmem [shape: f32[1,16], index: 5, kind: input, shape index: {}]
  %s6 = inlined_call_operand.vmem [shape: f32[512,32], index: 6, kind: output, shape index: {}]
  %s7 = sld [smem:[#allocation0]]
  $region57: #{feature_extraction_denseasp.5} parent=0
    _
  %s9 = ssub.s32 1, %s7
  %s10 = scalar_select 0, %s9, %s7
  loop: start=0, step=1, limit=6
  $region2: #{feature_extraction_denseasp.5} parent=0 // loop_pre_header
    _
  $region3: #{feature_extraction_denseasp.5} parent=0 // loop_header
    %s12 = sphi 0, %s16
    %p13 = scmp.ge.s32.totalorder %s12, 6
    %s22 = sphi 0, %s24
    %s25 = sphi 0, %s22
    %s26 = sphi 0, %s25
    %s42 = sphi 0, %s26
    %s46 = sphi 0, %s46
    %s48 = sphi 0, %s46
    %s49 = sphi 0, %s48
    %s63 = sphi 0, %s49
    %s67 = sphi 0, %s67
    %s69 = sphi 0, %s67
    %s70 = sphi 0, %s69
    %s84 = sphi 0, %s70
    %s88 = sphi 0, %s88
    %s90 = sphi 0, %s88
    %s91 = sphi 0, %s90
    %s105 = sphi 0, %s91
    %s109 = sphi 0, %s109
    %s111 = sphi 0, %s109
    %s112 = sphi 0, %s111
    %s126 = sphi 0, %s112
    %s130 = sphi 0, %s130
    %s132 = sphi 0, %s130
    %s133 = sphi 0, %s132
    %s147 = sphi 0, %s133
    %s153 = sphi 0, %s155
    %s156 = sphi 0, %s153
    %s157 = sphi 0, %s156
    %s173 = sphi 0, %s157
  $region4: #{feature_extraction_denseasp.5} parent=0 // loop_header_branch
    %15 = sbr.rel (%p13) target = $region8
  $region5: #{feature_extraction_denseasp.5} parent=0 // loop_body
    %s17 = ssub.s32 %s12, 1
    %s18 = ssub.s32 %s12, 2
    %s19 = sadd.s32 %s12, 1
    %s20 = ssub.s32 %s12, %s19
    %p21 = scmp.eq.s32.totalorder %s20, 0
    %s23 = sadd.s32 %s22, 1
    %s24 = scalar_select %p21, %s22, %s23
    %p27 = pneg %p21
    %p28 = scmp.eq.s32.totalorder %s12, 3
    %p29 = por %p27, %p28
    %p30 = scmp.ne.s32.totalorder %s22, %s25
    %p31 = scmp.eq.s32.totalorder %s12, 0
    %p32 = por %p30, %p31
    %p33 = scmp.ne.s32.totalorder %s22, %s25
    %p34 = scmp.eq.s32.totalorder %s17, 3
    %p35 = por %p33, %p34
    %p36 = scmp.ne.s32.totalorder %s25, %s26
    %p37 = scmp.eq.s32.totalorder %s17, 0
    %p38 = por %p36, %p37
    %p39 = scmp.ne.s32.totalorder %s25, %s26
    %p40 = scmp.eq.s32.totalorder %s18, 3
    %p41 = por %p39, %p40
    %p43 = scmp.ne.s32.totalorder %s26, %s42
    %p44 = scmp.eq.s32.totalorder %s18, 0
    %p45 = por %p43, %p44
    %s47 = sadd.s32 %s46, 1
    %p50 = scmp.eq.s32.totalorder %s12, 3
    %p51 = scmp.ne.s32.totalorder %s46, %s48
    %p52 = scmp.eq.s32.totalorder %s12, 0
    %p53 = por %p51, %p52
    %p54 = scmp.ne.s32.totalorder %s46, %s48
    %p55 = scmp.eq.s32.totalorder %s17, 3
    %p56 = por %p54, %p55
    %p57 = scmp.ne.s32.totalorder %s48, %s49
    %p58 = scmp.eq.s32.totalorder %s17, 0
    %p59 = por %p57, %p58
    %p60 = scmp.ne.s32.totalorder %s48, %s49
    %p61 = scmp.eq.s32.totalorder %s18, 3
    %p62 = por %p60, %p61
    %p64 = scmp.ne.s32.totalorder %s49, %s63
    %p65 = scmp.eq.s32.totalorder %s18, 0
    %p66 = por %p64, %p65
    %s68 = sadd.s32 %s67, 1
    %p71 = scmp.eq.s32.totalorder %s12, 3
    %p72 = scmp.ne.s32.totalorder %s67, %s69
    %p73 = scmp.eq.s32.totalorder %s12, 0
    %p74 = por %p72, %p73
    %p75 = scmp.ne.s32.totalorder %s67, %s69
    %p76 = scmp.eq.s32.totalorder %s17, 3
    %p77 = por %p75, %p76
    %p78 = scmp.ne.s32.totalorder %s69, %s70
    %p79 = scmp.eq.s32.totalorder %s17, 0
    %p80 = por %p78, %p79
    %p81 = scmp.ne.s32.totalorder %s69, %s70
    %p82 = scmp.eq.s32.totalorder %s18, 3
    %p83 = por %p81, %p82
    %p85 = scmp.ne.s32.totalorder %s70, %s84
    %p86 = scmp.eq.s32.totalorder %s18, 0
    %p87 = por %p85, %p86
    %s89 = sadd.s32 %s88, 1
    %p92 = scmp.eq.s32.totalorder %s12, 3
    %p93 = scmp.ne.s32.totalorder %s88, %s90
    %p94 = scmp.eq.s32.totalorder %s12, 0
    %p95 = por %p93, %p94
    %p96 = scmp.ne.s32.totalorder %s88, %s90
    %p97 = scmp.eq.s32.totalorder %s17, 3
    %p98 = por %p96, %p97
    %p99 = scmp.ne.s32.totalorder %s90, %s91
    %p100 = scmp.eq.s32.totalorder %s17, 0
    %p101 = por %p99, %p100
    %p102 = scmp.ne.s32.totalorder %s90, %s91
    %p103 = scmp.eq.s32.totalorder %s18, 3
    %p104 = por %p102, %p103
    %p106 = scmp.ne.s32.totalorder %s91, %s105
    %p107 = scmp.eq.s32.totalorder %s18, 0
    %p108 = por %p106, %p107
    %s110 = sadd.s32 %s109, 1
    %p113 = scmp.eq.s32.totalorder %s12, 3
    %p114 = scmp.ne.s32.totalorder %s109, %s111
    %p115 = scmp.eq.s32.totalorder %s12, 0
    %p116 = por %p114, %p115
    %p117 = scmp.ne.s32.totalorder %s109, %s111
    %p118 = scmp.eq.s32.totalorder %s17, 3
    %p119 = por %p117, %p118
    %p120 = scmp.ne.s32.totalorder %s111, %s112
    %p121 = scmp.eq.s32.totalorder %s17, 0
    %p122 = por %p120, %p121
    %p123 = scmp.ne.s32.totalorder %s111, %s112
    %p124 = scmp.eq.s32.totalorder %s18, 3
    %p125 = por %p123, %p124
    %p127 = scmp.ne.s32.totalorder %s112, %s126
    %p128 = scmp.eq.s32.totalorder %s18, 0
    %p129 = por %p127, %p128
    %s131 = sadd.s32 %s130, 1
    %p134 = scmp.eq.s32.totalorder %s12, 3
    %p135 = scmp.ne.s32.totalorder %s130, %s132
    %p136 = scmp.eq.s32.totalorder %s12, 0
    %p137 = por %p135, %p136
    %p138 = scmp.ne.s32.totalorder %s130, %s132
    %p139 = scmp.eq.s32.totalorder %s17, 3
    %p140 = por %p138, %p139
    %p141 = scmp.ne.s32.totalorder %s132, %s133
    %p142 = scmp.eq.s32.totalorder %s17, 0
    %p143 = por %p141, %p142
    %p144 = scmp.ne.s32.totalorder %s132, %s133
    %p145 = scmp.eq.s32.totalorder %s18, 3
    %p146 = por %p144, %p145
    %p148 = scmp.ne.s32.totalorder %s133, %s147
    %p149 = scmp.eq.s32.totalorder %s18, 0
    %p150 = por %p148, %p149
    %s151 = ssub.s32 %s12, %s19
    %p152 = scmp.eq.s32.totalorder %s151, 0
    %s154 = sadd.s32 %s153, 1
    %s155 = scalar_select %p152, %s153, %s154
    %p158 = pneg %p152
    %p159 = scmp.eq.s32.totalorder %s12, 3
    %p160 = por %p158, %p159
    %p161 = scmp.ne.s32.totalorder %s153, %s156
    %p162 = scmp.eq.s32.totalorder %s12, 0
    %p163 = por %p161, %p162
    %p164 = scmp.ne.s32.totalorder %s153, %s156
    %p165 = scmp.eq.s32.totalorder %s17, 3
    %p166 = por %p164, %p165
    %p167 = scmp.ne.s32.totalorder %s156, %s157
    %p168 = scmp.eq.s32.totalorder %s17, 0
    %p169 = por %p167, %p168
    %p170 = scmp.ne.s32.totalorder %s156, %s157
    %p171 = scmp.eq.s32.totalorder %s18, 3
    %p172 = por %p170, %p171
    %p174 = scmp.ne.s32.totalorder %s157, %s173
    %p175 = scmp.eq.s32.totalorder %s18, 0
    %p176 = por %p174, %p175
    %p177 = scmp.le.s32.totalorder 1, %s12
    %p178 = scmp.lt.s32.totalorder %s12, 5
    %p179 = pnand %p177, %p178
    %p180 = pneg %p179
    // Predicated region
    $region9: #{feature_extraction_denseasp.5} parent=5 // pred_check
      _
    $region10: #{feature_extraction_denseasp.5} parent=5 // pred_check_branch
      %182 = sbr.rel (%p179) target = $region12
    $region11: #{feature_extraction_denseasp.5} parent=5 // pred_region
      %s183 = ssub.s32 %s12, 1
      // Predicated region
      $region13: #{feature_extraction_denseasp.5} parent=11 // pred_check
        %p184 = pneg %p59
      $region14: #{feature_extraction_denseasp.5} parent=11 // pred_check_branch
        %186 = sbr.rel (%p184) target = $region16
      $region15: #{feature_extraction_denseasp.5} parent=11 // pred_region
        _
      $region16: #{feature_extraction_denseasp.5} parent=11 // pred_fallthru
        _
      // Predicated region
      $region17: #{feature_extraction_denseasp.5} parent=11 // pred_check
        %p187 = pneg %p80
      $region18: #{feature_extraction_denseasp.5} parent=11 // pred_check_branch
        %189 = sbr.rel (%p187) target = $region20
      $region19: #{feature_extraction_denseasp.5} parent=11 // pred_region
        _
      $region20: #{feature_extraction_denseasp.5} parent=11 // pred_fallthru
        _
      // Predicated region
      $region21: #{feature_extraction_denseasp.5} parent=11 // pred_check
        %p190 = pneg %p101
      $region22: #{feature_extraction_denseasp.5} parent=11 // pred_check_branch
        %192 = sbr.rel (%p190) target = $region24
      $region23: #{feature_extraction_denseasp.5} parent=11 // pred_region
        _
      $region24: #{feature_extraction_denseasp.5} parent=11 // pred_fallthru
        _
      // Predicated region
      $region25: #{feature_extraction_denseasp.5} parent=11 // pred_check
        %p193 = pneg %p122
      $region26: #{feature_extraction_denseasp.5} parent=11 // pred_check_branch
        %195 = sbr.rel (%p193) target = $region28
      $region27: #{feature_extraction_denseasp.5} parent=11 // pred_region
        _
      $region28: #{feature_extraction_denseasp.5} parent=11 // pred_fallthru
        _
      // Predicated region
      $region29: #{feature_extraction_denseasp.5} parent=11 // pred_check
        %p196 = pneg %p143
      $region30: #{feature_extraction_denseasp.5} parent=11 // pred_check_branch
        %198 = sbr.rel (%p196) target = $region32
      $region31: #{feature_extraction_denseasp.5} parent=11 // pred_region
        _
      $region32: #{feature_extraction_denseasp.5} parent=11 // pred_fallthru
        _
    $region12: #{feature_extraction_denseasp.5} parent=5 // pred_fallthru
      _
    %p199 = scmp.lt.s32.totalorder %s12, 4
    // Predicated region
    $region33: #{feature_extraction_denseasp.5} parent=5 // pred_check
      %p200 = pneg %p199
    $region34: #{feature_extraction_denseasp.5} parent=5 // pred_check_branch
      %202 = sbr.rel (%p200) target = $region36
    $region35: #{feature_extraction_denseasp.5} parent=5 // pred_region
      // Predicated region
      $region37: #{feature_extraction_denseasp.5} parent=35 // pred_check
        %p203 = pneg %p32
      $region38: #{feature_extraction_denseasp.5} parent=35 // pred_check_branch
        %205 = sbr.rel (%p203) target = $region40
      $region39: #{feature_extraction_denseasp.5} parent=35 // pred_region
        %s206 = smul.u32 16, %s12
        %p207 = scmp.lt.s32.totalorder %s206, 63
        %s208 = scalar_select %p207, %s206, 63
        %s209 = smul.addr %s208, 2
        %s210 = smul.addr %s209, 8
        %s211 = scalar_lea.vmem %s0, %s210
        %s212 = smul.u32 16, %s12
      $region40: #{feature_extraction_denseasp.5} parent=35 // pred_fallthru
        _
    $region36: #{feature_extraction_denseasp.5} parent=5 // pred_fallthru
      _
    %p213 = scmp.le.s32.totalorder 1, %s12
    %p214 = scmp.lt.s32.totalorder %s12, 5
    %p215 = pnand %p213, %p214
    %p216 = pneg %p215
    // Predicated region
    $region41: #{feature_extraction_denseasp.5} parent=5 // pred_check
      _
    $region42: #{feature_extraction_denseasp.5} parent=5 // pred_check_branch
      %218 = sbr.rel (%p215) target = $region44
    $region43: #{feature_extraction_denseasp.5} parent=5 // pred_region
      %s219 = ssub.s32 %s12, 1
      %s220 = smul.u32 16, %s17
      %p221 = scmp.lt.s32.totalorder %s220, 63
      %s222 = scalar_select %p221, %s220, 63
      %s223 = smul.addr %s222, 2
      %s224 = smul.addr %s223, 8
      %s225 = scalar_lea.vmem %s0, %s224
      %p226 = pneg %p38
      %p227 = pneg %p35
      %p228 = pneg %p59
      %p229 = pneg %p56
      %p230 = pneg %p80
      %p231 = pneg %p77
      %p232 = pneg %p101
      %p233 = pneg %p98
      %p234 = pneg %p122
      %p235 = pneg %p119
      %p236 = pneg %p143
      %p237 = pneg %p140
      %p238 = pneg %p169
      %p239 = pneg %p166
      %s240 = smul.u32 16, %s17
      %p241 = scmp.lt.s32.totalorder %s240, 63
      %s242 = scalar_select %p241, %s240, 63
      %s243 = smul.addr %s242, 8
      %s244 = scalar_lea.vmem %s6, %s243
      %s245 = smul.u32 16, %s17
      %p246 = scmp.lt.s32.totalorder %s245, 63
      %s247 = scalar_select %p246, %s245, 63
      %s248 = smul.addr %s247, 2
      %s249 = smul.addr %s248, 8
      %s250 = scalar_lea.vmem %s0, %s249
      %s251 = smul.u32 16, %s17
      %s252 = smul.u32 16, %s17
      %p253 = scmp.lt.s32.totalorder %s252, 63
      %s254 = scalar_select %p253, %s252, 63
      %s255 = smul.addr %s254, 8
      %s256 = scalar_lea.vmem %s6, %s255
      %s257 = smul.u32 16, %s17
      %v258 = vld [vmem:[%s250] sm:$0xff]
      %v259 = vld [vmem:[%s250 + $0x8] sm:$0xff]
      %v260 = vld [vmem:[%s250 + $0x10] sm:$0xff]
      %v261 = vld [vmem:[%s250 + $0x18] sm:$0xff]
      %v262 = vld [vmem:[%s250 + $0x20] sm:$0xff]
      %v263 = vld [vmem:[%s250 + $0x28] sm:$0xff]
      %v264 = vld [vmem:[%s250 + $0x30] sm:$0xff]
      %v265 = vld [vmem:[%s250 + $0x38] sm:$0xff]
      %v266 = vld [vmem:[%s250 + $0x40] sm:$0xff]
      %v267 = vld [vmem:[%s250 + $0x48] sm:$0xff]
      %v268 = vld [vmem:[%s250 + $0x50] sm:$0xff]
      %v269 = vld [vmem:[%s250 + $0x58] sm:$0xff]
      %v270 = vld [vmem:[%s250 + $0x60] sm:$0xff]
      %v271 = vld [vmem:[%s250 + $0x68] sm:$0xff]
      %v272 = vld [vmem:[%s250 + $0x70] sm:$0xff]
      %v273 = vld [vmem:[%s250 + $0x78] sm:$0xff]
      %v274 = vld [vmem:[%s250 + $0x80] sm:$0xff]
      %v275 = vld [vmem:[%s250 + $0x88] sm:$0xff]
      %v276 = vld [vmem:[%s250 + $0x90] sm:$0xff]
      %v277 = vld [vmem:[%s250 + $0x98] sm:$0xff]
      %v278 = vld [vmem:[%s250 + $0xa0] sm:$0xff]
      %v279 = vld [vmem:[%s250 + $0xa8] sm:$0xff]
      %v280 = vld [vmem:[%s250 + $0xb0] sm:$0xff]
      %v281 = vld [vmem:[%s250 + $0xb8] sm:$0xff]
      %v282 = vld [vmem:[%s250 + $0xc0] sm:$0xff]
      %v283 = vld [vmem:[%s250 + $0xc8] sm:$0xff]
      %v284 = vld [vmem:[%s250 + $0xd0] sm:$0xff]
      %v285 = vld [vmem:[%s250 + $0xd8] sm:$0xff]
      %v286 = vld [vmem:[%s250 + $0xe0] sm:$0xff]
      %v287 = vld [vmem:[%s250 + $0xe8] sm:$0xff]
      %v288 = vld [vmem:[%s250 + $0xf0] sm:$0xff]
      %v289 = vld [vmem:[%s250 + $0xf8] sm:$0xff]
      %v290 = vld [vmem:[%s2] sm:$0x3]
      %v292 = vperm.slane %v290, 0
      %v293 = vperm.slane %v290, 1
      %v296 = vmul.f32 %v258, %v292
      %v297 = vmul.f32 %v259, %v293
      %v298 = vmul.f32 %v260, %v292
      %v299 = vmul.f32 %v261, %v293
      %v300 = vmul.f32 %v262, %v292
      %v301 = vmul.f32 %v263, %v293
      %v302 = vmul.f32 %v264, %v292
      %v303 = vmul.f32 %v265, %v293
      %v304 = vmul.f32 %v266, %v292
      %v305 = vmul.f32 %v267, %v293
      %v306 = vmul.f32 %v268, %v292
      %v307 = vmul.f32 %v269, %v293
      %v308 = vmul.f32 %v270, %v292
      %v309 = vmul.f32 %v271, %v293
      %v310 = vmul.f32 %v272, %v292
      %v311 = vmul.f32 %v273, %v293
      %v312 = vmul.f32 %v274, %v292
      %v313 = vmul.f32 %v275, %v293
      %v314 = vmul.f32 %v276, %v292
      %v315 = vmul.f32 %v277, %v293
      %v316 = vmul.f32 %v278, %v292
      %v317 = vmul.f32 %v279, %v293
      %v318 = vmul.f32 %v280, %v292
      %v319 = vmul.f32 %v281, %v293
      %v320 = vmul.f32 %v282, %v292
      %v321 = vmul.f32 %v283, %v293
      %v322 = vmul.f32 %v284, %v292
      %v323 = vmul.f32 %v285, %v293
      %v324 = vmul.f32 %v286, %v292
      %v325 = vmul.f32 %v287, %v293
      %v326 = vmul.f32 %v288, %v292
      %v327 = vmul.f32 %v289, %v293
      %v328 = vld [vmem:[%s3] sm:$0x3]
      %v330 = vperm.slane %v328, 0
      %v331 = vperm.slane %v328, 1
      %v334 = vadd.f32 %v296, %v330
      %v335 = vadd.f32 %v297, %v331
      %v336 = vadd.f32 %v298, %v330
      %v337 = vadd.f32 %v299, %v331
      %v338 = vadd.f32 %v300, %v330
      %v339 = vadd.f32 %v301, %v331
      %v340 = vadd.f32 %v302, %v330
      %v341 = vadd.f32 %v303, %v331
      %v342 = vadd.f32 %v304, %v330
      %v343 = vadd.f32 %v305, %v331
      %v344 = vadd.f32 %v306, %v330
      %v345 = vadd.f32 %v307, %v331
      %v346 = vadd.f32 %v308, %v330
      %v347 = vadd.f32 %v309, %v331
      %v348 = vadd.f32 %v310, %v330
      %v349 = vadd.f32 %v311, %v331
      %v350 = vadd.f32 %v312, %v330
      %v351 = vadd.f32 %v313, %v331
      %v352 = vadd.f32 %v314, %v330
      %v353 = vadd.f32 %v315, %v331
      %v354 = vadd.f32 %v316, %v330
      %v355 = vadd.f32 %v317, %v331
      %v356 = vadd.f32 %v318, %v330
      %v357 = vadd.f32 %v319, %v331
      %v358 = vadd.f32 %v320, %v330
      %v359 = vadd.f32 %v321, %v331
      %v360 = vadd.f32 %v322, %v330
      %v361 = vadd.f32 %v323, %v331
      %v362 = vadd.f32 %v324, %v330
      %v363 = vadd.f32 %v325, %v331
      %v364 = vadd.f32 %v326, %v330
      %v365 = vadd.f32 %v327, %v331
      %v366 = vmax.f32 %v334, 0.0
      %v367 = vmax.f32 %v335, 0.0
      %v368 = vmax.f32 %v336, 0.0
      %v369 = vmax.f32 %v337, 0.0
      %v370 = vmax.f32 %v338, 0.0
      %v371 = vmax.f32 %v339, 0.0
      %v372 = vmax.f32 %v340, 0.0
      %v373 = vmax.f32 %v341, 0.0
      %v374 = vmax.f32 %v342, 0.0
      %v375 = vmax.f32 %v343, 0.0
      %v376 = vmax.f32 %v344, 0.0
      %v377 = vmax.f32 %v345, 0.0
      %v378 = vmax.f32 %v346, 0.0
      %v379 = vmax.f32 %v347, 0.0
      %v380 = vmax.f32 %v348, 0.0
      %v381 = vmax.f32 %v349, 0.0
      %v382 = vmax.f32 %v350, 0.0
      %v383 = vmax.f32 %v351, 0.0
      %v384 = vmax.f32 %v352, 0.0
      %v385 = vmax.f32 %v353, 0.0
      %v386 = vmax.f32 %v354, 0.0
      %v387 = vmax.f32 %v355, 0.0
      %v388 = vmax.f32 %v356, 0.0
      %v389 = vmax.f32 %v357, 0.0
      %v390 = vmax.f32 %v358, 0.0
      %v391 = vmax.f32 %v359, 0.0
      %v392 = vmax.f32 %v360, 0.0
      %v393 = vmax.f32 %v361, 0.0
      %v394 = vmax.f32 %v362, 0.0
      %v395 = vmax.f32 %v363, 0.0
      %v396 = vmax.f32 %v364, 0.0
      %v397 = vmax.f32 %v365, 0.0
      %v398 = vld [vmem:[%s1] sm:$0xff]
      %v399 = vld [vmem:[%s1 + $0x8] sm:$0xff]
      %v400 = vld [vmem:[%s1 + $0x10] sm:$0xff]
      %v401 = vld [vmem:[%s1 + $0x18] sm:$0xff]
      %v402 = vld [vmem:[%s1 + $0x20] sm:$0xff]
      %v403 = vld [vmem:[%s1 + $0x28] sm:$0xff]
      %v404 = vld [vmem:[%s1 + $0x30] sm:$0xff]
      %v405 = vld [vmem:[%s1 + $0x38] sm:$0xff]
      %v406 = vld [vmem:[%s1 + $0x40] sm:$0xff]
      %v407 = vld [vmem:[%s1 + $0x48] sm:$0xff]
      %v408 = vld [vmem:[%s1 + $0x50] sm:$0xff]
      %v409 = vld [vmem:[%s1 + $0x58] sm:$0xff]
      %v410 = vld [vmem:[%s1 + $0x60] sm:$0xff]
      %v411 = vld [vmem:[%s1 + $0x68] sm:$0xff]
      %v412 = vld [vmem:[%s1 + $0x70] sm:$0xff]
      %v413 = vld [vmem:[%s1 + $0x78] sm:$0xff]
      %v414 = vld [vmem:[%s1 + $0x80] sm:$0xff]
      %v415 = vld [vmem:[%s1 + $0x88] sm:$0xff]
      %vm416 = vcmask 130048
      %v418 = vsel %vm416, %v367, 0
      %v421 = vsel %vm416, %v369, 0
      %v424 = vsel %vm416, %v371, 0
      %v427 = vsel %vm416, %v373, 0
      %v430 = vsel %vm416, %v375, 0
      %v433 = vsel %vm416, %v377, 0
      %v436 = vsel %vm416, %v379, 0
      %v439 = vsel %vm416, %v381, 0
      %v442 = vsel %vm416, %v383, 0
      %v445 = vsel %vm416, %v385, 0
      %v448 = vsel %vm416, %v387, 0
      %v451 = vsel %vm416, %v389, 0
      %v454 = vsel %vm416, %v391, 0
      %v457 = vsel %vm416, %v393, 0
      %v460 = vsel %vm416, %v395, 0
      %v463 = vsel %vm416, %v397, 0
      %465 = vmatpush.msra.mxu0 %v413
      %466 = vmatpush.msra.mxu0 %v412
      %467 = vmatpush.msra.mxu0 %v411
      %468 = vmatpush.msra.mxu0 %v410
      %469 = vmatpush.msra.mxu0 %v409
      %470 = vmatpush.msra.mxu0 %v408
      %471 = vmatpush.msra.mxu0 %v407
      %472 = vmatpush.msra.mxu0 %v406
      %473 = vmatpush.msra.mxu0 %v405
      %474 = vmatpush.msra.mxu0 %v404
      %475 = vmatpush.msra.mxu0 %v403
      %476 = vmatpush.msra.mxu0 %v402
      %477 = vmatpush.msra.mxu0 %v401
      %478 = vmatpush.msra.mxu0 %v400
      %479 = vmatpush.msra.mxu0 %v399
      %480 = vmatpush.msra.mxu0 %v398
      %481 = vmatmul.f32.gmra.mxu0 %v366
      %v482 = vpop.f32.mrf.mxu0
      %v483 = vadd.f32 0.0, %v482
      %484 = vmatmul.f32.gmra.mxu0 %v368
      %v485 = vpop.f32.mrf.mxu0
      %v486 = vadd.f32 0.0, %v485
      %487 = vmatmul.f32.gmra.mxu0 %v370
      %v488 = vpop.f32.mrf.mxu0
      %v489 = vadd.f32 0.0, %v488
      %490 = vmatmul.f32.gmra.mxu0 %v372
      %v491 = vpop.f32.mrf.mxu0
      %v492 = vadd.f32 0.0, %v491
      %493 = vmatmul.f32.gmra.mxu0 %v374
      %v494 = vpop.f32.mrf.mxu0
      %v495 = vadd.f32 0.0, %v494
      %496 = vmatmul.f32.gmra.mxu0 %v376
      %v497 = vpop.f32.mrf.mxu0
      %v498 = vadd.f32 0.0, %v497
      %499 = vmatmul.f32.gmra.mxu0 %v378
      %v500 = vpop.f32.mrf.mxu0
      %v501 = vadd.f32 0.0, %v500
      %502 = vmatmul.f32.gmra.mxu0 %v380
      %v503 = vpop.f32.mrf.mxu0
      %v504 = vadd.f32 0.0, %v503
      %505 = vmatmul.f32.gmra.mxu0 %v382
      %v506 = vpop.f32.mrf.mxu0
      %v507 = vadd.f32 0.0, %v506
      %508 = vmatmul.f32.gmra.mxu0 %v384
      %v509 = vpop.f32.mrf.mxu0
      %v510 = vadd.f32 0.0, %v509
      %511 = vmatmul.f32.gmra.mxu0 %v386
      %v512 = vpop.f32.mrf.mxu0
      %v513 = vadd.f32 0.0, %v512
      %514 = vmatmul.f32.gmra.mxu0 %v388
      %v515 = vpop.f32.mrf.mxu0
      %v516 = vadd.f32 0.0, %v515
      %517 = vmatmul.f32.gmra.mxu0 %v390
      %v518 = vpop.f32.mrf.mxu0
      %v519 = vadd.f32 0.0, %v518
      %520 = vmatmul.f32.gmra.mxu0 %v392
      %v521 = vpop.f32.mrf.mxu0
      %v522 = vadd.f32 0.0, %v521
      %523 = vmatmul.f32.gmra.mxu0 %v394
      %v524 = vpop.f32.mrf.mxu0
      %v525 = vadd.f32 0.0, %v524
      %526 = vmatmul.f32.gmra.mxu0 %v396
      %v527 = vpop.f32.mrf.mxu0
      %v528 = vadd.f32 0.0, %v527
      %529 = vdwg.mxu0
      %530 = vmatpush.msra.mxu0 0.0
      %531 = vmatpush.msra.mxu0 0.0
      %532 = vmatpush.msra.mxu0 0.0
      %533 = vmatpush.msra.mxu0 0.0
      %534 = vmatpush.msra.mxu0 0.0
      %535 = vmatpush.msra.mxu0 0.0
      %536 = vmatpush.msra.mxu0 0.0
      %537 = vmatpush.msra.mxu0 0.0
      %538 = vmatpush.msra.mxu0 0.0
      %539 = vmatpush.msra.mxu0 0.0
      %540 = vmatpush.msra.mxu0 0.0
      %541 = vmatpush.msra.mxu0 0.0
      %542 = vmatpush.msra.mxu0 0.0
      %543 = vmatpush.msra.mxu0 0.0
      %544 = vmatpush.msra.mxu0 %v415
      %545 = vmatpush.msra.mxu0 %v414
      %546 = vmatmul.f32.gmra.mxu0 %v418
      %v547 = vpop.f32.mrf.mxu0
      %v548 = vadd.f32 %v483, %v547
      %549 = vmatmul.f32.gmra.mxu0 %v421
      %v550 = vpop.f32.mrf.mxu0
      %v551 = vadd.f32 %v486, %v550
      %552 = vmatmul.f32.gmra.mxu0 %v424
      %v553 = vpop.f32.mrf.mxu0
      %v554 = vadd.f32 %v489, %v553
      %555 = vmatmul.f32.gmra.mxu0 %v427
      %v556 = vpop.f32.mrf.mxu0
      %v557 = vadd.f32 %v492, %v556
      %558 = vmatmul.f32.gmra.mxu0 %v430
      %v559 = vpop.f32.mrf.mxu0
      %v560 = vadd.f32 %v495, %v559
      %561 = vmatmul.f32.gmra.mxu0 %v433
      %v562 = vpop.f32.mrf.mxu0
      %v563 = vadd.f32 %v498, %v562
      %564 = vmatmul.f32.gmra.mxu0 %v436
      %v565 = vpop.f32.mrf.mxu0
      %v566 = vadd.f32 %v501, %v565
      %567 = vmatmul.f32.gmra.mxu0 %v439
      %v568 = vpop.f32.mrf.mxu0
      %v569 = vadd.f32 %v504, %v568
      %570 = vmatmul.f32.gmra.mxu0 %v442
      %v571 = vpop.f32.mrf.mxu0
      %v572 = vadd.f32 %v507, %v571
      %573 = vmatmul.f32.gmra.mxu0 %v445
      %v574 = vpop.f32.mrf.mxu0
      %v575 = vadd.f32 %v510, %v574
      %576 = vmatmul.f32.gmra.mxu0 %v448
      %v577 = vpop.f32.mrf.mxu0
      %v578 = vadd.f32 %v513, %v577
      %579 = vmatmul.f32.gmra.mxu0 %v451
      %v580 = vpop.f32.mrf.mxu0
      %v581 = vadd.f32 %v516, %v580
      %582 = vmatmul.f32.gmra.mxu0 %v454
      %v583 = vpop.f32.mrf.mxu0
      %v584 = vadd.f32 %v519, %v583
      %585 = vmatmul.f32.gmra.mxu0 %v457
      %v586 = vpop.f32.mrf.mxu0
      %v587 = vadd.f32 %v522, %v586
      %588 = vmatmul.f32.gmra.mxu0 %v460
      %v589 = vpop.f32.mrf.mxu0
      %v590 = vadd.f32 %v525, %v589
      %591 = vmatmul.f32.gmra.mxu0 %v463
      %v592 = vpop.f32.mrf.mxu0
      %v593 = vadd.f32 %v528, %v592
      %594 = vdwg.mxu0
      %v595 = vld [vmem:[%s4] sm:$0x1]
      %v597 = vperm.slane %v595, 0
      %v599 = vmul.f32 %v548, %v597
      %v600 = vmul.f32 %v551, %v597
      %v601 = vmul.f32 %v554, %v597
      %v602 = vmul.f32 %v557, %v597
      %v603 = vmul.f32 %v560, %v597
      %v604 = vmul.f32 %v563, %v597
      %v605 = vmul.f32 %v566, %v597
      %v606 = vmul.f32 %v569, %v597
      %v607 = vmul.f32 %v572, %v597
      %v608 = vmul.f32 %v575, %v597
      %v609 = vmul.f32 %v578, %v597
      %v610 = vmul.f32 %v581, %v597
      %v611 = vmul.f32 %v584, %v597
      %v612 = vmul.f32 %v587, %v597
      %v613 = vmul.f32 %v590, %v597
      %v614 = vmul.f32 %v593, %v597
      %v615 = vld [vmem:[%s5] sm:$0x1]
      %v617 = vperm.slane %v615, 0
      %v619 = vadd.f32 %v599, %v617
      %v620 = vadd.f32 %v600, %v617
      %v621 = vadd.f32 %v601, %v617
      %v622 = vadd.f32 %v602, %v617
      %v623 = vadd.f32 %v603, %v617
      %v624 = vadd.f32 %v604, %v617
      %v625 = vadd.f32 %v605, %v617
      %v626 = vadd.f32 %v606, %v617
      %v627 = vadd.f32 %v607, %v617
      %v628 = vadd.f32 %v608, %v617
      %v629 = vadd.f32 %v609, %v617
      %v630 = vadd.f32 %v610, %v617
      %v631 = vadd.f32 %v611, %v617
      %v632 = vadd.f32 %v612, %v617
      %v633 = vadd.f32 %v613, %v617
      %v634 = vadd.f32 %v614, %v617
      %635 = vst.msk [vmem:[%s256] sm:$0xff] %vm416, %v619
      %636 = vst.msk [vmem:[%s256 + $0x8] sm:$0xff] %vm416, %v620
      %637 = vst.msk [vmem:[%s256 + $0x10] sm:$0xff] %vm416, %v621
      %638 = vst.msk [vmem:[%s256 + $0x18] sm:$0xff] %vm416, %v622
      %639 = vst.msk [vmem:[%s256 + $0x20] sm:$0xff] %vm416, %v623
      %640 = vst.msk [vmem:[%s256 + $0x28] sm:$0xff] %vm416, %v624
      %641 = vst.msk [vmem:[%s256 + $0x30] sm:$0xff] %vm416, %v625
      %642 = vst.msk [vmem:[%s256 + $0x38] sm:$0xff] %vm416, %v626
      %643 = vst.msk [vmem:[%s256 + $0x40] sm:$0xff] %vm416, %v627
      %644 = vst.msk [vmem:[%s256 + $0x48] sm:$0xff] %vm416, %v628
      %645 = vst.msk [vmem:[%s256 + $0x50] sm:$0xff] %vm416, %v629
      %646 = vst.msk [vmem:[%s256 + $0x58] sm:$0xff] %vm416, %v630
      %647 = vst.msk [vmem:[%s256 + $0x60] sm:$0xff] %vm416, %v631
      %648 = vst.msk [vmem:[%s256 + $0x68] sm:$0xff] %vm416, %v632
      %649 = vst.msk [vmem:[%s256 + $0x70] sm:$0xff] %vm416, %v633
      %650 = vst.msk [vmem:[%s256 + $0x78] sm:$0xff] %vm416, %v634
      %667 = vrot.lane.b32.xlu0 %v258, 80
      %v668 = vpop.permute.xlu0 %667
      %669 = vrot.lane.b32.xlu0 %v260, 80
      %v670 = vpop.permute.xlu0 %669
      %671 = vrot.lane.b32.xlu0 %v262, 80
      %v672 = vpop.permute.xlu0 %671
      %673 = vrot.lane.b32.xlu0 %v264, 80
      %v674 = vpop.permute.xlu0 %673
      %675 = vrot.lane.b32.xlu0 %v266, 80
      %v676 = vpop.permute.xlu0 %675
      %677 = vrot.lane.b32.xlu0 %v268, 80
      %v678 = vpop.permute.xlu0 %677
      %679 = vrot.lane.b32.xlu0 %v270, 80
      %v680 = vpop.permute.xlu0 %679
      %681 = vrot.lane.b32.xlu0 %v272, 80
      %v682 = vpop.permute.xlu0 %681
      %683 = vrot.lane.b32.xlu0 %v274, 80
      %v684 = vpop.permute.xlu0 %683
      %685 = vrot.lane.b32.xlu0 %v276, 80
      %v686 = vpop.permute.xlu0 %685
      %687 = vrot.lane.b32.xlu0 %v278, 80
      %v688 = vpop.permute.xlu0 %687
      %689 = vrot.lane.b32.xlu0 %v280, 80
      %v690 = vpop.permute.xlu0 %689
      %691 = vrot.lane.b32.xlu0 %v282, 80
      %v692 = vpop.permute.xlu0 %691
      %693 = vrot.lane.b32.xlu0 %v284, 80
      %v694 = vpop.permute.xlu0 %693
      %695 = vrot.lane.b32.xlu0 %v286, 80
      %v696 = vpop.permute.xlu0 %695
      %697 = vrot.lane.b32.xlu0 %v288, 80
      %v698 = vpop.permute.xlu0 %697
      %vm715 = vcmask 261248
      %716 = vst.msk [vmem:[%s256] sm:$0xff] %vm715, %v668
      %717 = vst.msk [vmem:[%s256 + $0x8] sm:$0xff] %vm715, %v670
      %718 = vst.msk [vmem:[%s256 + $0x10] sm:$0xff] %vm715, %v672
      %719 = vst.msk [vmem:[%s256 + $0x18] sm:$0xff] %vm715, %v674
      %720 = vst.msk [vmem:[%s256 + $0x20] sm:$0xff] %vm715, %v676
      %721 = vst.msk [vmem:[%s256 + $0x28] sm:$0xff] %vm715, %v678
      %722 = vst.msk [vmem:[%s256 + $0x30] sm:$0xff] %vm715, %v680
      %723 = vst.msk [vmem:[%s256 + $0x38] sm:$0xff] %vm715, %v682
      %724 = vst.msk [vmem:[%s256 + $0x40] sm:$0xff] %vm715, %v684
      %725 = vst.msk [vmem:[%s256 + $0x48] sm:$0xff] %vm715, %v686
      %726 = vst.msk [vmem:[%s256 + $0x50] sm:$0xff] %vm715, %v688
      %727 = vst.msk [vmem:[%s256 + $0x58] sm:$0xff] %vm715, %v690
      %728 = vst.msk [vmem:[%s256 + $0x60] sm:$0xff] %vm715, %v692
      %729 = vst.msk [vmem:[%s256 + $0x68] sm:$0xff] %vm715, %v694
      %730 = vst.msk [vmem:[%s256 + $0x70] sm:$0xff] %vm715, %v696
      %731 = vst.msk [vmem:[%s256 + $0x78] sm:$0xff] %vm715, %v698
      %s732 = smul.u32 16, %s17
      %p733 = scmp.lt.s32.totalorder %s732, 63
      %s734 = scalar_select %p733, %s732, 63
      %s735 = smul.addr %s734, 8
      %s736 = scalar_lea.vmem %s6, %s735
      // Predicated region
      $region45: #{feature_extraction_denseasp.5} parent=43 // pred_check
        %p737 = pneg %p166
      $region46: #{feature_extraction_denseasp.5} parent=43 // pred_check_branch
        %739 = sbr.rel (%p737) target = $region48
      $region47: #{feature_extraction_denseasp.5} parent=43 // pred_region
        %s740 = smul.u32 16, %s17
      $region48: #{feature_extraction_denseasp.5} parent=43 // pred_fallthru
        _
    $region44: #{feature_extraction_denseasp.5} parent=5 // pred_fallthru
      _
    %p741 = scmp.le.s32.totalorder 2, %s12
    // Predicated region
    $region49: #{feature_extraction_denseasp.5} parent=5 // pred_check
      %p742 = pneg %p741
    $region50: #{feature_extraction_denseasp.5} parent=5 // pred_check_branch
      %744 = sbr.rel (%p742) target = $region52
    $region51: #{feature_extraction_denseasp.5} parent=5 // pred_region
      %s745 = ssub.s32 %s12, 2
      // Predicated region
      $region53: #{feature_extraction_denseasp.5} parent=51 // pred_check
        %p746 = pneg %p172
      $region54: #{feature_extraction_denseasp.5} parent=51 // pred_check_branch
        %748 = sbr.rel (%p746) target = $region56
      $region55: #{feature_extraction_denseasp.5} parent=51 // pred_region
        %s749 = smul.u32 16, %s18
        %p750 = scmp.lt.s32.totalorder %s749, 63
        %s751 = scalar_select %p750, %s749, 63
        %s752 = smul.addr %s751, 8
        %s753 = scalar_lea.vmem %s6, %s752
      $region56: #{feature_extraction_denseasp.5} parent=51 // pred_fallthru
        _
    $region52: #{feature_extraction_denseasp.5} parent=5 // pred_fallthru
      _
  $region6: #{feature_extraction_denseasp.5} parent=0 // loop_footer
    %s16 = sadd.s32 1, %s12
  $region7: #{feature_extraction_denseasp.5} parent=0 // loop_footer_branch
    %11 = sbr.rel target = $region3
  $region8: #{feature_extraction_denseasp.5} parent=0 // loop_exit
    _

// kernel: tile.43
$region0: #{tile.43}
  #allocation0 [shape = 's32[1]{0}', space=sflag, size = 0x4, scoped, tag = 'scoped memory for tile.43']
  %s0 = inlined_call_operand.vmem [shape: f32[32], index: 0, kind: input, shape index: {}]
  %s1 = inlined_call_operand.vmem [shape: f32[9,32], index: 1, kind: output, shape index: {}]
  // Predicated region
  $region2: #{tile.43} parent=0 // pred_check
    _
  $region3: #{tile.43} parent=0 // pred_check_branch
    %3 = sbr.rel (0) target = $region5
  $region4: #{tile.43} parent=0 // pred_region
    _
  $region5: #{tile.43} parent=0 // pred_fallthru
    _
  %v4 = vld [vmem:[%s0] ss:$0 sm:$0xff]
  %5 = vst [vmem:[%s1] sm:$0xff] %v4
  %s6 = scalar_lea.vmem %s1, 8
  %7 = vst [vmem:[%s6] sm:$0xff] %v4

// kernel: tile.44
$region0: #{tile.44}
  %s0 = inlined_call_operand.vmem [shape: f32[9,32], index: 0, kind: input, shape index: {}]
  %s1 = inlined_call_operand.vmem [shape: f32[1,288], index: 1, kind: output, shape index: {}]
  $region1: #{tile.44} parent=0
    #allocation0 [shape = 'u8[12288]{0}', space=vmem, size = 0x3000, scoped, tag = 'scoped mem for output reshape']
    %v2 = vld [vmem:[%s0] ss:$4 sm:$0x7]
    %vm3 = vcmask 261120
    %4 = vst.msk [vmem:[#allocation0] ss:$8 sm:$0x7] %vm3, %v2
    %s5 = scalar_lea.vmem %s0, 3
    %s6 = smov 3
    %v7 = vld [vmem:[%s5] ss:$4 sm:%s6]
    %8 = vrot.lane.b32.xlu0 %v7, 96
    %v9 = vpop.permute.xlu0 %8
    %vm10 = vcmask 1048320
    %11 = vst.msk [vmem:[#allocation0] ss:$8 sm:$0x3] %vm10, %v9
    %s12 = scalar_lea.vmem %s0, 2
    %s13 = smov 3
    %v14 = vld [vmem:[%s12] ss:$4 sm:%s13]
    %15 = vrot.lane.b32.xlu0 %v14, 64
    %v16 = vpop.permute.xlu0 %15
    %vm17 = vcmask 785920
    %18 = vst.msk [vmem:[#allocation0] ss:$8 sm:$0x3] %vm17, %v16
    %s19 = scalar_lea.vmem %s0, 1
    %s20 = smov 3
    %v21 = vld [vmem:[%s19] ss:$4 sm:%s20]
    %22 = vrot.lane.b32.xlu0 %v21, 32
    %v23 = vpop.permute.xlu0 %22
    %vm24 = vcmask 523520
    %25 = vst.msk [vmem:[#allocation0] ss:$8 sm:$0x3] %vm24, %v23
    %s27 = ssub.s32 2, 1
    %v28 = vld [vmem:[#allocation0] sm:%s27]
    %s30 = ssub.s32 2, 1
    %31 = vst [vmem:[%s1] sm:%s30] %v28
    %s32 = scalar_lea.vmem [#allocation0], 8
    %v33 = vld [vmem:[%s32] sm:%s27]
    %s35 = ssub.s32 2, 1
    %s36 = scalar_lea.vmem %s1, 1
    %37 = vst [vmem:[%s36] sm:%s35] %v33
    %s38 = scalar_lea.vmem [#allocation0], 16
    %v39 = vld [vmem:[%s38] sm:%s27]
    %s41 = ssub.s32 2, 1
    %s42 = scalar_lea.vmem %s1, 2
    %43 = vst [vmem:[%s42] sm:%s41] %v39

// kernel: feature_extraction_denseasp.6
$region0: #{feature_extraction_denseasp.6}
  #allocation0 [shape = 'u32[]', space=smem, size = 0x4, offset = 0x4, fixed_abs, tag = 'smem constant byte address 0x4 - core index']
  #allocation1 [shape = 'u32[72,128]{1,0:T(1,128)}', space=vmem, size = 0x9000, scoped, tag = 'internal scratch']
  %s0 = inlined_call_operand.vmem [shape: f32[512,288], index: 0, kind: input, shape index: {}]
  %s1 = inlined_call_operand.vmem [shape: f32[288,16], index: 1, kind: input, shape index: {}]
  %s2 = inlined_call_operand.vmem [shape: f32[1,288], index: 2, kind: input, shape index: {}]
  %s3 = inlined_call_operand.vmem [shape: f32[1,288], index: 3, kind: input, shape index: {}]
  %s4 = inlined_call_operand.vmem [shape: f32[1,16], index: 4, kind: input, shape index: {}]
  %s5 = inlined_call_operand.vmem [shape: f32[1,16], index: 5, kind: input, shape index: {}]
  %s6 = inlined_call_operand.vmem [shape: f32[512,48], index: 6, kind: output, shape index: {}]
  %s7 = sld [smem:[#allocation0]]
  $region57: #{feature_extraction_denseasp.6} parent=0
    _
  %s9 = ssub.s32 1, %s7
  %s10 = scalar_select 0, %s9, %s7
  loop: start=0, step=1, limit=6
  $region2: #{feature_extraction_denseasp.6} parent=0 // loop_pre_header
    _
  $region3: #{feature_extraction_denseasp.6} parent=0 // loop_header
    %s12 = sphi 0, %s16
    %p13 = scmp.ge.s32.totalorder %s12, 6
    %s22 = sphi 0, %s24
    %s25 = sphi 0, %s22
    %s26 = sphi 0, %s25
    %s42 = sphi 0, %s26
    %s46 = sphi 0, %s46
    %s48 = sphi 0, %s46
    %s49 = sphi 0, %s48
    %s63 = sphi 0, %s49
    %s67 = sphi 0, %s67
    %s69 = sphi 0, %s67
    %s70 = sphi 0, %s69
    %s84 = sphi 0, %s70
    %s88 = sphi 0, %s88
    %s90 = sphi 0, %s88
    %s91 = sphi 0, %s90
    %s105 = sphi 0, %s91
    %s109 = sphi 0, %s109
    %s111 = sphi 0, %s109
    %s112 = sphi 0, %s111
    %s126 = sphi 0, %s112
    %s130 = sphi 0, %s130
    %s132 = sphi 0, %s130
    %s133 = sphi 0, %s132
    %s147 = sphi 0, %s133
    %s153 = sphi 0, %s155
    %s156 = sphi 0, %s153
    %s157 = sphi 0, %s156
    %s173 = sphi 0, %s157
  $region4: #{feature_extraction_denseasp.6} parent=0 // loop_header_branch
    %15 = sbr.rel (%p13) target = $region8
  $region5: #{feature_extraction_denseasp.6} parent=0 // loop_body
    %s17 = ssub.s32 %s12, 1
    %s18 = ssub.s32 %s12, 2
    %s19 = sadd.s32 %s12, 1
    %s20 = ssub.s32 %s12, %s19
    %p21 = scmp.eq.s32.totalorder %s20, 0
    %s23 = sadd.s32 %s22, 1
    %s24 = scalar_select %p21, %s22, %s23
    %p27 = pneg %p21
    %p28 = scmp.eq.s32.totalorder %s12, 3
    %p29 = por %p27, %p28
    %p30 = scmp.ne.s32.totalorder %s22, %s25
    %p31 = scmp.eq.s32.totalorder %s12, 0
    %p32 = por %p30, %p31
    %p33 = scmp.ne.s32.totalorder %s22, %s25
    %p34 = scmp.eq.s32.totalorder %s17, 3
    %p35 = por %p33, %p34
    %p36 = scmp.ne.s32.totalorder %s25, %s26
    %p37 = scmp.eq.s32.totalorder %s17, 0
    %p38 = por %p36, %p37
    %p39 = scmp.ne.s32.totalorder %s25, %s26
    %p40 = scmp.eq.s32.totalorder %s18, 3
    %p41 = por %p39, %p40
    %p43 = scmp.ne.s32.totalorder %s26, %s42
    %p44 = scmp.eq.s32.totalorder %s18, 0
    %p45 = por %p43, %p44
    %s47 = sadd.s32 %s46, 1
    %p50 = scmp.eq.s32.totalorder %s12, 3
    %p51 = scmp.ne.s32.totalorder %s46, %s48
    %p52 = scmp.eq.s32.totalorder %s12, 0
    %p53 = por %p51, %p52
    %p54 = scmp.ne.s32.totalorder %s46, %s48
    %p55 = scmp.eq.s32.totalorder %s17, 3
    %p56 = por %p54, %p55
    %p57 = scmp.ne.s32.totalorder %s48, %s49
    %p58 = scmp.eq.s32.totalorder %s17, 0
    %p59 = por %p57, %p58
    %p60 = scmp.ne.s32.totalorder %s48, %s49
    %p61 = scmp.eq.s32.totalorder %s18, 3
    %p62 = por %p60, %p61
    %p64 = scmp.ne.s32.totalorder %s49, %s63
    %p65 = scmp.eq.s32.totalorder %s18, 0
    %p66 = por %p64, %p65
    %s68 = sadd.s32 %s67, 1
    %p71 = scmp.eq.s32.totalorder %s12, 3
    %p72 = scmp.ne.s32.totalorder %s67, %s69
    %p73 = scmp.eq.s32.totalorder %s12, 0
    %p74 = por %p72, %p73
    %p75 = scmp.ne.s32.totalorder %s67, %s69
    %p76 = scmp.eq.s32.totalorder %s17, 3
    %p77 = por %p75, %p76
    %p78 = scmp.ne.s32.totalorder %s69, %s70
    %p79 = scmp.eq.s32.totalorder %s17, 0
    %p80 = por %p78, %p79
    %p81 = scmp.ne.s32.totalorder %s69, %s70
    %p82 = scmp.eq.s32.totalorder %s18, 3
    %p83 = por %p81, %p82
    %p85 = scmp.ne.s32.totalorder %s70, %s84
    %p86 = scmp.eq.s32.totalorder %s18, 0
    %p87 = por %p85, %p86
    %s89 = sadd.s32 %s88, 1
    %p92 = scmp.eq.s32.totalorder %s12, 3
    %p93 = scmp.ne.s32.totalorder %s88, %s90
    %p94 = scmp.eq.s32.totalorder %s12, 0
    %p95 = por %p93, %p94
    %p96 = scmp.ne.s32.totalorder %s88, %s90
    %p97 = scmp.eq.s32.totalorder %s17, 3
    %p98 = por %p96, %p97
    %p99 = scmp.ne.s32.totalorder %s90, %s91
    %p100 = scmp.eq.s32.totalorder %s17, 0
    %p101 = por %p99, %p100
    %p102 = scmp.ne.s32.totalorder %s90, %s91
    %p103 = scmp.eq.s32.totalorder %s18, 3
    %p104 = por %p102, %p103
    %p106 = scmp.ne.s32.totalorder %s91, %s105
    %p107 = scmp.eq.s32.totalorder %s18, 0
    %p108 = por %p106, %p107
    %s110 = sadd.s32 %s109, 1
    %p113 = scmp.eq.s32.totalorder %s12, 3
    %p114 = scmp.ne.s32.totalorder %s109, %s111
    %p115 = scmp.eq.s32.totalorder %s12, 0
    %p116 = por %p114, %p115
    %p117 = scmp.ne.s32.totalorder %s109, %s111
    %p118 = scmp.eq.s32.totalorder %s17, 3
    %p119 = por %p117, %p118
    %p120 = scmp.ne.s32.totalorder %s111, %s112
    %p121 = scmp.eq.s32.totalorder %s17, 0
    %p122 = por %p120, %p121
    %p123 = scmp.ne.s32.totalorder %s111, %s112
    %p124 = scmp.eq.s32.totalorder %s18, 3
    %p125 = por %p123, %p124
    %p127 = scmp.ne.s32.totalorder %s112, %s126
    %p128 = scmp.eq.s32.totalorder %s18, 0
    %p129 = por %p127, %p128
    %s131 = sadd.s32 %s130, 1
    %p134 = scmp.eq.s32.totalorder %s12, 3
    %p135 = scmp.ne.s32.totalorder %s130, %s132
    %p136 = scmp.eq.s32.totalorder %s12, 0
    %p137 = por %p135, %p136
    %p138 = scmp.ne.s32.totalorder %s130, %s132
    %p139 = scmp.eq.s32.totalorder %s17, 3
    %p140 = por %p138, %p139
    %p141 = scmp.ne.s32.totalorder %s132, %s133
    %p142 = scmp.eq.s32.totalorder %s17, 0
    %p143 = por %p141, %p142
    %p144 = scmp.ne.s32.totalorder %s132, %s133
    %p145 = scmp.eq.s32.totalorder %s18, 3
    %p146 = por %p144, %p145
    %p148 = scmp.ne.s32.totalorder %s133, %s147
    %p149 = scmp.eq.s32.totalorder %s18, 0
    %p150 = por %p148, %p149
    %s151 = ssub.s32 %s12, %s19
    %p152 = scmp.eq.s32.totalorder %s151, 0
    %s154 = sadd.s32 %s153, 1
    %s155 = scalar_select %p152, %s153, %s154
    %p158 = pneg %p152
    %p159 = scmp.eq.s32.totalorder %s12, 3
    %p160 = por %p158, %p159
    %p161 = scmp.ne.s32.totalorder %s153, %s156
    %p162 = scmp.eq.s32.totalorder %s12, 0
    %p163 = por %p161, %p162
    %p164 = scmp.ne.s32.totalorder %s153, %s156
    %p165 = scmp.eq.s32.totalorder %s17, 3
    %p166 = por %p164, %p165
    %p167 = scmp.ne.s32.totalorder %s156, %s157
    %p168 = scmp.eq.s32.totalorder %s17, 0
    %p169 = por %p167, %p168
    %p170 = scmp.ne.s32.totalorder %s156, %s157
    %p171 = scmp.eq.s32.totalorder %s18, 3
    %p172 = por %p170, %p171
    %p174 = scmp.ne.s32.totalorder %s157, %s173
    %p175 = scmp.eq.s32.totalorder %s18, 0
    %p176 = por %p174, %p175
    %p177 = scmp.le.s32.totalorder 1, %s12
    %p178 = scmp.lt.s32.totalorder %s12, 5
    %p179 = pnand %p177, %p178
    %p180 = pneg %p179
    // Predicated region
    $region9: #{feature_extraction_denseasp.6} parent=5 // pred_check
      _
    $region10: #{feature_extraction_denseasp.6} parent=5 // pred_check_branch
      %182 = sbr.rel (%p179) target = $region12
    $region11: #{feature_extraction_denseasp.6} parent=5 // pred_region
      %s183 = ssub.s32 %s12, 1
      // Predicated region
      $region13: #{feature_extraction_denseasp.6} parent=11 // pred_check
        %p184 = pneg %p59
      $region14: #{feature_extraction_denseasp.6} parent=11 // pred_check_branch
        %186 = sbr.rel (%p184) target = $region16
      $region15: #{feature_extraction_denseasp.6} parent=11 // pred_region
        _
      $region16: #{feature_extraction_denseasp.6} parent=11 // pred_fallthru
        _
      // Predicated region
      $region17: #{feature_extraction_denseasp.6} parent=11 // pred_check
        %p187 = pneg %p80
      $region18: #{feature_extraction_denseasp.6} parent=11 // pred_check_branch
        %189 = sbr.rel (%p187) target = $region20
      $region19: #{feature_extraction_denseasp.6} parent=11 // pred_region
        _
      $region20: #{feature_extraction_denseasp.6} parent=11 // pred_fallthru
        _
      // Predicated region
      $region21: #{feature_extraction_denseasp.6} parent=11 // pred_check
        %p190 = pneg %p101
      $region22: #{feature_extraction_denseasp.6} parent=11 // pred_check_branch
        %192 = sbr.rel (%p190) target = $region24
      $region23: #{feature_extraction_denseasp.6} parent=11 // pred_region
        _
      $region24: #{feature_extraction_denseasp.6} parent=11 // pred_fallthru
        _
      // Predicated region
      $region25: #{feature_extraction_denseasp.6} parent=11 // pred_check
        %p193 = pneg %p122
      $region26: #{feature_extraction_denseasp.6} parent=11 // pred_check_branch
        %195 = sbr.rel (%p193) target = $region28
      $region27: #{feature_extraction_denseasp.6} parent=11 // pred_region
        _
      $region28: #{feature_extraction_denseasp.6} parent=11 // pred_fallthru
        _
      // Predicated region
      $region29: #{feature_extraction_denseasp.6} parent=11 // pred_check
        %p196 = pneg %p143
      $region30: #{feature_extraction_denseasp.6} parent=11 // pred_check_branch
        %198 = sbr.rel (%p196) target = $region32
      $region31: #{feature_extraction_denseasp.6} parent=11 // pred_region
        _
      $region32: #{feature_extraction_denseasp.6} parent=11 // pred_fallthru
        _
    $region12: #{feature_extraction_denseasp.6} parent=5 // pred_fallthru
      _
    %p199 = scmp.lt.s32.totalorder %s12, 4
    // Predicated region
    $region33: #{feature_extraction_denseasp.6} parent=5 // pred_check
      %p200 = pneg %p199
    $region34: #{feature_extraction_denseasp.6} parent=5 // pred_check_branch
      %202 = sbr.rel (%p200) target = $region36
    $region35: #{feature_extraction_denseasp.6} parent=5 // pred_region
      // Predicated region
      $region37: #{feature_extraction_denseasp.6} parent=35 // pred_check
        %p203 = pneg %p32
      $region38: #{feature_extraction_denseasp.6} parent=35 // pred_check_branch
        %205 = sbr.rel (%p203) target = $region40
      $region39: #{feature_extraction_denseasp.6} parent=35 // pred_region
        %s206 = smul.u32 16, %s12
        %p207 = scmp.lt.s32.totalorder %s206, 63
        %s208 = scalar_select %p207, %s206, 63
        %s209 = smul.addr %s208, 3
        %s210 = smul.addr %s209, 8
        %s211 = scalar_lea.vmem %s0, %s210
        %s212 = smul.u32 16, %s12
      $region40: #{feature_extraction_denseasp.6} parent=35 // pred_fallthru
        _
    $region36: #{feature_extraction_denseasp.6} parent=5 // pred_fallthru
      _
    %p213 = scmp.le.s32.totalorder 1, %s12
    %p214 = scmp.lt.s32.totalorder %s12, 5
    %p215 = pnand %p213, %p214
    %p216 = pneg %p215
    // Predicated region
    $region41: #{feature_extraction_denseasp.6} parent=5 // pred_check
      _
    $region42: #{feature_extraction_denseasp.6} parent=5 // pred_check_branch
      %218 = sbr.rel (%p215) target = $region44
    $region43: #{feature_extraction_denseasp.6} parent=5 // pred_region
      %s219 = ssub.s32 %s12, 1
      %s220 = smul.u32 16, %s17
      %p221 = scmp.lt.s32.totalorder %s220, 63
      %s222 = scalar_select %p221, %s220, 63
      %s223 = smul.addr %s222, 3
      %s224 = smul.addr %s223, 8
      %s225 = scalar_lea.vmem %s0, %s224
      %p226 = pneg %p38
      %p227 = pneg %p35
      %p228 = pneg %p59
      %p229 = pneg %p56
      %p230 = pneg %p80
      %p231 = pneg %p77
      %p232 = pneg %p101
      %p233 = pneg %p98
      %p234 = pneg %p122
      %p235 = pneg %p119
      %p236 = pneg %p143
      %p237 = pneg %p140
      %p238 = pneg %p169
      %p239 = pneg %p166
      %s240 = smul.u32 16, %s17
      %p241 = scmp.lt.s32.totalorder %s240, 63
      %s242 = scalar_select %p241, %s240, 63
      %s243 = smul.addr %s242, 8
      %s244 = scalar_lea.vmem %s6, %s243
      %s245 = smul.u32 16, %s17
      %p246 = scmp.lt.s32.totalorder %s245, 63
      %s247 = scalar_select %p246, %s245, 63
      %s248 = smul.addr %s247, 3
      %s249 = smul.addr %s248, 8
      %s250 = scalar_lea.vmem %s0, %s249
      %s251 = smul.u32 16, %s17
      %s252 = smul.u32 16, %s17
      %p253 = scmp.lt.s32.totalorder %s252, 63
      %s254 = scalar_select %p253, %s252, 63
      %s255 = smul.addr %s254, 8
      %s256 = scalar_lea.vmem %s6, %s255
      %s257 = smul.u32 16, %s17
      %v258 = vld [vmem:[%s250] sm:$0xff]
      %v259 = vld [vmem:[%s250 + $0x8] sm:$0xff]
      %v260 = vld [vmem:[%s250 + $0x10] sm:$0xff]
      %v261 = vld [vmem:[%s250 + $0x18] sm:$0xff]
      %v262 = vld [vmem:[%s250 + $0x20] sm:$0xff]
      %v263 = vld [vmem:[%s250 + $0x28] sm:$0xff]
      %v264 = vld [vmem:[%s250 + $0x30] sm:$0xff]
      %v265 = vld [vmem:[%s250 + $0x38] sm:$0xff]
      %v266 = vld [vmem:[%s250 + $0x40] sm:$0xff]
      %v267 = vld [vmem:[%s250 + $0x48] sm:$0xff]
      %v268 = vld [vmem:[%s250 + $0x50] sm:$0xff]
      %v269 = vld [vmem:[%s250 + $0x58] sm:$0xff]
      %v270 = vld [vmem:[%s250 + $0x60] sm:$0xff]
      %v271 = vld [vmem:[%s250 + $0x68] sm:$0xff]
      %v272 = vld [vmem:[%s250 + $0x70] sm:$0xff]
      %v273 = vld [vmem:[%s250 + $0x78] sm:$0xff]
      %v274 = vld [vmem:[%s250 + $0x80] sm:$0xff]
      %v275 = vld [vmem:[%s250 + $0x88] sm:$0xff]
      %v276 = vld [vmem:[%s250 + $0x90] sm:$0xff]
      %v277 = vld [vmem:[%s250 + $0x98] sm:$0xff]
      %v278 = vld [vmem:[%s250 + $0xa0] sm:$0xff]
      %v279 = vld [vmem:[%s250 + $0xa8] sm:$0xff]
      %v280 = vld [vmem:[%s250 + $0xb0] sm:$0xff]
      %v281 = vld [vmem:[%s250 + $0xb8] sm:$0xff]
      %v282 = vld [vmem:[%s250 + $0xc0] sm:$0xff]
      %v283 = vld [vmem:[%s250 + $0xc8] sm:$0xff]
      %v284 = vld [vmem:[%s250 + $0xd0] sm:$0xff]
      %v285 = vld [vmem:[%s250 + $0xd8] sm:$0xff]
      %v286 = vld [vmem:[%s250 + $0xe0] sm:$0xff]
      %v287 = vld [vmem:[%s250 + $0xe8] sm:$0xff]
      %v288 = vld [vmem:[%s250 + $0xf0] sm:$0xff]
      %v289 = vld [vmem:[%s250 + $0xf8] sm:$0xff]
      %v290 = vld [vmem:[%s250 + $0x100] sm:$0xff]
      %v291 = vld [vmem:[%s250 + $0x108] sm:$0xff]
      %v292 = vld [vmem:[%s250 + $0x110] sm:$0xff]
      %v293 = vld [vmem:[%s250 + $0x118] sm:$0xff]
      %v294 = vld [vmem:[%s250 + $0x120] sm:$0xff]
      %v295 = vld [vmem:[%s250 + $0x128] sm:$0xff]
      %v296 = vld [vmem:[%s250 + $0x130] sm:$0xff]
      %v297 = vld [vmem:[%s250 + $0x138] sm:$0xff]
      %v298 = vld [vmem:[%s250 + $0x140] sm:$0xff]
      %v299 = vld [vmem:[%s250 + $0x148] sm:$0xff]
      %v300 = vld [vmem:[%s250 + $0x150] sm:$0xff]
      %v301 = vld [vmem:[%s250 + $0x158] sm:$0xff]
      %v302 = vld [vmem:[%s250 + $0x160] sm:$0xff]
      %v303 = vld [vmem:[%s250 + $0x168] sm:$0xff]
      %v304 = vld [vmem:[%s250 + $0x170] sm:$0xff]
      %v305 = vld [vmem:[%s250 + $0x178] sm:$0xff]
      %v306 = vld [vmem:[%s2] sm:$0x7]
      %v308 = vperm.slane %v306, 0
      %v309 = vperm.slane %v306, 1
      %v310 = vperm.slane %v306, 2
      %v314 = vmul.f32 %v258, %v308
      %v315 = vmul.f32 %v259, %v309
      %v316 = vmul.f32 %v260, %v310
      %v317 = vmul.f32 %v261, %v308
      %v318 = vmul.f32 %v262, %v309
      %v319 = vmul.f32 %v263, %v310
      %v320 = vmul.f32 %v264, %v308
      %v321 = vmul.f32 %v265, %v309
      %v322 = vmul.f32 %v266, %v310
      %v323 = vmul.f32 %v267, %v308
      %v324 = vmul.f32 %v268, %v309
      %v325 = vmul.f32 %v269, %v310
      %v326 = vmul.f32 %v270, %v308
      %v327 = vmul.f32 %v271, %v309
      %v328 = vmul.f32 %v272, %v310
      %v329 = vmul.f32 %v273, %v308
      %v330 = vmul.f32 %v274, %v309
      %v331 = vmul.f32 %v275, %v310
      %v332 = vmul.f32 %v276, %v308
      %v333 = vmul.f32 %v277, %v309
      %v334 = vmul.f32 %v278, %v310
      %v335 = vmul.f32 %v279, %v308
      %v336 = vmul.f32 %v280, %v309
      %v337 = vmul.f32 %v281, %v310
      %v338 = vmul.f32 %v282, %v308
      %v339 = vmul.f32 %v283, %v309
      %v340 = vmul.f32 %v284, %v310
      %v341 = vmul.f32 %v285, %v308
      %v342 = vmul.f32 %v286, %v309
      %v343 = vmul.f32 %v287, %v310
      %v344 = vmul.f32 %v288, %v308
      %v345 = vmul.f32 %v289, %v309
      %v346 = vmul.f32 %v290, %v310
      %v347 = vmul.f32 %v291, %v308
      %v348 = vmul.f32 %v292, %v309
      %v349 = vmul.f32 %v293, %v310
      %v350 = vmul.f32 %v294, %v308
      %v351 = vmul.f32 %v295, %v309
      %v352 = vmul.f32 %v296, %v310
      %v353 = vmul.f32 %v297, %v308
      %v354 = vmul.f32 %v298, %v309
      %v355 = vmul.f32 %v299, %v310
      %v356 = vmul.f32 %v300, %v308
      %v357 = vmul.f32 %v301, %v309
      %v358 = vmul.f32 %v302, %v310
      %v359 = vmul.f32 %v303, %v308
      %v360 = vmul.f32 %v304, %v309
      %v361 = vmul.f32 %v305, %v310
      %v362 = vld [vmem:[%s3] sm:$0x7]
      %v364 = vperm.slane %v362, 0
      %v365 = vperm.slane %v362, 1
      %v366 = vperm.slane %v362, 2
      %v370 = vadd.f32 %v314, %v364
      %v371 = vadd.f32 %v315, %v365
      %v372 = vadd.f32 %v316, %v366
      %v373 = vadd.f32 %v317, %v364
      %v374 = vadd.f32 %v318, %v365
      %v375 = vadd.f32 %v319, %v366
      %v376 = vadd.f32 %v320, %v364
      %v377 = vadd.f32 %v321, %v365
      %v378 = vadd.f32 %v322, %v366
      %v379 = vadd.f32 %v323, %v364
      %v380 = vadd.f32 %v324, %v365
      %v381 = vadd.f32 %v325, %v366
      %v382 = vadd.f32 %v326, %v364
      %v383 = vadd.f32 %v327, %v365
      %v384 = vadd.f32 %v328, %v366
      %v385 = vadd.f32 %v329, %v364
      %v386 = vadd.f32 %v330, %v365
      %v387 = vadd.f32 %v331, %v366
      %v388 = vadd.f32 %v332, %v364
      %v389 = vadd.f32 %v333, %v365
      %v390 = vadd.f32 %v334, %v366
      %v391 = vadd.f32 %v335, %v364
      %v392 = vadd.f32 %v336, %v365
      %v393 = vadd.f32 %v337, %v366
      %v394 = vadd.f32 %v338, %v364
      %v395 = vadd.f32 %v339, %v365
      %v396 = vadd.f32 %v340, %v366
      %v397 = vadd.f32 %v341, %v364
      %v398 = vadd.f32 %v342, %v365
      %v399 = vadd.f32 %v343, %v366
      %v400 = vadd.f32 %v344, %v364
      %v401 = vadd.f32 %v345, %v365
      %v402 = vadd.f32 %v346, %v366
      %v403 = vadd.f32 %v347, %v364
      %v404 = vadd.f32 %v348, %v365
      %v405 = vadd.f32 %v349, %v366
      %v406 = vadd.f32 %v350, %v364
      %v407 = vadd.f32 %v351, %v365
      %v408 = vadd.f32 %v352, %v366
      %v409 = vadd.f32 %v353, %v364
      %v410 = vadd.f32 %v354, %v365
      %v411 = vadd.f32 %v355, %v366
      %v412 = vadd.f32 %v356, %v364
      %v413 = vadd.f32 %v357, %v365
      %v414 = vadd.f32 %v358, %v366
      %v415 = vadd.f32 %v359, %v364
      %v416 = vadd.f32 %v360, %v365
      %v417 = vadd.f32 %v361, %v366
      %v418 = vmax.f32 %v370, 0.0
      %v419 = vmax.f32 %v371, 0.0
      %v420 = vmax.f32 %v372, 0.0
      %v421 = vmax.f32 %v373, 0.0
      %v422 = vmax.f32 %v374, 0.0
      %v423 = vmax.f32 %v375, 0.0
      %v424 = vmax.f32 %v376, 0.0
      %v425 = vmax.f32 %v377, 0.0
      %v426 = vmax.f32 %v378, 0.0
      %v427 = vmax.f32 %v379, 0.0
      %v428 = vmax.f32 %v380, 0.0
      %v429 = vmax.f32 %v381, 0.0
      %v430 = vmax.f32 %v382, 0.0
      %v431 = vmax.f32 %v383, 0.0
      %v432 = vmax.f32 %v384, 0.0
      %v433 = vmax.f32 %v385, 0.0
      %v434 = vmax.f32 %v386, 0.0
      %v435 = vmax.f32 %v387, 0.0
      %v436 = vmax.f32 %v388, 0.0
      %v437 = vmax.f32 %v389, 0.0
      %v438 = vmax.f32 %v390, 0.0
      %v439 = vmax.f32 %v391, 0.0
      %v440 = vmax.f32 %v392, 0.0
      %v441 = vmax.f32 %v393, 0.0
      %v442 = vmax.f32 %v394, 0.0
      %v443 = vmax.f32 %v395, 0.0
      %v444 = vmax.f32 %v396, 0.0
      %v445 = vmax.f32 %v397, 0.0
      %v446 = vmax.f32 %v398, 0.0
      %v447 = vmax.f32 %v399, 0.0
      %v448 = vmax.f32 %v400, 0.0
      %v449 = vmax.f32 %v401, 0.0
      %v450 = vmax.f32 %v402, 0.0
      %v451 = vmax.f32 %v403, 0.0
      %v452 = vmax.f32 %v404, 0.0
      %v453 = vmax.f32 %v405, 0.0
      %v454 = vmax.f32 %v406, 0.0
      %v455 = vmax.f32 %v407, 0.0
      %v456 = vmax.f32 %v408, 0.0
      %v457 = vmax.f32 %v409, 0.0
      %v458 = vmax.f32 %v410, 0.0
      %v459 = vmax.f32 %v411, 0.0
      %v460 = vmax.f32 %v412, 0.0
      %v461 = vmax.f32 %v413, 0.0
      %v462 = vmax.f32 %v414, 0.0
      %v463 = vmax.f32 %v415, 0.0
      %v464 = vmax.f32 %v416, 0.0
      %v465 = vmax.f32 %v417, 0.0
      %v466 = vld [vmem:[%s1] sm:$0xff]
      %v467 = vld [vmem:[%s1 + $0x8] sm:$0xff]
      %v468 = vld [vmem:[%s1 + $0x10] sm:$0xff]
      %v469 = vld [vmem:[%s1 + $0x18] sm:$0xff]
      %v470 = vld [vmem:[%s1 + $0x20] sm:$0xff]
      %v471 = vld [vmem:[%s1 + $0x28] sm:$0xff]
      %v472 = vld [vmem:[%s1 + $0x30] sm:$0xff]
      %v473 = vld [vmem:[%s1 + $0x38] sm:$0xff]
      %v474 = vld [vmem:[%s1 + $0x40] sm:$0xff]
      %v475 = vld [vmem:[%s1 + $0x48] sm:$0xff]
      %v476 = vld [vmem:[%s1 + $0x50] sm:$0xff]
      %v477 = vld [vmem:[%s1 + $0x58] sm:$0xff]
      %v478 = vld [vmem:[%s1 + $0x60] sm:$0xff]
      %v479 = vld [vmem:[%s1 + $0x68] sm:$0xff]
      %v480 = vld [vmem:[%s1 + $0x70] sm:$0xff]
      %v481 = vld [vmem:[%s1 + $0x78] sm:$0xff]
      %v482 = vld [vmem:[%s1 + $0x80] sm:$0xff]
      %v483 = vld [vmem:[%s1 + $0x88] sm:$0xff]
      %v484 = vld [vmem:[%s1 + $0x90] sm:$0xff]
      %v485 = vld [vmem:[%s1 + $0x98] sm:$0xff]
      %v486 = vld [vmem:[%s1 + $0xa0] sm:$0xff]
      %v487 = vld [vmem:[%s1 + $0xa8] sm:$0xff]
      %v488 = vld [vmem:[%s1 + $0xb0] sm:$0xff]
      %v489 = vld [vmem:[%s1 + $0xb8] sm:$0xff]
      %v490 = vld [vmem:[%s1 + $0xc0] sm:$0xff]
      %v491 = vld [vmem:[%s1 + $0xc8] sm:$0xff]
      %v492 = vld [vmem:[%s1 + $0xd0] sm:$0xff]
      %v493 = vld [vmem:[%s1 + $0xd8] sm:$0xff]
      %v494 = vld [vmem:[%s1 + $0xe0] sm:$0xff]
      %v495 = vld [vmem:[%s1 + $0xe8] sm:$0xff]
      %v496 = vld [vmem:[%s1 + $0xf0] sm:$0xff]
      %v497 = vld [vmem:[%s1 + $0xf8] sm:$0xff]
      %v498 = vld [vmem:[%s1 + $0x100] sm:$0xff]
      %v499 = vld [vmem:[%s1 + $0x108] sm:$0xff]
      %v500 = vld [vmem:[%s1 + $0x110] sm:$0xff]
      %v501 = vld [vmem:[%s1 + $0x118] sm:$0xff]
      %vm502 = vcmask 261120
      %v504 = vsel %vm502, %v420, 0
      %v507 = vsel %vm502, %v423, 0
      %v510 = vsel %vm502, %v426, 0
      %v513 = vsel %vm502, %v429, 0
      %v516 = vsel %vm502, %v432, 0
      %v519 = vsel %vm502, %v435, 0
      %v522 = vsel %vm502, %v438, 0
      %v525 = vsel %vm502, %v441, 0
      %v528 = vsel %vm502, %v444, 0
      %v531 = vsel %vm502, %v447, 0
      %v534 = vsel %vm502, %v450, 0
      %v537 = vsel %vm502, %v453, 0
      %v540 = vsel %vm502, %v456, 0
      %v543 = vsel %vm502, %v459, 0
      %v546 = vsel %vm502, %v462, 0
      %v549 = vsel %vm502, %v465, 0
      %551 = vmatpush.msra.mxu0 %v481
      %552 = vmatpush.msra.mxu0 %v480
      %553 = vmatpush.msra.mxu0 %v479
      %554 = vmatpush.msra.mxu0 %v478
      %555 = vmatpush.msra.mxu0 %v477
      %556 = vmatpush.msra.mxu0 %v476
      %557 = vmatpush.msra.mxu0 %v475
      %558 = vmatpush.msra.mxu0 %v474
      %559 = vmatpush.msra.mxu0 %v473
      %560 = vmatpush.msra.mxu0 %v472
      %561 = vmatpush.msra.mxu0 %v471
      %562 = vmatpush.msra.mxu0 %v470
      %563 = vmatpush.msra.mxu0 %v469
      %564 = vmatpush.msra.mxu0 %v468
      %565 = vmatpush.msra.mxu0 %v467
      %566 = vmatpush.msra.mxu0 %v466
      %567 = vmatmul.f32.gmra.mxu0 %v418
      %v568 = vpop.f32.mrf.mxu0
      %v569 = vadd.f32 0.0, %v568
      %570 = vmatmul.f32.gmra.mxu0 %v421
      %v571 = vpop.f32.mrf.mxu0
      %v572 = vadd.f32 0.0, %v571
      %573 = vmatmul.f32.gmra.mxu0 %v424
      %v574 = vpop.f32.mrf.mxu0
      %v575 = vadd.f32 0.0, %v574
      %576 = vmatmul.f32.gmra.mxu0 %v427
      %v577 = vpop.f32.mrf.mxu0
      %v578 = vadd.f32 0.0, %v577
      %579 = vmatmul.f32.gmra.mxu0 %v430
      %v580 = vpop.f32.mrf.mxu0
      %v581 = vadd.f32 0.0, %v580
      %582 = vmatmul.f32.gmra.mxu0 %v433
      %v583 = vpop.f32.mrf.mxu0
      %v584 = vadd.f32 0.0, %v583
      %585 = vmatmul.f32.gmra.mxu0 %v436
      %v586 = vpop.f32.mrf.mxu0
      %v587 = vadd.f32 0.0, %v586
      %588 = vmatmul.f32.gmra.mxu0 %v439
      %v589 = vpop.f32.mrf.mxu0
      %v590 = vadd.f32 0.0, %v589
      %591 = vmatmul.f32.gmra.mxu0 %v442
      %v592 = vpop.f32.mrf.mxu0
      %v593 = vadd.f32 0.0, %v592
      %594 = vmatmul.f32.gmra.mxu0 %v445
      %v595 = vpop.f32.mrf.mxu0
      %v596 = vadd.f32 0.0, %v595
      %597 = vmatmul.f32.gmra.mxu0 %v448
      %v598 = vpop.f32.mrf.mxu0
      %v599 = vadd.f32 0.0, %v598
      %600 = vmatmul.f32.gmra.mxu0 %v451
      %v601 = vpop.f32.mrf.mxu0
      %v602 = vadd.f32 0.0, %v601
      %603 = vmatmul.f32.gmra.mxu0 %v454
      %v604 = vpop.f32.mrf.mxu0
      %v605 = vadd.f32 0.0, %v604
      %606 = vmatmul.f32.gmra.mxu0 %v457
      %v607 = vpop.f32.mrf.mxu0
      %v608 = vadd.f32 0.0, %v607
      %609 = vmatmul.f32.gmra.mxu0 %v460
      %v610 = vpop.f32.mrf.mxu0
      %v611 = vadd.f32 0.0, %v610
      %612 = vmatmul.f32.gmra.mxu0 %v463
      %v613 = vpop.f32.mrf.mxu0
      %v614 = vadd.f32 0.0, %v613
      %615 = vdwg.mxu0
      %616 = vmatpush.msra.mxu0 %v497
      %617 = vmatpush.msra.mxu0 %v496
      %618 = vmatpush.msra.mxu0 %v495
      %619 = vmatpush.msra.mxu0 %v494
      %620 = vmatpush.msra.mxu0 %v493
      %621 = vmatpush.msra.mxu0 %v492
      %622 = vmatpush.msra.mxu0 %v491
      %623 = vmatpush.msra.mxu0 %v490
      %624 = vmatpush.msra.mxu0 %v489
      %625 = vmatpush.msra.mxu0 %v488
      %626 = vmatpush.msra.mxu0 %v487
      %627 = vmatpush.msra.mxu0 %v486
      %628 = vmatpush.msra.mxu0 %v485
      %629 = vmatpush.msra.mxu0 %v484
      %630 = vmatpush.msra.mxu0 %v483
      %631 = vmatpush.msra.mxu0 %v482
      %632 = vmatmul.f32.gmra.mxu0 %v419
      %v633 = vpop.f32.mrf.mxu0
      %v634 = vadd.f32 %v569, %v633
      %635 = vmatmul.f32.gmra.mxu0 %v422
      %v636 = vpop.f32.mrf.mxu0
      %v637 = vadd.f32 %v572, %v636
      %638 = vmatmul.f32.gmra.mxu0 %v425
      %v639 = vpop.f32.mrf.mxu0
      %v640 = vadd.f32 %v575, %v639
      %641 = vmatmul.f32.gmra.mxu0 %v428
      %v642 = vpop.f32.mrf.mxu0
      %v643 = vadd.f32 %v578, %v642
      %644 = vmatmul.f32.gmra.mxu0 %v431
      %v645 = vpop.f32.mrf.mxu0
      %v646 = vadd.f32 %v581, %v645
      %647 = vmatmul.f32.gmra.mxu0 %v434
      %v648 = vpop.f32.mrf.mxu0
      %v649 = vadd.f32 %v584, %v648
      %650 = vmatmul.f32.gmra.mxu0 %v437
      %v651 = vpop.f32.mrf.mxu0
      %v652 = vadd.f32 %v587, %v651
      %653 = vmatmul.f32.gmra.mxu0 %v440
      %v654 = vpop.f32.mrf.mxu0
      %v655 = vadd.f32 %v590, %v654
      %656 = vmatmul.f32.gmra.mxu0 %v443
      %v657 = vpop.f32.mrf.mxu0
      %v658 = vadd.f32 %v593, %v657
      %659 = vmatmul.f32.gmra.mxu0 %v446
      %v660 = vpop.f32.mrf.mxu0
      %v661 = vadd.f32 %v596, %v660
      %662 = vmatmul.f32.gmra.mxu0 %v449
      %v663 = vpop.f32.mrf.mxu0
      %v664 = vadd.f32 %v599, %v663
      %665 = vmatmul.f32.gmra.mxu0 %v452
      %v666 = vpop.f32.mrf.mxu0
      %v667 = vadd.f32 %v602, %v666
      %668 = vmatmul.f32.gmra.mxu0 %v455
      %v669 = vpop.f32.mrf.mxu0
      %v670 = vadd.f32 %v605, %v669
      %671 = vmatmul.f32.gmra.mxu0 %v458
      %v672 = vpop.f32.mrf.mxu0
      %v673 = vadd.f32 %v608, %v672
      %674 = vmatmul.f32.gmra.mxu0 %v461
      %v675 = vpop.f32.mrf.mxu0
      %v676 = vadd.f32 %v611, %v675
      %677 = vmatmul.f32.gmra.mxu0 %v464
      %v678 = vpop.f32.mrf.mxu0
      %v679 = vadd.f32 %v614, %v678
      %680 = vdwg.mxu0
      %681 = vmatpush.msra.mxu0 0.0
      %682 = vmatpush.msra.mxu0 0.0
      %683 = vmatpush.msra.mxu0 0.0
      %684 = vmatpush.msra.mxu0 0.0
      %685 = vmatpush.msra.mxu0 0.0
      %686 = vmatpush.msra.mxu0 0.0
      %687 = vmatpush.msra.mxu0 0.0
      %688 = vmatpush.msra.mxu0 0.0
      %689 = vmatpush.msra.mxu0 0.0
      %690 = vmatpush.msra.mxu0 0.0
      %691 = vmatpush.msra.mxu0 0.0
      %692 = vmatpush.msra.mxu0 0.0
      %693 = vmatpush.msra.mxu0 %v501
      %694 = vmatpush.msra.mxu0 %v500
      %695 = vmatpush.msra.mxu0 %v499
      %696 = vmatpush.msra.mxu0 %v498
      %697 = vmatmul.f32.gmra.mxu0 %v504
      %v698 = vpop.f32.mrf.mxu0
      %v699 = vadd.f32 %v634, %v698
      %700 = vmatmul.f32.gmra.mxu0 %v507
      %v701 = vpop.f32.mrf.mxu0
      %v702 = vadd.f32 %v637, %v701
      %703 = vmatmul.f32.gmra.mxu0 %v510
      %v704 = vpop.f32.mrf.mxu0
      %v705 = vadd.f32 %v640, %v704
      %706 = vmatmul.f32.gmra.mxu0 %v513
      %v707 = vpop.f32.mrf.mxu0
      %v708 = vadd.f32 %v643, %v707
      %709 = vmatmul.f32.gmra.mxu0 %v516
      %v710 = vpop.f32.mrf.mxu0
      %v711 = vadd.f32 %v646, %v710
      %712 = vmatmul.f32.gmra.mxu0 %v519
      %v713 = vpop.f32.mrf.mxu0
      %v714 = vadd.f32 %v649, %v713
      %715 = vmatmul.f32.gmra.mxu0 %v522
      %v716 = vpop.f32.mrf.mxu0
      %v717 = vadd.f32 %v652, %v716
      %718 = vmatmul.f32.gmra.mxu0 %v525
      %v719 = vpop.f32.mrf.mxu0
      %v720 = vadd.f32 %v655, %v719
      %721 = vmatmul.f32.gmra.mxu0 %v528
      %v722 = vpop.f32.mrf.mxu0
      %v723 = vadd.f32 %v658, %v722
      %724 = vmatmul.f32.gmra.mxu0 %v531
      %v725 = vpop.f32.mrf.mxu0
      %v726 = vadd.f32 %v661, %v725
      %727 = vmatmul.f32.gmra.mxu0 %v534
      %v728 = vpop.f32.mrf.mxu0
      %v729 = vadd.f32 %v664, %v728
      %730 = vmatmul.f32.gmra.mxu0 %v537
      %v731 = vpop.f32.mrf.mxu0
      %v732 = vadd.f32 %v667, %v731
      %733 = vmatmul.f32.gmra.mxu0 %v540
      %v734 = vpop.f32.mrf.mxu0
      %v735 = vadd.f32 %v670, %v734
      %736 = vmatmul.f32.gmra.mxu0 %v543
      %v737 = vpop.f32.mrf.mxu0
      %v738 = vadd.f32 %v673, %v737
      %739 = vmatmul.f32.gmra.mxu0 %v546
      %v740 = vpop.f32.mrf.mxu0
      %v741 = vadd.f32 %v676, %v740
      %742 = vmatmul.f32.gmra.mxu0 %v549
      %v743 = vpop.f32.mrf.mxu0
      %v744 = vadd.f32 %v679, %v743
      %745 = vdwg.mxu0
      %v746 = vld [vmem:[%s4] sm:$0x1]
      %v748 = vperm.slane %v746, 0
      %v750 = vmul.f32 %v699, %v748
      %v751 = vmul.f32 %v702, %v748
      %v752 = vmul.f32 %v705, %v748
      %v753 = vmul.f32 %v708, %v748
      %v754 = vmul.f32 %v711, %v748
      %v755 = vmul.f32 %v714, %v748
      %v756 = vmul.f32 %v717, %v748
      %v757 = vmul.f32 %v720, %v748
      %v758 = vmul.f32 %v723, %v748
      %v759 = vmul.f32 %v726, %v748
      %v760 = vmul.f32 %v729, %v748
      %v761 = vmul.f32 %v732, %v748
      %v762 = vmul.f32 %v735, %v748
      %v763 = vmul.f32 %v738, %v748
      %v764 = vmul.f32 %v741, %v748
      %v765 = vmul.f32 %v744, %v748
      %v766 = vld [vmem:[%s5] sm:$0x1]
      %v768 = vperm.slane %v766, 0
      %v770 = vadd.f32 %v750, %v768
      %v771 = vadd.f32 %v751, %v768
      %v772 = vadd.f32 %v752, %v768
      %v773 = vadd.f32 %v753, %v768
      %v774 = vadd.f32 %v754, %v768
      %v775 = vadd.f32 %v755, %v768
      %v776 = vadd.f32 %v756, %v768
      %v777 = vadd.f32 %v757, %v768
      %v778 = vadd.f32 %v758, %v768
      %v779 = vadd.f32 %v759, %v768
      %v780 = vadd.f32 %v760, %v768
      %v781 = vadd.f32 %v761, %v768
      %v782 = vadd.f32 %v762, %v768
      %v783 = vadd.f32 %v763, %v768
      %v784 = vadd.f32 %v764, %v768
      %v785 = vadd.f32 %v765, %v768
      %vm786 = vcmask 130048
      %787 = vst.msk [vmem:[%s256] sm:$0xff] %vm786, %v770
      %788 = vst.msk [vmem:[%s256 + $0x8] sm:$0xff] %vm786, %v771
      %789 = vst.msk [vmem:[%s256 + $0x10] sm:$0xff] %vm786, %v772
      %790 = vst.msk [vmem:[%s256 + $0x18] sm:$0xff] %vm786, %v773
      %791 = vst.msk [vmem:[%s256 + $0x20] sm:$0xff] %vm786, %v774
      %792 = vst.msk [vmem:[%s256 + $0x28] sm:$0xff] %vm786, %v775
      %793 = vst.msk [vmem:[%s256 + $0x30] sm:$0xff] %vm786, %v776
      %794 = vst.msk [vmem:[%s256 + $0x38] sm:$0xff] %vm786, %v777
      %795 = vst.msk [vmem:[%s256 + $0x40] sm:$0xff] %vm786, %v778
      %796 = vst.msk [vmem:[%s256 + $0x48] sm:$0xff] %vm786, %v779
      %797 = vst.msk [vmem:[%s256 + $0x50] sm:$0xff] %vm786, %v780
      %798 = vst.msk [vmem:[%s256 + $0x58] sm:$0xff] %vm786, %v781
      %799 = vst.msk [vmem:[%s256 + $0x60] sm:$0xff] %vm786, %v782
      %800 = vst.msk [vmem:[%s256 + $0x68] sm:$0xff] %vm786, %v783
      %801 = vst.msk [vmem:[%s256 + $0x70] sm:$0xff] %vm786, %v784
      %802 = vst.msk [vmem:[%s256 + $0x78] sm:$0xff] %vm786, %v785
      %819 = vrot.lane.b32.xlu0 %v259, 16
      %v820 = vpop.permute.xlu0 %819
      %821 = vrot.lane.b32.xlu0 %v262, 16
      %v822 = vpop.permute.xlu0 %821
      %823 = vrot.lane.b32.xlu0 %v265, 16
      %v824 = vpop.permute.xlu0 %823
      %825 = vrot.lane.b32.xlu0 %v268, 16
      %v826 = vpop.permute.xlu0 %825
      %827 = vrot.lane.b32.xlu0 %v271, 16
      %v828 = vpop.permute.xlu0 %827
      %829 = vrot.lane.b32.xlu0 %v274, 16
      %v830 = vpop.permute.xlu0 %829
      %831 = vrot.lane.b32.xlu0 %v277, 16
      %v832 = vpop.permute.xlu0 %831
      %833 = vrot.lane.b32.xlu0 %v280, 16
      %v834 = vpop.permute.xlu0 %833
      %835 = vrot.lane.b32.xlu0 %v283, 16
      %v836 = vpop.permute.xlu0 %835
      %837 = vrot.lane.b32.xlu0 %v286, 16
      %v838 = vpop.permute.xlu0 %837
      %839 = vrot.lane.b32.xlu0 %v289, 16
      %v840 = vpop.permute.xlu0 %839
      %841 = vrot.lane.b32.xlu0 %v292, 16
      %v842 = vpop.permute.xlu0 %841
      %843 = vrot.lane.b32.xlu0 %v295, 16
      %v844 = vpop.permute.xlu0 %843
      %845 = vrot.lane.b32.xlu0 %v298, 16
      %v846 = vpop.permute.xlu0 %845
      %847 = vrot.lane.b32.xlu0 %v301, 16
      %v848 = vpop.permute.xlu0 %847
      %849 = vrot.lane.b32.xlu0 %v304, 16
      %v850 = vpop.permute.xlu0 %849
      %vm867 = vcmask 392320
      %868 = vst.msk [vmem:[%s256] sm:$0xff] %vm867, %v820
      %869 = vst.msk [vmem:[%s256 + $0x8] sm:$0xff] %vm867, %v822
      %870 = vst.msk [vmem:[%s256 + $0x10] sm:$0xff] %vm867, %v824
      %871 = vst.msk [vmem:[%s256 + $0x18] sm:$0xff] %vm867, %v826
      %872 = vst.msk [vmem:[%s256 + $0x20] sm:$0xff] %vm867, %v828
      %873 = vst.msk [vmem:[%s256 + $0x28] sm:$0xff] %vm867, %v830
      %874 = vst.msk [vmem:[%s256 + $0x30] sm:$0xff] %vm867, %v832
      %875 = vst.msk [vmem:[%s256 + $0x38] sm:$0xff] %vm867, %v834
      %876 = vst.msk [vmem:[%s256 + $0x40] sm:$0xff] %vm867, %v836
      %877 = vst.msk [vmem:[%s256 + $0x48] sm:$0xff] %vm867, %v838
      %878 = vst.msk [vmem:[%s256 + $0x50] sm:$0xff] %vm867, %v840
      %879 = vst.msk [vmem:[%s256 + $0x58] sm:$0xff] %vm867, %v842
      %880 = vst.msk [vmem:[%s256 + $0x60] sm:$0xff] %vm867, %v844
      %881 = vst.msk [vmem:[%s256 + $0x68] sm:$0xff] %vm867, %v846
      %882 = vst.msk [vmem:[%s256 + $0x70] sm:$0xff] %vm867, %v848
      %883 = vst.msk [vmem:[%s256 + $0x78] sm:$0xff] %vm867, %v850
      %s884 = smul.u32 16, %s17
      %p885 = scmp.lt.s32.totalorder %s884, 63
      %s886 = scalar_select %p885, %s884, 63
      %s887 = smul.addr %s886, 8
      %s888 = scalar_lea.vmem %s6, %s887
      // Predicated region
      $region45: #{feature_extraction_denseasp.6} parent=43 // pred_check
        %p889 = pneg %p166
      $region46: #{feature_extraction_denseasp.6} parent=43 // pred_check_branch
        %891 = sbr.rel (%p889) target = $region48
      $region47: #{feature_extraction_denseasp.6} parent=43 // pred_region
        %s892 = smul.u32 16, %s17
      $region48: #{feature_extraction_denseasp.6} parent=43 // pred_fallthru
        _
    $region44: #{feature_extraction_denseasp.6} parent=5 // pred_fallthru
      _
    %p893 = scmp.le.s32.totalorder 2, %s12
    // Predicated region
    $region49: #{feature_extraction_denseasp.6} parent=5 // pred_check
      %p894 = pneg %p893
    $region50: #{feature_extraction_denseasp.6} parent=5 // pred_check_branch
      %896 = sbr.rel (%p894) target = $region52
    $region51: #{feature_extraction_denseasp.6} parent=5 // pred_region
      %s897 = ssub.s32 %s12, 2
      // Predicated region
      $region53: #{feature_extraction_denseasp.6} parent=51 // pred_check
        %p898 = pneg %p172
      $region54: #{feature_extraction_denseasp.6} parent=51 // pred_check_branch
        %900 = sbr.rel (%p898) target = $region56
      $region55: #{feature_extraction_denseasp.6} parent=51 // pred_region
        %s901 = smul.u32 16, %s18
        %p902 = scmp.lt.s32.totalorder %s901, 63
        %s903 = scalar_select %p902, %s901, 63
        %s904 = smul.addr %s903, 8
        %s905 = scalar_lea.vmem %s6, %s904
      $region56: #{feature_extraction_denseasp.6} parent=51 // pred_fallthru
        _
    $region52: #{feature_extraction_denseasp.6} parent=5 // pred_fallthru
      _
  $region6: #{feature_extraction_denseasp.6} parent=0 // loop_footer
    %s16 = sadd.s32 1, %s12
  $region7: #{feature_extraction_denseasp.6} parent=0 // loop_footer_branch
    %11 = sbr.rel target = $region3
  $region8: #{feature_extraction_denseasp.6} parent=0 // loop_exit
    _

// kernel: tile.53
$region0: #{tile.53}
  #allocation0 [shape = 's32[1]{0}', space=sflag, size = 0x4, scoped, tag = 'scoped memory for tile.53']
  %s0 = inlined_call_operand.vmem [shape: f32[48], index: 0, kind: input, shape index: {}]
  %s1 = inlined_call_operand.vmem [shape: f32[9,48], index: 1, kind: output, shape index: {}]
  // Predicated region
  $region2: #{tile.53} parent=0 // pred_check
    _
  $region3: #{tile.53} parent=0 // pred_check_branch
    %3 = sbr.rel (0) target = $region5
  $region4: #{tile.53} parent=0 // pred_region
    _
  $region5: #{tile.53} parent=0 // pred_fallthru
    _
  %v4 = vld [vmem:[%s0] ss:$0 sm:$0xff]
  %5 = vst [vmem:[%s1] sm:$0xff] %v4
  %s6 = scalar_lea.vmem %s1, 8
  %7 = vst [vmem:[%s6] sm:$0xff] %v4

// kernel: tile.54
$region0: #{tile.54}
  %s0 = inlined_call_operand.vmem [shape: f32[9,48], index: 0, kind: input, shape index: {}]
  %s1 = inlined_call_operand.vmem [shape: f32[1,432], index: 1, kind: output, shape index: {}]
  $region1: #{tile.54} parent=0
    #allocation0 [shape = 'u8[16384]{0}', space=vmem, size = 0x4000, scoped, tag = 'scoped mem for output reshape']
    %s2 = smov 3
    %v3 = vld [vmem:[%s0] ss:$8 sm:%s2]
    %vm4 = vcmask 392192
    %5 = vst.msk [vmem:[#allocation0] ss:$24 sm:$0x3] %vm4, %v3
    %s6 = scalar_lea.vmem %s0, 5
    %v7 = vld [vmem:[%s6] sm:$0x1]
    %s8 = scalar_lea.vmem %s0, 5
    %v9 = vld [vmem:[%s8] sm:$0x1]
    %vm10 = vcmask 130048
    %v11 = vsel %vm10, %v9, %v7
    %12 = vrot.lane.b32.xlu0 %v11, 112
    %v13 = vpop.permute.xlu0 %12
    %vm14 = vcmask 261120
    %s15 = scalar_lea.vmem [#allocation0], 16
    %16 = vst.msk [vmem:[%s15] sm:$0x1] %vm14, %v13
    %vm17 = vcmask 1048448
    %s18 = scalar_lea.vmem [#allocation0], 8
    %19 = vst.msk [vmem:[%s18] sm:$0x1] %vm17, %v13
    %s20 = scalar_lea.vmem %s0, 2
    %v21 = vld [vmem:[%s20] sm:$0x1]
    %s22 = scalar_lea.vmem %s0, 2
    %v23 = vld [vmem:[%s22] sm:$0x1]
    %vm24 = vcmask 261120
    %v25 = vsel %vm24, %v23, %v21
    %26 = vrot.lane.b32.xlu0 %v25, 96
    %v27 = vpop.permute.xlu0 %26
    %vm28 = vcmask 130048
    %s29 = scalar_lea.vmem [#allocation0], 8
    %30 = vst.msk [vmem:[%s29] sm:$0x1] %vm28, %v27
    %vm31 = vcmask 1048320
    %32 = vst.msk [vmem:[#allocation0] sm:$0x1] %vm31, %v27
    %s33 = scalar_lea.vmem %s0, 7
    %v34 = vld [vmem:[%s33] sm:$0x1]
    %35 = vrot.lane.b32.xlu0 %v34, 80
    %v36 = vpop.permute.xlu0 %35
    %vm37 = vcmask 1048192
    %s38 = scalar_lea.vmem [#allocation0], 16
    %39 = vst.msk [vmem:[%s38] sm:$0x1] %vm37, %v36
    %s40 = scalar_lea.vmem %s0, 4
    %v41 = vld [vmem:[%s40] sm:$0x1]
    %42 = vrot.lane.b32.xlu0 %v41, 64
    %v43 = vpop.permute.xlu0 %42
    %vm44 = vcmask 916992
    %s45 = scalar_lea.vmem [#allocation0], 8
    %46 = vst.msk [vmem:[%s45] sm:$0x1] %vm44, %v43
    %s47 = scalar_lea.vmem %s0, 1
    %v48 = vld [vmem:[%s47] sm:$0x1]
    %49 = vrot.lane.b32.xlu0 %v48, 48
    %v50 = vpop.permute.xlu0 %49
    %vm51 = vcmask 785792
    %52 = vst.msk [vmem:[#allocation0] sm:$0x1] %vm51, %v50
    %s53 = scalar_lea.vmem %s0, 6
    %v54 = vld [vmem:[%s53] sm:$0x1]
    %55 = vrot.lane.b32.xlu0 %v54, 32
    %v56 = vpop.permute.xlu0 %55
    %vm57 = vcmask 654592
    %s58 = scalar_lea.vmem [#allocation0], 16
    %59 = vst.msk [vmem:[%s58] sm:$0x1] %vm57, %v56
    %s60 = scalar_lea.vmem %s0, 3
    %v61 = vld [vmem:[%s60] sm:$0x1]
    %62 = vrot.lane.b32.xlu0 %v61, 16
    %v63 = vpop.permute.xlu0 %62
    %vm64 = vcmask 523392
    %s65 = scalar_lea.vmem [#allocation0], 8
    %66 = vst.msk [vmem:[%s65] sm:$0x1] %vm64, %v63
    %s68 = ssub.s32 2, 1
    %v69 = vld [vmem:[#allocation0] sm:%s68]
    %s71 = ssub.s32 2, 1
    %72 = vst [vmem:[%s1] sm:%s71] %v69
    %s73 = scalar_lea.vmem [#allocation0], 8
    %v74 = vld [vmem:[%s73] sm:%s68]
    %s76 = ssub.s32 2, 1
    %s77 = scalar_lea.vmem %s1, 1
    %78 = vst [vmem:[%s77] sm:%s76] %v74
    %s79 = scalar_lea.vmem [#allocation0], 16
    %v80 = vld [vmem:[%s79] sm:%s68]
    %s82 = ssub.s32 2, 1
    %s83 = scalar_lea.vmem %s1, 2
    %84 = vst [vmem:[%s83] sm:%s82] %v80
    %s85 = scalar_lea.vmem [#allocation0], 24
    %v86 = vld [vmem:[%s85] sm:%s68]
    %s88 = ssub.s32 2, 1
    %s89 = scalar_lea.vmem %s1, 3
    %90 = vst [vmem:[%s89] sm:%s88] %v86

// kernel: feature_extraction_denseasp.7
$region0: #{feature_extraction_denseasp.7}
  #allocation0 [shape = 'u32[]', space=smem, size = 0x4, offset = 0x4, fixed_abs, tag = 'smem constant byte address 0x4 - core index']
  #allocation1 [shape = 'u32[72,128]{1,0:T(1,128)}', space=vmem, size = 0x9000, scoped, tag = 'internal scratch']
  %s0 = inlined_call_operand.vmem [shape: f32[512,432], index: 0, kind: input, shape index: {}]
  %s1 = inlined_call_operand.vmem [shape: f32[432,16], index: 1, kind: input, shape index: {}]
  %s2 = inlined_call_operand.vmem [shape: f32[1,432], index: 2, kind: input, shape index: {}]
  %s3 = inlined_call_operand.vmem [shape: f32[1,432], index: 3, kind: input, shape index: {}]
  %s4 = inlined_call_operand.vmem [shape: f32[1,16], index: 4, kind: input, shape index: {}]
  %s5 = inlined_call_operand.vmem [shape: f32[1,16], index: 5, kind: input, shape index: {}]
  %s6 = inlined_call_operand.hbm [shape: f32[512,64], index: 6, kind: output, shape index: {}]
  %s7 = sld [smem:[#allocation0]]
  $region57: #{feature_extraction_denseasp.7} parent=0
    _
  %s9 = ssub.s32 1, %s7
  %s10 = scalar_select 0, %s9, %s7
  $region1: #{feature_extraction_denseasp.7} parent=0
    #allocation2 [shape = 'u8[131072]{0}', space=vmem, size = 0x20000, scoped, tag = 'output window, operand 0']
    #allocation3 [shape = 's32[2]{0}', space=sflag, size = 0x8, scoped, tag = 'scoped memory for feature_extraction_denseasp.7']
    %11 = vsyncpa [#allocation3], 0
    %s12 = scalar_lea.sflag [#allocation3], 1
    %13 = vsyncpa %s12, 0
    loop: start=0, step=1, limit=6
    $region2: #{feature_extraction_denseasp.7} parent=1 // loop_pre_header
      _
    $region3: #{feature_extraction_denseasp.7} parent=1 // loop_header
      %s15 = sphi 0, %s19
      %p16 = scmp.ge.s32.totalorder %s15, 6
      %s25 = sphi 0, %s27
      %s28 = sphi 0, %s25
      %s29 = sphi 0, %s28
      %s45 = sphi 0, %s29
      %s49 = sphi 0, %s49
      %s51 = sphi 0, %s49
      %s52 = sphi 0, %s51
      %s66 = sphi 0, %s52
      %s70 = sphi 0, %s70
      %s72 = sphi 0, %s70
      %s73 = sphi 0, %s72
      %s87 = sphi 0, %s73
      %s91 = sphi 0, %s91
      %s93 = sphi 0, %s91
      %s94 = sphi 0, %s93
      %s108 = sphi 0, %s94
      %s112 = sphi 0, %s112
      %s114 = sphi 0, %s112
      %s115 = sphi 0, %s114
      %s129 = sphi 0, %s115
      %s133 = sphi 0, %s133
      %s135 = sphi 0, %s133
      %s136 = sphi 0, %s135
      %s150 = sphi 0, %s136
      %s156 = sphi 0, %s158
      %s159 = sphi 0, %s156
      %s160 = sphi 0, %s159
      %s176 = sphi 0, %s160
    $region4: #{feature_extraction_denseasp.7} parent=1 // loop_header_branch
      %18 = sbr.rel (%p16) target = $region8
    $region5: #{feature_extraction_denseasp.7} parent=1 // loop_body
      %s20 = ssub.s32 %s15, 1
      %s21 = ssub.s32 %s15, 2
      %s22 = sadd.s32 %s15, 1
      %s23 = ssub.s32 %s15, %s22
      %p24 = scmp.eq.s32.totalorder %s23, 0
      %s26 = sadd.s32 %s25, 1
      %s27 = scalar_select %p24, %s25, %s26
      %p30 = pneg %p24
      %p31 = scmp.eq.s32.totalorder %s15, 3
      %p32 = por %p30, %p31
      %p33 = scmp.ne.s32.totalorder %s25, %s28
      %p34 = scmp.eq.s32.totalorder %s15, 0
      %p35 = por %p33, %p34
      %p36 = scmp.ne.s32.totalorder %s25, %s28
      %p37 = scmp.eq.s32.totalorder %s20, 3
      %p38 = por %p36, %p37
      %p39 = scmp.ne.s32.totalorder %s28, %s29
      %p40 = scmp.eq.s32.totalorder %s20, 0
      %p41 = por %p39, %p40
      %p42 = scmp.ne.s32.totalorder %s28, %s29
      %p43 = scmp.eq.s32.totalorder %s21, 3
      %p44 = por %p42, %p43
      %p46 = scmp.ne.s32.totalorder %s29, %s45
      %p47 = scmp.eq.s32.totalorder %s21, 0
      %p48 = por %p46, %p47
      %s50 = sadd.s32 %s49, 1
      %p53 = scmp.eq.s32.totalorder %s15, 3
      %p54 = scmp.ne.s32.totalorder %s49, %s51
      %p55 = scmp.eq.s32.totalorder %s15, 0
      %p56 = por %p54, %p55
      %p57 = scmp.ne.s32.totalorder %s49, %s51
      %p58 = scmp.eq.s32.totalorder %s20, 3
      %p59 = por %p57, %p58
      %p60 = scmp.ne.s32.totalorder %s51, %s52
      %p61 = scmp.eq.s32.totalorder %s20, 0
      %p62 = por %p60, %p61
      %p63 = scmp.ne.s32.totalorder %s51, %s52
      %p64 = scmp.eq.s32.totalorder %s21, 3
      %p65 = por %p63, %p64
      %p67 = scmp.ne.s32.totalorder %s52, %s66
      %p68 = scmp.eq.s32.totalorder %s21, 0
      %p69 = por %p67, %p68
      %s71 = sadd.s32 %s70, 1
      %p74 = scmp.eq.s32.totalorder %s15, 3
      %p75 = scmp.ne.s32.totalorder %s70, %s72
      %p76 = scmp.eq.s32.totalorder %s15, 0
      %p77 = por %p75, %p76
      %p78 = scmp.ne.s32.totalorder %s70, %s72
      %p79 = scmp.eq.s32.totalorder %s20, 3
      %p80 = por %p78, %p79
      %p81 = scmp.ne.s32.totalorder %s72, %s73
      %p82 = scmp.eq.s32.totalorder %s20, 0
      %p83 = por %p81, %p82
      %p84 = scmp.ne.s32.totalorder %s72, %s73
      %p85 = scmp.eq.s32.totalorder %s21, 3
      %p86 = por %p84, %p85
      %p88 = scmp.ne.s32.totalorder %s73, %s87
      %p89 = scmp.eq.s32.totalorder %s21, 0
      %p90 = por %p88, %p89
      %s92 = sadd.s32 %s91, 1
      %p95 = scmp.eq.s32.totalorder %s15, 3
      %p96 = scmp.ne.s32.totalorder %s91, %s93
      %p97 = scmp.eq.s32.totalorder %s15, 0
      %p98 = por %p96, %p97
      %p99 = scmp.ne.s32.totalorder %s91, %s93
      %p100 = scmp.eq.s32.totalorder %s20, 3
      %p101 = por %p99, %p100
      %p102 = scmp.ne.s32.totalorder %s93, %s94
      %p103 = scmp.eq.s32.totalorder %s20, 0
      %p104 = por %p102, %p103
      %p105 = scmp.ne.s32.totalorder %s93, %s94
      %p106 = scmp.eq.s32.totalorder %s21, 3
      %p107 = por %p105, %p106
      %p109 = scmp.ne.s32.totalorder %s94, %s108
      %p110 = scmp.eq.s32.totalorder %s21, 0
      %p111 = por %p109, %p110
      %s113 = sadd.s32 %s112, 1
      %p116 = scmp.eq.s32.totalorder %s15, 3
      %p117 = scmp.ne.s32.totalorder %s112, %s114
      %p118 = scmp.eq.s32.totalorder %s15, 0
      %p119 = por %p117, %p118
      %p120 = scmp.ne.s32.totalorder %s112, %s114
      %p121 = scmp.eq.s32.totalorder %s20, 3
      %p122 = por %p120, %p121
      %p123 = scmp.ne.s32.totalorder %s114, %s115
      %p124 = scmp.eq.s32.totalorder %s20, 0
      %p125 = por %p123, %p124
      %p126 = scmp.ne.s32.totalorder %s114, %s115
      %p127 = scmp.eq.s32.totalorder %s21, 3
      %p128 = por %p126, %p127
      %p130 = scmp.ne.s32.totalorder %s115, %s129
      %p131 = scmp.eq.s32.totalorder %s21, 0
      %p132 = por %p130, %p131
      %s134 = sadd.s32 %s133, 1
      %p137 = scmp.eq.s32.totalorder %s15, 3
      %p138 = scmp.ne.s32.totalorder %s133, %s135
      %p139 = scmp.eq.s32.totalorder %s15, 0
      %p140 = por %p138, %p139
      %p141 = scmp.ne.s32.totalorder %s133, %s135
      %p142 = scmp.eq.s32.totalorder %s20, 3
      %p143 = por %p141, %p142
      %p144 = scmp.ne.s32.totalorder %s135, %s136
      %p145 = scmp.eq.s32.totalorder %s20, 0
      %p146 = por %p144, %p145
      %p147 = scmp.ne.s32.totalorder %s135, %s136
      %p148 = scmp.eq.s32.totalorder %s21, 3
      %p149 = por %p147, %p148
      %p151 = scmp.ne.s32.totalorder %s136, %s150
      %p152 = scmp.eq.s32.totalorder %s21, 0
      %p153 = por %p151, %p152
      %s154 = ssub.s32 %s15, %s22
      %p155 = scmp.eq.s32.totalorder %s154, 0
      %s157 = sadd.s32 %s156, 1
      %s158 = scalar_select %p155, %s156, %s157
      %p161 = pneg %p155
      %p162 = scmp.eq.s32.totalorder %s15, 3
      %p163 = por %p161, %p162
      %p164 = scmp.ne.s32.totalorder %s156, %s159
      %p165 = scmp.eq.s32.totalorder %s15, 0
      %p166 = por %p164, %p165
      %p167 = scmp.ne.s32.totalorder %s156, %s159
      %p168 = scmp.eq.s32.totalorder %s20, 3
      %p169 = por %p167, %p168
      %p170 = scmp.ne.s32.totalorder %s159, %s160
      %p171 = scmp.eq.s32.totalorder %s20, 0
      %p172 = por %p170, %p171
      %p173 = scmp.ne.s32.totalorder %s159, %s160
      %p174 = scmp.eq.s32.totalorder %s21, 3
      %p175 = por %p173, %p174
      %p177 = scmp.ne.s32.totalorder %s160, %s176
      %p178 = scmp.eq.s32.totalorder %s21, 0
      %p179 = por %p177, %p178
      %p180 = scmp.le.s32.totalorder 1, %s15
      %p181 = scmp.lt.s32.totalorder %s15, 5
      %p182 = pnand %p180, %p181
      %p183 = pneg %p182
      // Predicated region
      $region9: #{feature_extraction_denseasp.7} parent=5 // pred_check
        _
      $region10: #{feature_extraction_denseasp.7} parent=5 // pred_check_branch
        %185 = sbr.rel (%p182) target = $region12
      $region11: #{feature_extraction_denseasp.7} parent=5 // pred_region
        %s186 = ssub.s32 %s15, 1
        // Predicated region
        $region13: #{feature_extraction_denseasp.7} parent=11 // pred_check
          %p187 = pneg %p62
        $region14: #{feature_extraction_denseasp.7} parent=11 // pred_check_branch
          %189 = sbr.rel (%p187) target = $region16
        $region15: #{feature_extraction_denseasp.7} parent=11 // pred_region
          _
        $region16: #{feature_extraction_denseasp.7} parent=11 // pred_fallthru
          _
        // Predicated region
        $region17: #{feature_extraction_denseasp.7} parent=11 // pred_check
          %p190 = pneg %p83
        $region18: #{feature_extraction_denseasp.7} parent=11 // pred_check_branch
          %192 = sbr.rel (%p190) target = $region20
        $region19: #{feature_extraction_denseasp.7} parent=11 // pred_region
          _
        $region20: #{feature_extraction_denseasp.7} parent=11 // pred_fallthru
          _
        // Predicated region
        $region21: #{feature_extraction_denseasp.7} parent=11 // pred_check
          %p193 = pneg %p104
        $region22: #{feature_extraction_denseasp.7} parent=11 // pred_check_branch
          %195 = sbr.rel (%p193) target = $region24
        $region23: #{feature_extraction_denseasp.7} parent=11 // pred_region
          _
        $region24: #{feature_extraction_denseasp.7} parent=11 // pred_fallthru
          _
        // Predicated region
        $region25: #{feature_extraction_denseasp.7} parent=11 // pred_check
          %p196 = pneg %p125
        $region26: #{feature_extraction_denseasp.7} parent=11 // pred_check_branch
          %198 = sbr.rel (%p196) target = $region28
        $region27: #{feature_extraction_denseasp.7} parent=11 // pred_region
          _
        $region28: #{feature_extraction_denseasp.7} parent=11 // pred_fallthru
          _
        // Predicated region
        $region29: #{feature_extraction_denseasp.7} parent=11 // pred_check
          %p199 = pneg %p146
        $region30: #{feature_extraction_denseasp.7} parent=11 // pred_check_branch
          %201 = sbr.rel (%p199) target = $region32
        $region31: #{feature_extraction_denseasp.7} parent=11 // pred_region
          _
        $region32: #{feature_extraction_denseasp.7} parent=11 // pred_fallthru
          _
      $region12: #{feature_extraction_denseasp.7} parent=5 // pred_fallthru
        _
      %p202 = scmp.lt.s32.totalorder %s15, 4
      // Predicated region
      $region33: #{feature_extraction_denseasp.7} parent=5 // pred_check
        %p203 = pneg %p202
      $region34: #{feature_extraction_denseasp.7} parent=5 // pred_check_branch
        %205 = sbr.rel (%p203) target = $region36
      $region35: #{feature_extraction_denseasp.7} parent=5 // pred_region
        // Predicated region
        $region37: #{feature_extraction_denseasp.7} parent=35 // pred_check
          %p206 = pneg %p35
        $region38: #{feature_extraction_denseasp.7} parent=35 // pred_check_branch
          %208 = sbr.rel (%p206) target = $region40
        $region39: #{feature_extraction_denseasp.7} parent=35 // pred_region
          %s209 = smul.u32 16, %s15
          %p210 = scmp.lt.s32.totalorder %s209, 63
          %s211 = scalar_select %p210, %s209, 63
          %s212 = smul.addr %s211, 4
          %s213 = smul.addr %s212, 8
          %s214 = scalar_lea.vmem %s0, %s213
          %s215 = smul.u32 16, %s15
        $region40: #{feature_extraction_denseasp.7} parent=35 // pred_fallthru
          _
      $region36: #{feature_extraction_denseasp.7} parent=5 // pred_fallthru
        _
      %p216 = scmp.le.s32.totalorder 1, %s15
      %p217 = scmp.lt.s32.totalorder %s15, 5
      %p218 = pnand %p216, %p217
      %p219 = pneg %p218
      // Predicated region
      $region41: #{feature_extraction_denseasp.7} parent=5 // pred_check
        _
      $region42: #{feature_extraction_denseasp.7} parent=5 // pred_check_branch
        %221 = sbr.rel (%p218) target = $region44
      $region43: #{feature_extraction_denseasp.7} parent=5 // pred_region
        %s222 = ssub.s32 %s15, 1
        %s223 = smul.u32 16, %s20
        %p224 = scmp.lt.s32.totalorder %s223, 63
        %s225 = scalar_select %p224, %s223, 63
        %s226 = smul.addr %s225, 4
        %s227 = smul.addr %s226, 8
        %s228 = scalar_lea.vmem %s0, %s227
        %p229 = pneg %p41
        %p230 = pneg %p38
        %p231 = pneg %p62
        %p232 = pneg %p59
        %p233 = pneg %p83
        %p234 = pneg %p80
        %p235 = pneg %p104
        %p236 = pneg %p101
        %p237 = pneg %p125
        %p238 = pneg %p122
        %p239 = pneg %p146
        %p240 = pneg %p143
        %p241 = pneg %p172
        %p242 = pneg %p169
        %s243 = sand.u32 %s159, 1
        %s244 = scalar_lea.sflag [#allocation3], %s243
        %s245 = sand.u32 %s159, 1
        %s246 = smul.addr %s245, 128
        %s247 = scalar_lea.vmem [#allocation2], %s246
        %s248 = smul.u32 16, %s20
        %p249 = scmp.lt.s32.totalorder %s248, 63
        %s250 = scalar_select %p249, %s248, 63
        %s251 = smul.addr %s250, 4
        %s252 = smul.addr %s251, 8
        %s253 = scalar_lea.vmem %s0, %s252
        %s254 = smul.u32 16, %s20
        %s255 = smul.u32 16, %s20
        %v256 = vld [vmem:[%s253] sm:$0xff]
        %v257 = vld [vmem:[%s253 + $0x8] sm:$0xff]
        %v258 = vld [vmem:[%s253 + $0x10] sm:$0xff]
        %v259 = vld [vmem:[%s253 + $0x18] sm:$0xff]
        %v260 = vld [vmem:[%s253 + $0x20] sm:$0xff]
        %v261 = vld [vmem:[%s253 + $0x28] sm:$0xff]
        %v262 = vld [vmem:[%s253 + $0x30] sm:$0xff]
        %v263 = vld [vmem:[%s253 + $0x38] sm:$0xff]
        %v264 = vld [vmem:[%s253 + $0x40] sm:$0xff]
        %v265 = vld [vmem:[%s253 + $0x48] sm:$0xff]
        %v266 = vld [vmem:[%s253 + $0x50] sm:$0xff]
        %v267 = vld [vmem:[%s253 + $0x58] sm:$0xff]
        %v268 = vld [vmem:[%s253 + $0x60] sm:$0xff]
        %v269 = vld [vmem:[%s253 + $0x68] sm:$0xff]
        %v270 = vld [vmem:[%s253 + $0x70] sm:$0xff]
        %v271 = vld [vmem:[%s253 + $0x78] sm:$0xff]
        %v272 = vld [vmem:[%s253 + $0x80] sm:$0xff]
        %v273 = vld [vmem:[%s253 + $0x88] sm:$0xff]
        %v274 = vld [vmem:[%s253 + $0x90] sm:$0xff]
        %v275 = vld [vmem:[%s253 + $0x98] sm:$0xff]
        %v276 = vld [vmem:[%s253 + $0xa0] sm:$0xff]
        %v277 = vld [vmem:[%s253 + $0xa8] sm:$0xff]
        %v278 = vld [vmem:[%s253 + $0xb0] sm:$0xff]
        %v279 = vld [vmem:[%s253 + $0xb8] sm:$0xff]
        %v280 = vld [vmem:[%s253 + $0xc0] sm:$0xff]
        %v281 = vld [vmem:[%s253 + $0xc8] sm:$0xff]
        %v282 = vld [vmem:[%s253 + $0xd0] sm:$0xff]
        %v283 = vld [vmem:[%s253 + $0xd8] sm:$0xff]
        %v284 = vld [vmem:[%s253 + $0xe0] sm:$0xff]
        %v285 = vld [vmem:[%s253 + $0xe8] sm:$0xff]
        %v286 = vld [vmem:[%s253 + $0xf0] sm:$0xff]
        %v287 = vld [vmem:[%s253 + $0xf8] sm:$0xff]
        %v288 = vld [vmem:[%s253 + $0x100] sm:$0xff]
        %v289 = vld [vmem:[%s253 + $0x108] sm:$0xff]
        %v290 = vld [vmem:[%s253 + $0x110] sm:$0xff]
        %v291 = vld [vmem:[%s253 + $0x118] sm:$0xff]
        %v292 = vld [vmem:[%s253 + $0x120] sm:$0xff]
        %v293 = vld [vmem:[%s253 + $0x128] sm:$0xff]
        %v294 = vld [vmem:[%s253 + $0x130] sm:$0xff]
        %v295 = vld [vmem:[%s253 + $0x138] sm:$0xff]
        %v296 = vld [vmem:[%s253 + $0x140] sm:$0xff]
        %v297 = vld [vmem:[%s253 + $0x148] sm:$0xff]
        %v298 = vld [vmem:[%s253 + $0x150] sm:$0xff]
        %v299 = vld [vmem:[%s253 + $0x158] sm:$0xff]
        %v300 = vld [vmem:[%s253 + $0x160] sm:$0xff]
        %v301 = vld [vmem:[%s253 + $0x168] sm:$0xff]
        %v302 = vld [vmem:[%s253 + $0x170] sm:$0xff]
        %v303 = vld [vmem:[%s253 + $0x178] sm:$0xff]
        %v304 = vld [vmem:[%s253 + $0x180] sm:$0xff]
        %v305 = vld [vmem:[%s253 + $0x188] sm:$0xff]
        %v306 = vld [vmem:[%s253 + $0x190] sm:$0xff]
        %v307 = vld [vmem:[%s253 + $0x198] sm:$0xff]
        %v308 = vld [vmem:[%s253 + $0x1a0] sm:$0xff]
        %v309 = vld [vmem:[%s253 + $0x1a8] sm:$0xff]
        %v310 = vld [vmem:[%s253 + $0x1b0] sm:$0xff]
        %v311 = vld [vmem:[%s253 + $0x1b8] sm:$0xff]
        %v312 = vld [vmem:[%s253 + $0x1c0] sm:$0xff]
        %v313 = vld [vmem:[%s253 + $0x1c8] sm:$0xff]
        %v314 = vld [vmem:[%s253 + $0x1d0] sm:$0xff]
        %v315 = vld [vmem:[%s253 + $0x1d8] sm:$0xff]
        %v316 = vld [vmem:[%s253 + $0x1e0] sm:$0xff]
        %v317 = vld [vmem:[%s253 + $0x1e8] sm:$0xff]
        %v318 = vld [vmem:[%s253 + $0x1f0] sm:$0xff]
        %v319 = vld [vmem:[%s253 + $0x1f8] sm:$0xff]
        %v320 = vld [vmem:[%s2] sm:$0xf]
        %v322 = vperm.slane %v320, 0
        %v323 = vperm.slane %v320, 1
        %v324 = vperm.slane %v320, 2
        %v325 = vperm.slane %v320, 3
        %v330 = vmul.f32 %v256, %v322
        %v331 = vmul.f32 %v257, %v323
        %v332 = vmul.f32 %v258, %v324
        %v333 = vmul.f32 %v259, %v325
        %v334 = vmul.f32 %v260, %v322
        %v335 = vmul.f32 %v261, %v323
        %v336 = vmul.f32 %v262, %v324
        %v337 = vmul.f32 %v263, %v325
        %v338 = vmul.f32 %v264, %v322
        %v339 = vmul.f32 %v265, %v323
        %v340 = vmul.f32 %v266, %v324
        %v341 = vmul.f32 %v267, %v325
        %v342 = vmul.f32 %v268, %v322
        %v343 = vmul.f32 %v269, %v323
        %v344 = vmul.f32 %v270, %v324
        %v345 = vmul.f32 %v271, %v325
        %v346 = vmul.f32 %v272, %v322
        %v347 = vmul.f32 %v273, %v323
        %v348 = vmul.f32 %v274, %v324
        %v349 = vmul.f32 %v275, %v325
        %v350 = vmul.f32 %v276, %v322
        %v351 = vmul.f32 %v277, %v323
        %v352 = vmul.f32 %v278, %v324
        %v353 = vmul.f32 %v279, %v325
        %v354 = vmul.f32 %v280, %v322
        %v355 = vmul.f32 %v281, %v323
        %v356 = vmul.f32 %v282, %v324
        %v357 = vmul.f32 %v283, %v325
        %v358 = vmul.f32 %v284, %v322
        %v359 = vmul.f32 %v285, %v323
        %v360 = vmul.f32 %v286, %v324
        %v361 = vmul.f32 %v287, %v325
        %v362 = vmul.f32 %v288, %v322
        %v363 = vmul.f32 %v289, %v323
        %v364 = vmul.f32 %v290, %v324
        %v365 = vmul.f32 %v291, %v325
        %v366 = vmul.f32 %v292, %v322
        %v367 = vmul.f32 %v293, %v323
        %v368 = vmul.f32 %v294, %v324
        %v369 = vmul.f32 %v295, %v325
        %v370 = vmul.f32 %v296, %v322
        %v371 = vmul.f32 %v297, %v323
        %v372 = vmul.f32 %v298, %v324
        %v373 = vmul.f32 %v299, %v325
        %v374 = vmul.f32 %v300, %v322
        %v375 = vmul.f32 %v301, %v323
        %v376 = vmul.f32 %v302, %v324
        %v377 = vmul.f32 %v303, %v325
        %v378 = vmul.f32 %v304, %v322
        %v379 = vmul.f32 %v305, %v323
        %v380 = vmul.f32 %v306, %v324
        %v381 = vmul.f32 %v307, %v325
        %v382 = vmul.f32 %v308, %v322
        %v383 = vmul.f32 %v309, %v323
        %v384 = vmul.f32 %v310, %v324
        %v385 = vmul.f32 %v311, %v325
        %v386 = vmul.f32 %v312, %v322
        %v387 = vmul.f32 %v313, %v323
        %v388 = vmul.f32 %v314, %v324
        %v389 = vmul.f32 %v315, %v325
        %v390 = vmul.f32 %v316, %v322
        %v391 = vmul.f32 %v317, %v323
        %v392 = vmul.f32 %v318, %v324
        %v393 = vmul.f32 %v319, %v325
        %v394 = vld [vmem:[%s3] sm:$0xf]
        %v396 = vperm.slane %v394, 0
        %v397 = vperm.slane %v394, 1
        %v398 = vperm.slane %v394, 2
        %v399 = vperm.slane %v394, 3
        %v404 = vadd.f32 %v330, %v396
        %v405 = vadd.f32 %v331, %v397
        %v406 = vadd.f32 %v332, %v398
        %v407 = vadd.f32 %v333, %v399
        %v408 = vadd.f32 %v334, %v396
        %v409 = vadd.f32 %v335, %v397
        %v410 = vadd.f32 %v336, %v398
        %v411 = vadd.f32 %v337, %v399
        %v412 = vadd.f32 %v338, %v396
        %v413 = vadd.f32 %v339, %v397
        %v414 = vadd.f32 %v340, %v398
        %v415 = vadd.f32 %v341, %v399
        %v416 = vadd.f32 %v342, %v396
        %v417 = vadd.f32 %v343, %v397
        %v418 = vadd.f32 %v344, %v398
        %v419 = vadd.f32 %v345, %v399
        %v420 = vadd.f32 %v346, %v396
        %v421 = vadd.f32 %v347, %v397
        %v422 = vadd.f32 %v348, %v398
        %v423 = vadd.f32 %v349, %v399
        %v424 = vadd.f32 %v350, %v396
        %v425 = vadd.f32 %v351, %v397
        %v426 = vadd.f32 %v352, %v398
        %v427 = vadd.f32 %v353, %v399
        %v428 = vadd.f32 %v354, %v396
        %v429 = vadd.f32 %v355, %v397
        %v430 = vadd.f32 %v356, %v398
        %v431 = vadd.f32 %v357, %v399
        %v432 = vadd.f32 %v358, %v396
        %v433 = vadd.f32 %v359, %v397
        %v434 = vadd.f32 %v360, %v398
        %v435 = vadd.f32 %v361, %v399
        %v436 = vadd.f32 %v362, %v396
        %v437 = vadd.f32 %v363, %v397
        %v438 = vadd.f32 %v364, %v398
        %v439 = vadd.f32 %v365, %v399
        %v440 = vadd.f32 %v366, %v396
        %v441 = vadd.f32 %v367, %v397
        %v442 = vadd.f32 %v368, %v398
        %v443 = vadd.f32 %v369, %v399
        %v444 = vadd.f32 %v370, %v396
        %v445 = vadd.f32 %v371, %v397
        %v446 = vadd.f32 %v372, %v398
        %v447 = vadd.f32 %v373, %v399
        %v448 = vadd.f32 %v374, %v396
        %v449 = vadd.f32 %v375, %v397
        %v450 = vadd.f32 %v376, %v398
        %v451 = vadd.f32 %v377, %v399
        %v452 = vadd.f32 %v378, %v396
        %v453 = vadd.f32 %v379, %v397
        %v454 = vadd.f32 %v380, %v398
        %v455 = vadd.f32 %v381, %v399
        %v456 = vadd.f32 %v382, %v396
        %v457 = vadd.f32 %v383, %v397
        %v458 = vadd.f32 %v384, %v398
        %v459 = vadd.f32 %v385, %v399
        %v460 = vadd.f32 %v386, %v396
        %v461 = vadd.f32 %v387, %v397
        %v462 = vadd.f32 %v388, %v398
        %v463 = vadd.f32 %v389, %v399
        %v464 = vadd.f32 %v390, %v396
        %v465 = vadd.f32 %v391, %v397
        %v466 = vadd.f32 %v392, %v398
        %v467 = vadd.f32 %v393, %v399
        %v468 = vmax.f32 %v404, 0.0
        %v469 = vmax.f32 %v405, 0.0
        %v470 = vmax.f32 %v406, 0.0
        %v471 = vmax.f32 %v407, 0.0
        %v472 = vmax.f32 %v408, 0.0
        %v473 = vmax.f32 %v409, 0.0
        %v474 = vmax.f32 %v410, 0.0
        %v475 = vmax.f32 %v411, 0.0
        %v476 = vmax.f32 %v412, 0.0
        %v477 = vmax.f32 %v413, 0.0
        %v478 = vmax.f32 %v414, 0.0
        %v479 = vmax.f32 %v415, 0.0
        %v480 = vmax.f32 %v416, 0.0
        %v481 = vmax.f32 %v417, 0.0
        %v482 = vmax.f32 %v418, 0.0
        %v483 = vmax.f32 %v419, 0.0
        %v484 = vmax.f32 %v420, 0.0
        %v485 = vmax.f32 %v421, 0.0
        %v486 = vmax.f32 %v422, 0.0
        %v487 = vmax.f32 %v423, 0.0
        %v488 = vmax.f32 %v424, 0.0
        %v489 = vmax.f32 %v425, 0.0
        %v490 = vmax.f32 %v426, 0.0
        %v491 = vmax.f32 %v427, 0.0
        %v492 = vmax.f32 %v428, 0.0
        %v493 = vmax.f32 %v429, 0.0
        %v494 = vmax.f32 %v430, 0.0
        %v495 = vmax.f32 %v431, 0.0
        %v496 = vmax.f32 %v432, 0.0
        %v497 = vmax.f32 %v433, 0.0
        %v498 = vmax.f32 %v434, 0.0
        %v499 = vmax.f32 %v435, 0.0
        %v500 = vmax.f32 %v436, 0.0
        %v501 = vmax.f32 %v437, 0.0
        %v502 = vmax.f32 %v438, 0.0
        %v503 = vmax.f32 %v439, 0.0
        %v504 = vmax.f32 %v440, 0.0
        %v505 = vmax.f32 %v441, 0.0
        %v506 = vmax.f32 %v442, 0.0
        %v507 = vmax.f32 %v443, 0.0
        %v508 = vmax.f32 %v444, 0.0
        %v509 = vmax.f32 %v445, 0.0
        %v510 = vmax.f32 %v446, 0.0
        %v511 = vmax.f32 %v447, 0.0
        %v512 = vmax.f32 %v448, 0.0
        %v513 = vmax.f32 %v449, 0.0
        %v514 = vmax.f32 %v450, 0.0
        %v515 = vmax.f32 %v451, 0.0
        %v516 = vmax.f32 %v452, 0.0
        %v517 = vmax.f32 %v453, 0.0
        %v518 = vmax.f32 %v454, 0.0
        %v519 = vmax.f32 %v455, 0.0
        %v520 = vmax.f32 %v456, 0.0
        %v521 = vmax.f32 %v457, 0.0
        %v522 = vmax.f32 %v458, 0.0
        %v523 = vmax.f32 %v459, 0.0
        %v524 = vmax.f32 %v460, 0.0
        %v525 = vmax.f32 %v461, 0.0
        %v526 = vmax.f32 %v462, 0.0
        %v527 = vmax.f32 %v463, 0.0
        %v528 = vmax.f32 %v464, 0.0
        %v529 = vmax.f32 %v465, 0.0
        %v530 = vmax.f32 %v466, 0.0
        %v531 = vmax.f32 %v467, 0.0
        %v532 = vld [vmem:[%s1] sm:$0xff]
        %v533 = vld [vmem:[%s1 + $0x8] sm:$0xff]
        %v534 = vld [vmem:[%s1 + $0x10] sm:$0xff]
        %v535 = vld [vmem:[%s1 + $0x18] sm:$0xff]
        %v536 = vld [vmem:[%s1 + $0x20] sm:$0xff]
        %v537 = vld [vmem:[%s1 + $0x28] sm:$0xff]
        %v538 = vld [vmem:[%s1 + $0x30] sm:$0xff]
        %v539 = vld [vmem:[%s1 + $0x38] sm:$0xff]
        %v540 = vld [vmem:[%s1 + $0x40] sm:$0xff]
        %v541 = vld [vmem:[%s1 + $0x48] sm:$0xff]
        %v542 = vld [vmem:[%s1 + $0x50] sm:$0xff]
        %v543 = vld [vmem:[%s1 + $0x58] sm:$0xff]
        %v544 = vld [vmem:[%s1 + $0x60] sm:$0xff]
        %v545 = vld [vmem:[%s1 + $0x68] sm:$0xff]
        %v546 = vld [vmem:[%s1 + $0x70] sm:$0xff]
        %v547 = vld [vmem:[%s1 + $0x78] sm:$0xff]
        %v548 = vld [vmem:[%s1 + $0x80] sm:$0xff]
        %v549 = vld [vmem:[%s1 + $0x88] sm:$0xff]
        %v550 = vld [vmem:[%s1 + $0x90] sm:$0xff]
        %v551 = vld [vmem:[%s1 + $0x98] sm:$0xff]
        %v552 = vld [vmem:[%s1 + $0xa0] sm:$0xff]
        %v553 = vld [vmem:[%s1 + $0xa8] sm:$0xff]
        %v554 = vld [vmem:[%s1 + $0xb0] sm:$0xff]
        %v555 = vld [vmem:[%s1 + $0xb8] sm:$0xff]
        %v556 = vld [vmem:[%s1 + $0xc0] sm:$0xff]
        %v557 = vld [vmem:[%s1 + $0xc8] sm:$0xff]
        %v558 = vld [vmem:[%s1 + $0xd0] sm:$0xff]
        %v559 = vld [vmem:[%s1 + $0xd8] sm:$0xff]
        %v560 = vld [vmem:[%s1 + $0xe0] sm:$0xff]
        %v561 = vld [vmem:[%s1 + $0xe8] sm:$0xff]
        %v562 = vld [vmem:[%s1 + $0xf0] sm:$0xff]
        %v563 = vld [vmem:[%s1 + $0xf8] sm:$0xff]
        %v564 = vld [vmem:[%s1 + $0x100] sm:$0xff]
        %v565 = vld [vmem:[%s1 + $0x108] sm:$0xff]
        %v566 = vld [vmem:[%s1 + $0x110] sm:$0xff]
        %v567 = vld [vmem:[%s1 + $0x118] sm:$0xff]
        %v568 = vld [vmem:[%s1 + $0x120] sm:$0xff]
        %v569 = vld [vmem:[%s1 + $0x128] sm:$0xff]
        %v570 = vld [vmem:[%s1 + $0x130] sm:$0xff]
        %v571 = vld [vmem:[%s1 + $0x138] sm:$0xff]
        %v572 = vld [vmem:[%s1 + $0x140] sm:$0xff]
        %v573 = vld [vmem:[%s1 + $0x148] sm:$0xff]
        %v574 = vld [vmem:[%s1 + $0x150] sm:$0xff]
        %v575 = vld [vmem:[%s1 + $0x158] sm:$0xff]
        %v576 = vld [vmem:[%s1 + $0x160] sm:$0xff]
        %v577 = vld [vmem:[%s1 + $0x168] sm:$0xff]
        %v578 = vld [vmem:[%s1 + $0x170] sm:$0xff]
        %v579 = vld [vmem:[%s1 + $0x178] sm:$0xff]
        %v580 = vld [vmem:[%s1 + $0x180] sm:$0xff]
        %v581 = vld [vmem:[%s1 + $0x188] sm:$0xff]
        %v582 = vld [vmem:[%s1 + $0x190] sm:$0xff]
        %v583 = vld [vmem:[%s1 + $0x198] sm:$0xff]
        %v584 = vld [vmem:[%s1 + $0x1a0] sm:$0xff]
        %v585 = vld [vmem:[%s1 + $0x1a8] sm:$0xff]
        %vm586 = vcmask 392192
        %v588 = vsel %vm586, %v471, 0
        %v591 = vsel %vm586, %v475, 0
        %v594 = vsel %vm586, %v479, 0
        %v597 = vsel %vm586, %v483, 0
        %v600 = vsel %vm586, %v487, 0
        %v603 = vsel %vm586, %v491, 0
        %v606 = vsel %vm586, %v495, 0
        %v609 = vsel %vm586, %v499, 0
        %v612 = vsel %vm586, %v503, 0
        %v615 = vsel %vm586, %v507, 0
        %v618 = vsel %vm586, %v511, 0
        %v621 = vsel %vm586, %v515, 0
        %v624 = vsel %vm586, %v519, 0
        %v627 = vsel %vm586, %v523, 0
        %v630 = vsel %vm586, %v527, 0
        %v633 = vsel %vm586, %v531, 0
        %635 = vmatpush.msra.mxu0 %v547
        %636 = vmatpush.msra.mxu0 %v546
        %637 = vmatpush.msra.mxu0 %v545
        %638 = vmatpush.msra.mxu0 %v544
        %639 = vmatpush.msra.mxu0 %v543
        %640 = vmatpush.msra.mxu0 %v542
        %641 = vmatpush.msra.mxu0 %v541
        %642 = vmatpush.msra.mxu0 %v540
        %643 = vmatpush.msra.mxu0 %v539
        %644 = vmatpush.msra.mxu0 %v538
        %645 = vmatpush.msra.mxu0 %v537
        %646 = vmatpush.msra.mxu0 %v536
        %647 = vmatpush.msra.mxu0 %v535
        %648 = vmatpush.msra.mxu0 %v534
        %649 = vmatpush.msra.mxu0 %v533
        %650 = vmatpush.msra.mxu0 %v532
        %651 = vmatmul.f32.gmra.mxu0 %v468
        %v652 = vpop.f32.mrf.mxu0
        %v653 = vadd.f32 0.0, %v652
        %654 = vmatmul.f32.gmra.mxu0 %v472
        %v655 = vpop.f32.mrf.mxu0
        %v656 = vadd.f32 0.0, %v655
        %657 = vmatmul.f32.gmra.mxu0 %v476
        %v658 = vpop.f32.mrf.mxu0
        %v659 = vadd.f32 0.0, %v658
        %660 = vmatmul.f32.gmra.mxu0 %v480
        %v661 = vpop.f32.mrf.mxu0
        %v662 = vadd.f32 0.0, %v661
        %663 = vmatmul.f32.gmra.mxu0 %v484
        %v664 = vpop.f32.mrf.mxu0
        %v665 = vadd.f32 0.0, %v664
        %666 = vmatmul.f32.gmra.mxu0 %v488
        %v667 = vpop.f32.mrf.mxu0
        %v668 = vadd.f32 0.0, %v667
        %669 = vmatmul.f32.gmra.mxu0 %v492
        %v670 = vpop.f32.mrf.mxu0
        %v671 = vadd.f32 0.0, %v670
        %672 = vmatmul.f32.gmra.mxu0 %v496
        %v673 = vpop.f32.mrf.mxu0
        %v674 = vadd.f32 0.0, %v673
        %675 = vmatmul.f32.gmra.mxu0 %v500
        %v676 = vpop.f32.mrf.mxu0
        %v677 = vadd.f32 0.0, %v676
        %678 = vmatmul.f32.gmra.mxu0 %v504
        %v679 = vpop.f32.mrf.mxu0
        %v680 = vadd.f32 0.0, %v679
        %681 = vmatmul.f32.gmra.mxu0 %v508
        %v682 = vpop.f32.mrf.mxu0
        %v683 = vadd.f32 0.0, %v682
        %684 = vmatmul.f32.gmra.mxu0 %v512
        %v685 = vpop.f32.mrf.mxu0
        %v686 = vadd.f32 0.0, %v685
        %687 = vmatmul.f32.gmra.mxu0 %v516
        %v688 = vpop.f32.mrf.mxu0
        %v689 = vadd.f32 0.0, %v688
        %690 = vmatmul.f32.gmra.mxu0 %v520
        %v691 = vpop.f32.mrf.mxu0
        %v692 = vadd.f32 0.0, %v691
        %693 = vmatmul.f32.gmra.mxu0 %v524
        %v694 = vpop.f32.mrf.mxu0
        %v695 = vadd.f32 0.0, %v694
        %696 = vmatmul.f32.gmra.mxu0 %v528
        %v697 = vpop.f32.mrf.mxu0
        %v698 = vadd.f32 0.0, %v697
        %699 = vdwg.mxu0
        %700 = vmatpush.msra.mxu0 %v563
        %701 = vmatpush.msra.mxu0 %v562
        %702 = vmatpush.msra.mxu0 %v561
        %703 = vmatpush.msra.mxu0 %v560
        %704 = vmatpush.msra.mxu0 %v559
        %705 = vmatpush.msra.mxu0 %v558
        %706 = vmatpush.msra.mxu0 %v557
        %707 = vmatpush.msra.mxu0 %v556
        %708 = vmatpush.msra.mxu0 %v555
        %709 = vmatpush.msra.mxu0 %v554
        %710 = vmatpush.msra.mxu0 %v553
        %711 = vmatpush.msra.mxu0 %v552
        %712 = vmatpush.msra.mxu0 %v551
        %713 = vmatpush.msra.mxu0 %v550
        %714 = vmatpush.msra.mxu0 %v549
        %715 = vmatpush.msra.mxu0 %v548
        %716 = vmatmul.f32.gmra.mxu0 %v469
        %v717 = vpop.f32.mrf.mxu0
        %v718 = vadd.f32 %v653, %v717
        %719 = vmatmul.f32.gmra.mxu0 %v473
        %v720 = vpop.f32.mrf.mxu0
        %v721 = vadd.f32 %v656, %v720
        %722 = vmatmul.f32.gmra.mxu0 %v477
        %v723 = vpop.f32.mrf.mxu0
        %v724 = vadd.f32 %v659, %v723
        %725 = vmatmul.f32.gmra.mxu0 %v481
        %v726 = vpop.f32.mrf.mxu0
        %v727 = vadd.f32 %v662, %v726
        %728 = vmatmul.f32.gmra.mxu0 %v485
        %v729 = vpop.f32.mrf.mxu0
        %v730 = vadd.f32 %v665, %v729
        %731 = vmatmul.f32.gmra.mxu0 %v489
        %v732 = vpop.f32.mrf.mxu0
        %v733 = vadd.f32 %v668, %v732
        %734 = vmatmul.f32.gmra.mxu0 %v493
        %v735 = vpop.f32.mrf.mxu0
        %v736 = vadd.f32 %v671, %v735
        %737 = vmatmul.f32.gmra.mxu0 %v497
        %v738 = vpop.f32.mrf.mxu0
        %v739 = vadd.f32 %v674, %v738
        %740 = vmatmul.f32.gmra.mxu0 %v501
        %v741 = vpop.f32.mrf.mxu0
        %v742 = vadd.f32 %v677, %v741
        %743 = vmatmul.f32.gmra.mxu0 %v505
        %v744 = vpop.f32.mrf.mxu0
        %v745 = vadd.f32 %v680, %v744
        %746 = vmatmul.f32.gmra.mxu0 %v509
        %v747 = vpop.f32.mrf.mxu0
        %v748 = vadd.f32 %v683, %v747
        %749 = vmatmul.f32.gmra.mxu0 %v513
        %v750 = vpop.f32.mrf.mxu0
        %v751 = vadd.f32 %v686, %v750
        %752 = vmatmul.f32.gmra.mxu0 %v517
        %v753 = vpop.f32.mrf.mxu0
        %v754 = vadd.f32 %v689, %v753
        %755 = vmatmul.f32.gmra.mxu0 %v521
        %v756 = vpop.f32.mrf.mxu0
        %v757 = vadd.f32 %v692, %v756
        %758 = vmatmul.f32.gmra.mxu0 %v525
        %v759 = vpop.f32.mrf.mxu0
        %v760 = vadd.f32 %v695, %v759
        %761 = vmatmul.f32.gmra.mxu0 %v529
        %v762 = vpop.f32.mrf.mxu0
        %v763 = vadd.f32 %v698, %v762
        %764 = vdwg.mxu0
        %765 = vmatpush.msra.mxu0 %v579
        %766 = vmatpush.msra.mxu0 %v578
        %767 = vmatpush.msra.mxu0 %v577
        %768 = vmatpush.msra.mxu0 %v576
        %769 = vmatpush.msra.mxu0 %v575
        %770 = vmatpush.msra.mxu0 %v574
        %771 = vmatpush.msra.mxu0 %v573
        %772 = vmatpush.msra.mxu0 %v572
        %773 = vmatpush.msra.mxu0 %v571
        %774 = vmatpush.msra.mxu0 %v570
        %775 = vmatpush.msra.mxu0 %v569
        %776 = vmatpush.msra.mxu0 %v568
        %777 = vmatpush.msra.mxu0 %v567
        %778 = vmatpush.msra.mxu0 %v566
        %779 = vmatpush.msra.mxu0 %v565
        %780 = vmatpush.msra.mxu0 %v564
        %781 = vmatmul.f32.gmra.mxu0 %v470
        %v782 = vpop.f32.mrf.mxu0
        %v783 = vadd.f32 %v718, %v782
        %784 = vmatmul.f32.gmra.mxu0 %v474
        %v785 = vpop.f32.mrf.mxu0
        %v786 = vadd.f32 %v721, %v785
        %787 = vmatmul.f32.gmra.mxu0 %v478
        %v788 = vpop.f32.mrf.mxu0
        %v789 = vadd.f32 %v724, %v788
        %790 = vmatmul.f32.gmra.mxu0 %v482
        %v791 = vpop.f32.mrf.mxu0
        %v792 = vadd.f32 %v727, %v791
        %793 = vmatmul.f32.gmra.mxu0 %v486
        %v794 = vpop.f32.mrf.mxu0
        %v795 = vadd.f32 %v730, %v794
        %796 = vmatmul.f32.gmra.mxu0 %v490
        %v797 = vpop.f32.mrf.mxu0
        %v798 = vadd.f32 %v733, %v797
        %799 = vmatmul.f32.gmra.mxu0 %v494
        %v800 = vpop.f32.mrf.mxu0
        %v801 = vadd.f32 %v736, %v800
        %802 = vmatmul.f32.gmra.mxu0 %v498
        %v803 = vpop.f32.mrf.mxu0
        %v804 = vadd.f32 %v739, %v803
        %805 = vmatmul.f32.gmra.mxu0 %v502
        %v806 = vpop.f32.mrf.mxu0
        %v807 = vadd.f32 %v742, %v806
        %808 = vmatmul.f32.gmra.mxu0 %v506
        %v809 = vpop.f32.mrf.mxu0
        %v810 = vadd.f32 %v745, %v809
        %811 = vmatmul.f32.gmra.mxu0 %v510
        %v812 = vpop.f32.mrf.mxu0
        %v813 = vadd.f32 %v748, %v812
        %814 = vmatmul.f32.gmra.mxu0 %v514
        %v815 = vpop.f32.mrf.mxu0
        %v816 = vadd.f32 %v751, %v815
        %817 = vmatmul.f32.gmra.mxu0 %v518
        %v818 = vpop.f32.mrf.mxu0
        %v819 = vadd.f32 %v754, %v818
        %820 = vmatmul.f32.gmra.mxu0 %v522
        %v821 = vpop.f32.mrf.mxu0
        %v822 = vadd.f32 %v757, %v821
        %823 = vmatmul.f32.gmra.mxu0 %v526
        %v824 = vpop.f32.mrf.mxu0
        %v825 = vadd.f32 %v760, %v824
        %826 = vmatmul.f32.gmra.mxu0 %v530
        %v827 = vpop.f32.mrf.mxu0
        %v828 = vadd.f32 %v763, %v827
        %829 = vdwg.mxu0
        %830 = vmatpush.msra.mxu0 0.0
        %831 = vmatpush.msra.mxu0 0.0
        %832 = vmatpush.msra.mxu0 0.0
        %833 = vmatpush.msra.mxu0 0.0
        %834 = vmatpush.msra.mxu0 0.0
        %835 = vmatpush.msra.mxu0 0.0
        %836 = vmatpush.msra.mxu0 0.0
        %837 = vmatpush.msra.mxu0 0.0
        %838 = vmatpush.msra.mxu0 0.0
        %839 = vmatpush.msra.mxu0 0.0
        %840 = vmatpush.msra.mxu0 %v585
        %841 = vmatpush.msra.mxu0 %v584
        %842 = vmatpush.msra.mxu0 %v583
        %843 = vmatpush.msra.mxu0 %v582
        %844 = vmatpush.msra.mxu0 %v581
        %845 = vmatpush.msra.mxu0 %v580
        %846 = vmatmul.f32.gmra.mxu0 %v588
        %v847 = vpop.f32.mrf.mxu0
        %v848 = vadd.f32 %v783, %v847
        %849 = vmatmul.f32.gmra.mxu0 %v591
        %v850 = vpop.f32.mrf.mxu0
        %v851 = vadd.f32 %v786, %v850
        %852 = vmatmul.f32.gmra.mxu0 %v594
        %v853 = vpop.f32.mrf.mxu0
        %v854 = vadd.f32 %v789, %v853
        %855 = vmatmul.f32.gmra.mxu0 %v597
        %v856 = vpop.f32.mrf.mxu0
        %v857 = vadd.f32 %v792, %v856
        %858 = vmatmul.f32.gmra.mxu0 %v600
        %v859 = vpop.f32.mrf.mxu0
        %v860 = vadd.f32 %v795, %v859
        %861 = vmatmul.f32.gmra.mxu0 %v603
        %v862 = vpop.f32.mrf.mxu0
        %v863 = vadd.f32 %v798, %v862
        %864 = vmatmul.f32.gmra.mxu0 %v606
        %v865 = vpop.f32.mrf.mxu0
        %v866 = vadd.f32 %v801, %v865
        %867 = vmatmul.f32.gmra.mxu0 %v609
        %v868 = vpop.f32.mrf.mxu0
        %v869 = vadd.f32 %v804, %v868
        %870 = vmatmul.f32.gmra.mxu0 %v612
        %v871 = vpop.f32.mrf.mxu0
        %v872 = vadd.f32 %v807, %v871
        %873 = vmatmul.f32.gmra.mxu0 %v615
        %v874 = vpop.f32.mrf.mxu0
        %v875 = vadd.f32 %v810, %v874
        %876 = vmatmul.f32.gmra.mxu0 %v618
        %v877 = vpop.f32.mrf.mxu0
        %v878 = vadd.f32 %v813, %v877
        %879 = vmatmul.f32.gmra.mxu0 %v621
        %v880 = vpop.f32.mrf.mxu0
        %v881 = vadd.f32 %v816, %v880
        %882 = vmatmul.f32.gmra.mxu0 %v624
        %v883 = vpop.f32.mrf.mxu0
        %v884 = vadd.f32 %v819, %v883
        %885 = vmatmul.f32.gmra.mxu0 %v627
        %v886 = vpop.f32.mrf.mxu0
        %v887 = vadd.f32 %v822, %v886
        %888 = vmatmul.f32.gmra.mxu0 %v630
        %v889 = vpop.f32.mrf.mxu0
        %v890 = vadd.f32 %v825, %v889
        %891 = vmatmul.f32.gmra.mxu0 %v633
        %v892 = vpop.f32.mrf.mxu0
        %v893 = vadd.f32 %v828, %v892
        %894 = vdwg.mxu0
        %v895 = vld [vmem:[%s4] sm:$0x1]
        %v897 = vperm.slane %v895, 0
        %v899 = vmul.f32 %v848, %v897
        %v900 = vmul.f32 %v851, %v897
        %v901 = vmul.f32 %v854, %v897
        %v902 = vmul.f32 %v857, %v897
        %v903 = vmul.f32 %v860, %v897
        %v904 = vmul.f32 %v863, %v897
        %v905 = vmul.f32 %v866, %v897
        %v906 = vmul.f32 %v869, %v897
        %v907 = vmul.f32 %v872, %v897
        %v908 = vmul.f32 %v875, %v897
        %v909 = vmul.f32 %v878, %v897
        %v910 = vmul.f32 %v881, %v897
        %v911 = vmul.f32 %v884, %v897
        %v912 = vmul.f32 %v887, %v897
        %v913 = vmul.f32 %v890, %v897
        %v914 = vmul.f32 %v893, %v897
        %v915 = vld [vmem:[%s5] sm:$0x1]
        %v917 = vperm.slane %v915, 0
        %v919 = vadd.f32 %v899, %v917
        %v920 = vadd.f32 %v900, %v917
        %v921 = vadd.f32 %v901, %v917
        %v922 = vadd.f32 %v902, %v917
        %v923 = vadd.f32 %v903, %v917
        %v924 = vadd.f32 %v904, %v917
        %v925 = vadd.f32 %v905, %v917
        %v926 = vadd.f32 %v906, %v917
        %v927 = vadd.f32 %v907, %v917
        %v928 = vadd.f32 %v908, %v917
        %v929 = vadd.f32 %v909, %v917
        %v930 = vadd.f32 %v910, %v917
        %v931 = vadd.f32 %v911, %v917
        %v932 = vadd.f32 %v912, %v917
        %v933 = vadd.f32 %v913, %v917
        %v934 = vadd.f32 %v914, %v917
        %vm935 = vcmask 130048
        %936 = vst.msk [vmem:[%s247] sm:$0xff] %vm935, %v919
        %937 = vst.msk [vmem:[%s247 + $0x8] sm:$0xff] %vm935, %v920
        %938 = vst.msk [vmem:[%s247 + $0x10] sm:$0xff] %vm935, %v921
        %939 = vst.msk [vmem:[%s247 + $0x18] sm:$0xff] %vm935, %v922
        %940 = vst.msk [vmem:[%s247 + $0x20] sm:$0xff] %vm935, %v923
        %941 = vst.msk [vmem:[%s247 + $0x28] sm:$0xff] %vm935, %v924
        %942 = vst.msk [vmem:[%s247 + $0x30] sm:$0xff] %vm935, %v925
        %943 = vst.msk [vmem:[%s247 + $0x38] sm:$0xff] %vm935, %v926
        %944 = vst.msk [vmem:[%s247 + $0x40] sm:$0xff] %vm935, %v927
        %945 = vst.msk [vmem:[%s247 + $0x48] sm:$0xff] %vm935, %v928
        %946 = vst.msk [vmem:[%s247 + $0x50] sm:$0xff] %vm935, %v929
        %947 = vst.msk [vmem:[%s247 + $0x58] sm:$0xff] %vm935, %v930
        %948 = vst.msk [vmem:[%s247 + $0x60] sm:$0xff] %vm935, %v931
        %949 = vst.msk [vmem:[%s247 + $0x68] sm:$0xff] %vm935, %v932
        %950 = vst.msk [vmem:[%s247 + $0x70] sm:$0xff] %vm935, %v933
        %951 = vst.msk [vmem:[%s247 + $0x78] sm:$0xff] %vm935, %v934
        %968 = vrot.lane.b32.xlu0 %v257, 80
        %v969 = vpop.permute.xlu0 %968
        %970 = vrot.lane.b32.xlu0 %v261, 80
        %v971 = vpop.permute.xlu0 %970
        %972 = vrot.lane.b32.xlu0 %v265, 80
        %v973 = vpop.permute.xlu0 %972
        %974 = vrot.lane.b32.xlu0 %v269, 80
        %v975 = vpop.permute.xlu0 %974
        %976 = vrot.lane.b32.xlu0 %v273, 80
        %v977 = vpop.permute.xlu0 %976
        %978 = vrot.lane.b32.xlu0 %v277, 80
        %v979 = vpop.permute.xlu0 %978
        %980 = vrot.lane.b32.xlu0 %v281, 80
        %v981 = vpop.permute.xlu0 %980
        %982 = vrot.lane.b32.xlu0 %v285, 80
        %v983 = vpop.permute.xlu0 %982
        %984 = vrot.lane.b32.xlu0 %v289, 80
        %v985 = vpop.permute.xlu0 %984
        %986 = vrot.lane.b32.xlu0 %v293, 80
        %v987 = vpop.permute.xlu0 %986
        %988 = vrot.lane.b32.xlu0 %v297, 80
        %v989 = vpop.permute.xlu0 %988
        %990 = vrot.lane.b32.xlu0 %v301, 80
        %v991 = vpop.permute.xlu0 %990
        %992 = vrot.lane.b32.xlu0 %v305, 80
        %v993 = vpop.permute.xlu0 %992
        %994 = vrot.lane.b32.xlu0 %v309, 80
        %v995 = vpop.permute.xlu0 %994
        %996 = vrot.lane.b32.xlu0 %v313, 80
        %v997 = vpop.permute.xlu0 %996
        %998 = vrot.lane.b32.xlu0 %v317, 80
        %v999 = vpop.permute.xlu0 %998
        %vm1016 = vcmask 523392
        %1017 = vst.msk [vmem:[%s247] sm:$0xff] %vm1016, %v969
        %1018 = vst.msk [vmem:[%s247 + $0x8] sm:$0xff] %vm1016, %v971
        %1019 = vst.msk [vmem:[%s247 + $0x10] sm:$0xff] %vm1016, %v973
        %1020 = vst.msk [vmem:[%s247 + $0x18] sm:$0xff] %vm1016, %v975
        %1021 = vst.msk [vmem:[%s247 + $0x20] sm:$0xff] %vm1016, %v977
        %1022 = vst.msk [vmem:[%s247 + $0x28] sm:$0xff] %vm1016, %v979
        %1023 = vst.msk [vmem:[%s247 + $0x30] sm:$0xff] %vm1016, %v981
        %1024 = vst.msk [vmem:[%s247 + $0x38] sm:$0xff] %vm1016, %v983
        %1025 = vst.msk [vmem:[%s247 + $0x40] sm:$0xff] %vm1016, %v985
        %1026 = vst.msk [vmem:[%s247 + $0x48] sm:$0xff] %vm1016, %v987
        %1027 = vst.msk [vmem:[%s247 + $0x50] sm:$0xff] %vm1016, %v989
        %1028 = vst.msk [vmem:[%s247 + $0x58] sm:$0xff] %vm1016, %v991
        %1029 = vst.msk [vmem:[%s247 + $0x60] sm:$0xff] %vm1016, %v993
        %1030 = vst.msk [vmem:[%s247 + $0x68] sm:$0xff] %vm1016, %v995
        %1031 = vst.msk [vmem:[%s247 + $0x70] sm:$0xff] %vm1016, %v997
        %1032 = vst.msk [vmem:[%s247 + $0x78] sm:$0xff] %vm1016, %v999
        %s1033 = sand.u32 %s159, 1
        %s1034 = scalar_lea.sflag [#allocation3], %s1033
        %s1035 = sand.u32 %s159, 1
        %s1036 = smul.addr %s1035, 128
        %s1037 = scalar_lea.vmem [#allocation2], %s1036
        // Predicated region
        $region45: #{feature_extraction_denseasp.7} parent=43 // pred_check
          %p1038 = pneg %p169
        $region46: #{feature_extraction_denseasp.7} parent=43 // pred_check_branch
          %1040 = sbr.rel (%p1038) target = $region48
        $region47: #{feature_extraction_denseasp.7} parent=43 // pred_region
          %s1041 = smul.u32 16, %s20
          %1043 = vsyncadd %s1034, 0
          %s1044 = smul.addr %s1041, 8
          %s1045 = scalar_lea.hbm %s6, %s1044
          %s1046 = sshll.u32 %s1037, 4
          %s1047 = int_to_ptr.vmem [resolvable:$true] %s1046
          %s1048 = sshll.u32 %s1045, 4
          %s1049 = int_to_ptr.hbm [resolvable:$true] %s1048
          %1054 = dma.vmem_to_hbm [thread:$0]  %s1047, 2048, %s1049, %s1034, 128, 128, 8
        $region48: #{feature_extraction_denseasp.7} parent=43 // pred_fallthru
          _
      $region44: #{feature_extraction_denseasp.7} parent=5 // pred_fallthru
        _
      %p1055 = scmp.le.s32.totalorder 2, %s15
      // Predicated region
      $region49: #{feature_extraction_denseasp.7} parent=5 // pred_check
        %p1056 = pneg %p1055
      $region50: #{feature_extraction_denseasp.7} parent=5 // pred_check_branch
        %1058 = sbr.rel (%p1056) target = $region52
      $region51: #{feature_extraction_denseasp.7} parent=5 // pred_region
        %s1059 = ssub.s32 %s15, 2
        // Predicated region
        $region53: #{feature_extraction_denseasp.7} parent=51 // pred_check
          %p1060 = pneg %p175
        $region54: #{feature_extraction_denseasp.7} parent=51 // pred_check_branch
          %1062 = sbr.rel (%p1060) target = $region56
        $region55: #{feature_extraction_denseasp.7} parent=51 // pred_region
          %s1063 = sand.u32 %s160, 1
          %s1064 = scalar_lea.sflag [#allocation3], %s1063
          %s1065 = sand.u32 %s160, 1
          %s1066 = smul.addr %s1065, 128
          %s1067 = scalar_lea.vmem [#allocation2], %s1066
          %1069 = dma.done %s1064, 2048
        $region56: #{feature_extraction_denseasp.7} parent=51 // pred_fallthru
          _
      $region52: #{feature_extraction_denseasp.7} parent=5 // pred_fallthru
        _
    $region6: #{feature_extraction_denseasp.7} parent=1 // loop_footer
      %s19 = sadd.s32 1, %s15
    $region7: #{feature_extraction_denseasp.7} parent=1 // loop_footer_branch
      %14 = sbr.rel target = $region3
    $region8: #{feature_extraction_denseasp.7} parent=1 // loop_exit
      _
    %1070 = vsyncpa [#allocation3], 1
    %s1071 = scalar_lea.sflag [#allocation3], 1
    %1072 = vsyncpa %s1071, 1

</llo_original>
